<compile_context>
chip_gen: v6e
topology: v6e:2x2x1
jax: 0.10.0
libtpu: 0.0.40
codegen_flags: <defaults>
</compile_context>

<pallas_src>
import functools

import jax
import jax.numpy as jnp
from jax.experimental import pallas as pl
from jax.experimental.pallas import tpu as pltpu

F_PAD = 128            # lane-dense feature width (in/hidden/out zero-padded to 128)
N_LAYERS = 6


def _round_up(x, m):
    return (x + m - 1) // m * m


def _pad2d(a, rows, cols):
    return jnp.pad(a, ((0, rows - a.shape[0]), (0, cols - a.shape[1])))


def _vmem_budgets():
    """Generation-aware VMEM budgets. v5e/v6e: 128 MiB VMEM; v7x: 64 MiB per TensorCore."""
    kind = ""
    try:
        kind = jax.devices()[0].device_kind.lower()
    except Exception:
        pass
    if ("v5" in kind) or ("v6" in kind):
        vmem_limit = 100 * 1024 * 1024
    else:  # v7x and anything unknown: stay well under 64 MiB / TC
        vmem_limit = 48 * 1024 * 1024
    return vmem_limit, vmem_limit - 12 * 1024 * 1024   # (scoped limit, fused-path budget)


def _fused_vmem_bytes(n_pad):
    """Everything resident on the fused path, incl. transient f32 dot results."""
    a_bytes = 2 * n_pad * n_pad                       # A_norm bf16, resident
    feat = n_pad * F_PAD
    x_h_xw = 3 * 2 * feat                             # X + H + XW scratches (bf16)
    f32_temps = 2 * 4 * feat                          # transient f32 results of the 2 dots
    weights = (N_LAYERS * F_PAD * F_PAD * 2 + N_LAYERS * F_PAD * 4
               + F_PAD * F_PAD * 2 + F_PAD * 4)       # W stack / b stack / head W,b
    return a_bytes + x_h_xw + f32_temps + weights + (1 << 20)   # +1 MiB slack


def _pick_tile(n_pad, cap):
    t = 128
    for cand in (256, 512, 1024, 2048):
        if cand <= cap and n_pad % cand == 0:
            t = cand
    return t


# ----------------------------- fused 6-layer kernel ------------------------------

def _fused_gcn_kernel(ns_ref, a_ref, x_ref, w_ref, b_ref, lw_ref, lb_ref, o_ref,
                      h_ref, xw_ref):
    """Single grid step: 6 conv layers + mean pool + head, everything VMEM-resident."""
    n_pad = a_ref.shape[0]

    h_ref[...] = x_ref[...]                     # H <- X (both bf16)

    def relu_layer(l, carry):
        # XW_l = H @ W_l (bf16 x bf16 on MXU, f32 accumulate).  XW lives in its own
        # scratch so the layer output can overwrite H in place.
        xw_ref[...] = jnp.dot(h_ref[...], w_ref[l],
                              preferred_element_type=jnp.float32).astype(xw_ref.dtype)
        acc = jnp.dot(a_ref[...], xw_ref[...],
                      preferred_element_type=jnp.float32) + b_ref[l]
        # NOTE: padded rows hold ReLU(b_l) after this; harmless because A's padded
        # columns are zero and pooling masks rows >= n_true.
        h_ref[...] = jnp.maximum(acc, 0.0).astype(h_ref.dtype)
        return carry

    jax.lax.fori_loop(0, N_LAYERS - 1, relu_layer, 0, unroll=True)

    # Last conv layer (no ReLU); keep the result in f32 for the pooled reduction.
    xw_ref[...] = jnp.dot(h_ref[...], w_ref[N_LAYERS - 1],
                          preferred_element_type=jnp.float32).astype(xw_ref.dtype)
    acc = jnp.dot(a_ref[...], xw_ref[...],
                  preferred_element_type=jnp.float32) + b_ref[N_LAYERS - 1]

    # global_mean_pool over the true nodes + Linear head (fused epilogue).
    n_true = ns_ref[0]
    rows = jax.lax.broadcasted_iota(jnp.int32, (n_pad, 1), 0)
    pooled = jnp.sum(jnp.where(rows < n_true, acc, 0.0), axis=0, keepdims=True)
    mean = pooled / n_true.astype(jnp.float32)
    o_ref[...] = (jnp.dot(mean.astype(jnp.bfloat16), lw_ref[...],
                          preferred_element_type=jnp.float32) + lb_ref[...]
                  ).astype(o_ref.dtype)


def fused_gcn6(n_true, a, x_pad, w_stack, b_stack, lw, lb, *, vmem_limit):
    n_pad = a.shape[0]
    vmem_whole = pl.BlockSpec(memory_space=pltpu.MemorySpace.VMEM)   # resident, DMA'd once
    return pl.pallas_call(
        _fused_gcn_kernel,
        out_shape=jax.ShapeDtypeStruct((1, F_PAD), jnp.float32),
        grid_spec=pltpu.PrefetchScalarGridSpec(
            num_scalar_prefetch=1,                 # n_true lives in SMEM (no recompiles)
            grid=(1,),
            in_specs=[
                vmem_whole,                        # A_norm [Np, Np] bf16
                vmem_whole,                        # X      [Np, 128] bf16
                vmem_whole,                        # W stack [6, 128, 128] bf16 (192 KiB)
                vmem_whole,                        # b stack [6, 1, 128] f32
                vmem_whole,                        # head W^T [128, 128] bf16
                vmem_whole,                        # head b   [1, 128] f32
            ],
            out_specs=pl.BlockSpec((1, F_PAD), lambda i, ns: (0, 0)),
            scratch_shapes=[
                pltpu.VMEM((n_pad, F_PAD), jnp.bfloat16),   # H (updated in place per layer)
                pltpu.VMEM((n_pad, F_PAD), jnp.bfloat16),   # XW = H @ W_l
            ],
        ),
        compiler_params=pltpu.CompilerParams(
            dimension_semantics=("arbitrary",),
            vmem_limit_bytes=vmem_limit),
    )(n_true, a, x_pad, w_stack, b_stack, lw, lb)


# --------------------- tiled per-layer fallback (large graphs) --------------------

def _xw_kernel(x_ref, w_ref, o_ref):
    o_ref[...] = jnp.dot(x_ref[...], w_ref[...],
                         preferred_element_type=jnp.float32).astype(o_ref.dtype)


def xw_matmul(x, w, tm, vmem_limit):
    n = x.shape[0]
    return pl.pallas_call(
        _xw_kernel,
        out_shape=jax.ShapeDtypeStruct((n, F_PAD), jnp.bfloat16),
        grid=(n // tm,),
        in_specs=[pl.BlockSpec((tm, F_PAD), lambda i: (i, 0)),
                  pl.BlockSpec(memory_space=pltpu.MemorySpace.VMEM)],
        out_specs=pl.BlockSpec((tm, F_PAD), lambda i: (i, 0)),
        compiler_params=pltpu.CompilerParams(
            dimension_semantics=("parallel",), vmem_limit_bytes=vmem_limit),
    )(x, w)


def _agg_kernel(a_ref, xw_ref, b_ref, o_ref, acc_ref, *, apply_relu, tk):
    k = pl.program_id(1)

    @pl.when(k == 0)
    def _():
        acc_ref[...] = jnp.zeros_like(acc_ref)

    # XW is whole-VMEM-resident; only A streams from HBM.
    col0 = pl.multiple_of(k * tk, tk)
    acc_ref[...] += jnp.dot(a_ref[...], xw_ref[pl.ds(col0, tk), :],
                            preferred_element_type=jnp.float32)

    @pl.when(k == pl.num_programs(1) - 1)
    def _():
        out = acc_ref[...] + b_ref[...]
        if apply_relu:
            out = jnp.maximum(out, 0.0)
        o_ref[...] = out.astype(o_ref.dtype)


def a_aggregate(a, xw, b, apply_relu, tm, tk, vmem_limit):
    n = a.shape[0]
    kern = functools.partial(_agg_kernel, apply_relu=apply_relu, tk=tk)
    a_spec_kwargs = {}
    if n // tk >= 4:
        # deeper buffering on the HBM-bound A stream only pays when the k loop is long
        a_spec_kwargs["pipeline_mode"] = pl.Buffered(3)
    return pl.pallas_call(
        kern,
        out_shape=jax.ShapeDtypeStruct((n, F_PAD), jnp.bfloat16),
        grid=(n // tm, n // tk),
        in_specs=[pl.BlockSpec((tm, tk), lambda i, k: (i, k), **a_spec_kwargs),
                  pl.BlockSpec(memory_space=pltpu.MemorySpace.VMEM),   # XW whole-resident
                  pl.BlockSpec(memory_space=pltpu.MemorySpace.VMEM)],  # bias
        out_specs=pl.BlockSpec((tm, F_PAD), lambda i, k: (i, 0)),
        scratch_shapes=[pltpu.VMEM((tm, F_PAD), jnp.float32)],
        compiler_params=pltpu.CompilerParams(
            dimension_semantics=("parallel", "arbitrary"),  # rows shard across v7x 2 TCs
            vmem_limit_bytes=vmem_limit),
    )(a, xw, b)


def _pool_head_kernel(ns_ref, h_ref, lw_ref, lb_ref, o_ref, pool_ref):
    i = pl.program_id(0)
    tm = h_ref.shape[0]

    @pl.when(i == 0)
    def _():
        pool_ref[...] = jnp.zeros_like(pool_ref)

    rows = i * tm + jax.lax.broadcasted_iota(jnp.int32, (tm, 1), 0)
    hv = h_ref[...].astype(jnp.float32)
    pool_ref[...] += jnp.sum(jnp.where(rows < ns_ref[0], hv, 0.0), axis=0, keepdims=True)

    @pl.when(i == pl.num_programs(0) - 1)
    def _():
        mean = pool_ref[...] / ns_ref[0].astype(jnp.float32)
        o_ref[...] = (jnp.dot(mean.astype(jnp.bfloat16), lw_ref[...],
                              preferred_element_type=jnp.float32) + lb_ref[...]
                      ).astype(o_ref.dtype)


def pool_and_head(n_true, h, lw, lb, tm, vmem_limit):
    n = h.shape[0]
    return pl.pallas_call(
        _pool_head_kernel,
        out_shape=jax.ShapeDtypeStruct((1, F_PAD), jnp.float32),
        grid_spec=pltpu.PrefetchScalarGridSpec(
            num_scalar_prefetch=1, grid=(n // tm,),
            in_specs=[pl.BlockSpec((tm, F_PAD), lambda i, ns: (i, 0)),
                      pl.BlockSpec(memory_space=pltpu.MemorySpace.VMEM),
                      pl.BlockSpec(memory_space=pltpu.MemorySpace.VMEM)],
            out_specs=pl.BlockSpec((1, F_PAD), lambda i, ns: (0, 0)),
            scratch_shapes=[pltpu.VMEM((1, F_PAD), jnp.float32)]),
        compiler_params=pltpu.CompilerParams(
            dimension_semantics=("arbitrary",),   # shared pooled accumulator -> sequential
            vmem_limit_bytes=vmem_limit),
    )(n_true, h, lw, lb)


# --------------------------------- glue (plain JAX) --------------------------------

def build_norm_adj(edge_index, num_nodes):
    """Dense D^{-1/2}(A+I)D^{-1/2}; matches PyG gcn_norm (degree on targets incl. loops)."""
    # TODO(synk): the scatter-add adjacency build stays in XLA (no Pallas win here);
    # it is hoisted into prepare_graph and done once per graph.
    src, dst = edge_index[0], edge_index[1]
    loops = jnp.arange(num_nodes, dtype=src.dtype)
    src = jnp.concatenate([src, loops])
    dst = jnp.concatenate([dst, loops])
    a_hat = jnp.zeros((num_nodes, num_nodes), jnp.float32).at[dst, src].add(1.0)
    deg = a_hat.sum(axis=1)
    dinv = jnp.where(deg > 0, 1.0 / jnp.sqrt(deg), 0.0)
    return dinv[:, None] * a_hat * dinv[None, :]


def prepare_graph(edge_index, num_nodes):
    """Build A_norm ONCE, pad to a multiple of 128 (only), cast to bf16 for the MXU."""
    n_pad = _round_up(num_nodes, 128)
    a = build_norm_adj(edge_index, num_nodes)
    a_pad = _pad2d(a, n_pad, n_pad).astype(jnp.bfloat16)
    return {"a_norm": a_pad,
            "n_true": jnp.array([num_nodes], jnp.int32),   # SMEM scalar (no recompiles)
            "n_pad": n_pad}


def glorot(key, fan_in, fan_out):
    limit = (6.0 / (fan_in + fan_out)) ** 0.5
    return jax.random.uniform(key, (fan_in, fan_out), jnp.float32, -limit, limit)


def init_params(key, in_channels, hidden_channels, out_channels):
    keys = jax.random.split(key, 8)
    params = {}
    dims = [in_channels] + [hidden_channels] * 6
    for i in range(6):
        params[f"conv{i+1}_w"] = glorot(keys[i], dims[i], dims[i + 1])
        params[f"conv{i+1}_b"] = jnp.zeros((dims[i + 1],), jnp.float32)
    bound = 1.0 / (hidden_channels ** 0.5)
    params["lin_w_t"] = jax.random.uniform(
        keys[6], (hidden_channels, out_channels), jnp.float32, -bound, bound)
    params["lin_b"] = jax.random.uniform(
        keys[7], (out_channels,), jnp.float32, -bound, bound)
    return params


def pack_params(params, hidden_ch, out_ch):
    """Zero-pad everything to lane-dense 128, stack per-layer tensors, bf16 MXU operands."""
    ws, bs = [], []
    for i in range(6):
        ws.append(_pad2d(params[f"conv{i+1}_w"], F_PAD, F_PAD))
        bs.append(jnp.pad(params[f"conv{i+1}_b"], (0, F_PAD - hidden_ch)).reshape(1, F_PAD))
    return {
        "w_stack": jnp.stack(ws).astype(jnp.bfloat16),                    # [6,128,128] bf16
        "b_stack": jnp.stack(bs),                                         # [6,1,128]  f32
        "lw": _pad2d(params["lin_w_t"], F_PAD, F_PAD).astype(jnp.bfloat16),  # [128,128] bf16
        "lb": jnp.pad(params["lin_b"], (0, F_PAD - out_ch)).reshape(1, F_PAD),
    }


def gcn6_forward(packed, graph, x, out_ch, force_tiled=False):
    n_pad, n_true, a = graph["n_pad"], graph["n_true"], graph["a_norm"]
    x_pad = _pad2d(x, n_pad, F_PAD).astype(jnp.bfloat16)
    vmem_limit, fused_budget = _vmem_budgets()

    # TODO(synk): on v7x the fused path runs on a single TensorCore; a core_map/CORE_PARALLEL
    # split of A's rows (H/XW in VMEM_SHARED, core_barrier between layers) would use both TCs.
    # The lower v7x budget already pushes large graphs onto the tiled path, whose "parallel"
    # row axis is megacore-sharded.
    if (not force_tiled) and _fused_vmem_bytes(n_pad) <= fused_budget:
        out = fused_gcn6(n_true, a, x_pad, packed["w_stack"], packed["b_stack"],
                         packed["lw"], packed["lb"], vmem_limit=vmem_limit)
    else:
        tm = _pick_tile(n_pad, 512)
        tk = _pick_tile(n_pad, 2048)   # wide k tiles amortize per-step overhead (HBM-bound)
        h = x_pad
        for l in range(N_LAYERS):
            xw = xw_matmul(h, packed["w_stack"][l], tm, vmem_limit)
            h = a_aggregate(a, xw, packed["b_stack"][l],
                            apply_relu=(l < N_LAYERS - 1), tm=tm, tk=tk,
                            vmem_limit=vmem_limit)
        out = pool_and_head(n_true, h, packed["lw"], packed["lb"], tm, vmem_limit)
    return out[:, :out_ch]


def reference_forward(params, x, edge_index):
    """Pure-JAX f32 reference matching the PyTorch module semantics."""
    a = build_norm_adj(edge_index, x.shape[0])
    h = x
    for i in range(1, 7):
        h = a @ (h @ params[f"conv{i}_w"]) + params[f"conv{i}_b"]
        if i < 6:
            h = jnp.maximum(h, 0.0)
    pooled = jnp.mean(h, axis=0, keepdims=True)
    return pooled @ params["lin_w_t"] + params["lin_b"]


# --------------------------------------- driver ---------------------------------------

if __name__ == "__main__":
    N_NODES = 8
    IN_CH, HIDDEN_CH, OUT_CH = 4, 32, 4

    key = jax.random.PRNGKey(0)
    k_x, k_p = jax.random.split(key)

    x = jax.random.normal(k_x, (N_NODES, IN_CH), jnp.float32)

    idx = jnp.arange(N_NODES, dtype=jnp.int32)
    src = jnp.concatenate([idx, (idx + 1) % N_NODES])
    dst = jnp.concatenate([(idx + 1) % N_NODES, idx])
    edge_index = jnp.stack([src, dst], axis=0)            # [2, E] bidirectional ring

    params = init_params(k_p, IN_CH, HIDDEN_CH, OUT_CH)

    # hoisted / cached per-graph and per-model preprocessing (done once, reused per forward)
    graph = prepare_graph(edge_index, N_NODES)
    packed = pack_params(params, HIDDEN_CH, OUT_CH)

    out_fused = gcn6_forward(packed, graph, x, OUT_CH, force_tiled=False)
    out_tiled = gcn6_forward(packed, graph, x, OUT_CH, force_tiled=True)
    ref = reference_forward(params, x, edge_index)
    out_fused, out_tiled, ref = jax.block_until_ready((out_fused, out_tiled, ref))

    assert out_fused.shape == (1, OUT_CH)
    assert out_tiled.shape == (1, OUT_CH)
    assert bool(jnp.all(jnp.isfinite(out_fused)))
    assert bool(jnp.all(jnp.isfinite(out_tiled)))
    # bf16 MXU inputs with f32 accumulation -> small drift vs. the f32 reference
    assert bool(jnp.allclose(out_fused, ref, atol=3e-2, rtol=3e-2))
    assert bool(jnp.allclose(out_tiled, ref, atol=3e-2, rtol=3e-2))
    print("KERNEL_OK")
</pallas_src>

<mosaic_0001>
module attributes {stable_mosaic.version = 11 : i64} {
  func.func @_fused_gcn_kernel(%arg0: i32, %arg1: memref<1xi32, #tpu.memory_space<smem>>, %arg2: memref<128x128xbf16, #tpu.memory_space<vmem>>, %arg3: memref<128x128xbf16, #tpu.memory_space<vmem>>, %arg4: memref<6x128x128xbf16, #tpu.memory_space<vmem>>, %arg5: memref<6x1x128xf32, #tpu.memory_space<vmem>>, %arg6: memref<128x128xbf16, #tpu.memory_space<vmem>>, %arg7: memref<1x128xf32, #tpu.memory_space<vmem>>, %arg8: memref<1x128xf32, #tpu.memory_space<vmem>>, %arg9: memref<128x128xbf16, #tpu.memory_space<vmem>>, %arg10: memref<128x128xbf16, #tpu.memory_space<vmem>>) attributes {dimension_semantics = [#tpu.dimension_semantics<arbitrary>], iteration_bounds = array<i64: 1>, scalar_prefetch = 1 : i64, scratch_operands = 2 : i64, tpu.core_type = #tpu.core_type<tc>, window_params = [{pipeline_mode = #tpu.pipeline_mode<synchronous>, transform_indices = @transform_0, window_bounds = array<i64: 128, 128>}, {pipeline_mode = #tpu.pipeline_mode<synchronous>, transform_indices = @transform_1, window_bounds = array<i64: 128, 128>}, {pipeline_mode = #tpu.pipeline_mode<synchronous>, transform_indices = @transform_2, window_bounds = array<i64: 6, 128, 128>}, {pipeline_mode = #tpu.pipeline_mode<synchronous>, transform_indices = @transform_3, window_bounds = array<i64: 6, 1, 128>}, {pipeline_mode = #tpu.pipeline_mode<synchronous>, transform_indices = @transform_4, window_bounds = array<i64: 128, 128>}, {pipeline_mode = #tpu.pipeline_mode<synchronous>, transform_indices = @transform_5, window_bounds = array<i64: 1, 128>}, {pipeline_mode = #tpu.pipeline_mode<synchronous>, transform_indices = @transform_6, window_bounds = array<i64: 1, 128>}]} {
    %c0 = arith.constant 0 : index
    %c0_0 = arith.constant 0 : index
    %0 = vector.load %arg3[%c0, %c0_0] : memref<128x128xbf16, #tpu.memory_space<vmem>>, vector<128x128xbf16>
    %c0_1 = arith.constant 0 : index
    %c0_2 = arith.constant 0 : index
    %1 = vector.load %arg9[%c0_1, %c0_2] : memref<128x128xbf16, #tpu.memory_space<vmem>>, vector<128x128xbf16>
    tpu.vector_store %arg9[%c0_1, %c0_2], %0 {strides = array<i32>} : memref<128x128xbf16, #tpu.memory_space<vmem>>, vector<128x128xbf16>,
    %c0_i32 = arith.constant 0 : i32
    %c0_3 = arith.constant 0 : index
    %c0_4 = arith.constant 0 : index
    %2 = vector.load %arg9[%c0_3, %c0_4] : memref<128x128xbf16, #tpu.memory_space<vmem>>, vector<128x128xbf16>
    %3 = arith.index_cast %c0_i32 : i32 to index
    %c0_5 = arith.constant 0 : index
    %c0_6 = arith.constant 0 : index
    %4 = vector.load %arg4[%3, %c0_5, %c0_6] : memref<6x128x128xbf16, #tpu.memory_space<vmem>>, vector<1x128x128xbf16>
    %5 = vector.shape_cast %4 : vector<1x128x128xbf16> to vector<128x128xbf16>
    %cst = arith.constant dense<0.000000e+00> : vector<128x128xf32>
    %6 = tpu.matmul %2, %5, %cst {dimension_numbers = #tpu.dot_dimension_numbers<[1], [0], [0], [1], [0, 0, 1, 1], [], []>} : vector<128x128xbf16>, vector<128x128xbf16>, vector<128x128xf32> -> vector<128x128xf32>
    %7 = arith.truncf %6 : vector<128x128xf32> to vector<128x128xbf16>
    %c0_7 = arith.constant 0 : index
    %c0_8 = arith.constant 0 : index
    %8 = vector.load %arg10[%c0_7, %c0_8] : memref<128x128xbf16, #tpu.memory_space<vmem>>, vector<128x128xbf16>
    tpu.vector_store %arg10[%c0_7, %c0_8], %7 {strides = array<i32>} : memref<128x128xbf16, #tpu.memory_space<vmem>>, vector<128x128xbf16>,
    %c0_9 = arith.constant 0 : index
    %c0_10 = arith.constant 0 : index
    %9 = vector.load %arg2[%c0_9, %c0_10] : memref<128x128xbf16, #tpu.memory_space<vmem>>, vector<128x128xbf16>
    %c0_11 = arith.constant 0 : index
    %c0_12 = arith.constant 0 : index
    %10 = vector.load %arg10[%c0_11, %c0_12] : memref<128x128xbf16, #tpu.memory_space<vmem>>, vector<128x128xbf16>
    %cst_13 = arith.constant dense<0.000000e+00> : vector<128x128xf32>
    %11 = tpu.matmul %9, %10, %cst_13 {dimension_numbers = #tpu.dot_dimension_numbers<[1], [0], [0], [1], [0, 0, 1, 1], [], []>} : vector<128x128xbf16>, vector<128x128xbf16>, vector<128x128xf32> -> vector<128x128xf32>
    %12 = arith.index_cast %c0_i32 : i32 to index
    %c0_14 = arith.constant 0 : index
    %c0_15 = arith.constant 0 : index
    %13 = vector.load %arg5[%12, %c0_14, %c0_15] : memref<6x1x128xf32, #tpu.memory_space<vmem>>, vector<1x1x128xf32>
    %14 = vector.shape_cast %13 : vector<1x1x128xf32> to vector<1x128xf32>
    %15 = vector.broadcast %14 : vector<1x128xf32> to vector<128x128xf32>
    %16 = arith.addf %11, %15 : vector<128x128xf32>
    %cst_16 = arith.constant 0.000000e+00 : f32
    %17 = vector.broadcast %cst_16 : f32 to vector<128x128xf32>
    %18 = arith.maximumf %16, %17 : vector<128x128xf32>
    %19 = arith.truncf %18 : vector<128x128xf32> to vector<128x128xbf16>
    %c0_17 = arith.constant 0 : index
    %c0_18 = arith.constant 0 : index
    %20 = vector.load %arg9[%c0_17, %c0_18] : memref<128x128xbf16, #tpu.memory_space<vmem>>, vector<128x128xbf16>
    tpu.vector_store %arg9[%c0_17, %c0_18], %19 {strides = array<i32>} : memref<128x128xbf16, #tpu.memory_space<vmem>>, vector<128x128xbf16>,
    %c1_i32 = arith.constant 1 : i32
    %c0_19 = arith.constant 0 : index
    %c0_20 = arith.constant 0 : index
    %21 = vector.load %arg9[%c0_19, %c0_20] : memref<128x128xbf16, #tpu.memory_space<vmem>>, vector<128x128xbf16>
    %22 = arith.index_cast %c1_i32 : i32 to index
    %c0_21 = arith.constant 0 : index
    %c0_22 = arith.constant 0 : index
    %23 = vector.load %arg4[%22, %c0_21, %c0_22] : memref<6x128x128xbf16, #tpu.memory_space<vmem>>, vector<1x128x128xbf16>
    %24 = vector.shape_cast %23 : vector<1x128x128xbf16> to vector<128x128xbf16>
    %cst_23 = arith.constant dense<0.000000e+00> : vector<128x128xf32>
    %25 = tpu.matmul %21, %24, %cst_23 {dimension_numbers = #tpu.dot_dimension_numbers<[1], [0], [0], [1], [0, 0, 1, 1], [], []>} : vector<128x128xbf16>, vector<128x128xbf16>, vector<128x128xf32> -> vector<128x128xf32>
    %26 = arith.truncf %25 : vector<128x128xf32> to vector<128x128xbf16>
    %c0_24 = arith.constant 0 : index
    %c0_25 = arith.constant 0 : index
    %27 = vector.load %arg10[%c0_24, %c0_25] : memref<128x128xbf16, #tpu.memory_space<vmem>>, vector<128x128xbf16>
    tpu.vector_store %arg10[%c0_24, %c0_25], %26 {strides = array<i32>} : memref<128x128xbf16, #tpu.memory_space<vmem>>, vector<128x128xbf16>,
    %c0_26 = arith.constant 0 : index
    %c0_27 = arith.constant 0 : index
    %28 = vector.load %arg2[%c0_26, %c0_27] : memref<128x128xbf16, #tpu.memory_space<vmem>>, vector<128x128xbf16>
    %c0_28 = arith.constant 0 : index
    %c0_29 = arith.constant 0 : index
    %29 = vector.load %arg10[%c0_28, %c0_29] : memref<128x128xbf16, #tpu.memory_space<vmem>>, vector<128x128xbf16>
    %cst_30 = arith.constant dense<0.000000e+00> : vector<128x128xf32>
    %30 = tpu.matmul %28, %29, %cst_30 {dimension_numbers = #tpu.dot_dimension_numbers<[1], [0], [0], [1], [0, 0, 1, 1], [], []>} : vector<128x128xbf16>, vector<128x128xbf16>, vector<128x128xf32> -> vector<128x128xf32>
    %31 = arith.index_cast %c1_i32 : i32 to index
    %c0_31 = arith.constant 0 : index
    %c0_32 = arith.constant 0 : index
    %32 = vector.load %arg5[%31, %c0_31, %c0_32] : memref<6x1x128xf32, #tpu.memory_space<vmem>>, vector<1x1x128xf32>
    %33 = vector.shape_cast %32 : vector<1x1x128xf32> to vector<1x128xf32>
    %34 = vector.broadcast %33 : vector<1x128xf32> to vector<128x128xf32>
    %35 = arith.addf %30, %34 : vector<128x128xf32>
    %cst_33 = arith.constant 0.000000e+00 : f32
    %36 = vector.broadcast %cst_33 : f32 to vector<128x128xf32>
    %37 = arith.maximumf %35, %36 : vector<128x128xf32>
    %38 = arith.truncf %37 : vector<128x128xf32> to vector<128x128xbf16>
    %c0_34 = arith.constant 0 : index
    %c0_35 = arith.constant 0 : index
    %39 = vector.load %arg9[%c0_34, %c0_35] : memref<128x128xbf16, #tpu.memory_space<vmem>>, vector<128x128xbf16>
    tpu.vector_store %arg9[%c0_34, %c0_35], %38 {strides = array<i32>} : memref<128x128xbf16, #tpu.memory_space<vmem>>, vector<128x128xbf16>,
    %c2_i32 = arith.constant 2 : i32
    %c0_36 = arith.constant 0 : index
    %c0_37 = arith.constant 0 : index
    %40 = vector.load %arg9[%c0_36, %c0_37] : memref<128x128xbf16, #tpu.memory_space<vmem>>, vector<128x128xbf16>
    %41 = arith.index_cast %c2_i32 : i32 to index
    %c0_38 = arith.constant 0 : index
    %c0_39 = arith.constant 0 : index
    %42 = vector.load %arg4[%41, %c0_38, %c0_39] : memref<6x128x128xbf16, #tpu.memory_space<vmem>>, vector<1x128x128xbf16>
    %43 = vector.shape_cast %42 : vector<1x128x128xbf16> to vector<128x128xbf16>
    %cst_40 = arith.constant dense<0.000000e+00> : vector<128x128xf32>
    %44 = tpu.matmul %40, %43, %cst_40 {dimension_numbers = #tpu.dot_dimension_numbers<[1], [0], [0], [1], [0, 0, 1, 1], [], []>} : vector<128x128xbf16>, vector<128x128xbf16>, vector<128x128xf32> -> vector<128x128xf32>
    %45 = arith.truncf %44 : vector<128x128xf32> to vector<128x128xbf16>
    %c0_41 = arith.constant 0 : index
    %c0_42 = arith.constant 0 : index
    %46 = vector.load %arg10[%c0_41, %c0_42] : memref<128x128xbf16, #tpu.memory_space<vmem>>, vector<128x128xbf16>
    tpu.vector_store %arg10[%c0_41, %c0_42], %45 {strides = array<i32>} : memref<128x128xbf16, #tpu.memory_space<vmem>>, vector<128x128xbf16>,
    %c0_43 = arith.constant 0 : index
    %c0_44 = arith.constant 0 : index
    %47 = vector.load %arg2[%c0_43, %c0_44] : memref<128x128xbf16, #tpu.memory_space<vmem>>, vector<128x128xbf16>
    %c0_45 = arith.constant 0 : index
    %c0_46 = arith.constant 0 : index
    %48 = vector.load %arg10[%c0_45, %c0_46] : memref<128x128xbf16, #tpu.memory_space<vmem>>, vector<128x128xbf16>
    %cst_47 = arith.constant dense<0.000000e+00> : vector<128x128xf32>
    %49 = tpu.matmul %47, %48, %cst_47 {dimension_numbers = #tpu.dot_dimension_numbers<[1], [0], [0], [1], [0, 0, 1, 1], [], []>} : vector<128x128xbf16>, vector<128x128xbf16>, vector<128x128xf32> -> vector<128x128xf32>
    %50 = arith.index_cast %c2_i32 : i32 to index
    %c0_48 = arith.constant 0 : index
    %c0_49 = arith.constant 0 : index
    %51 = vector.load %arg5[%50, %c0_48, %c0_49] : memref<6x1x128xf32, #tpu.memory_space<vmem>>, vector<1x1x128xf32>
    %52 = vector.shape_cast %51 : vector<1x1x128xf32> to vector<1x128xf32>
    %53 = vector.broadcast %52 : vector<1x128xf32> to vector<128x128xf32>
    %54 = arith.addf %49, %53 : vector<128x128xf32>
    %cst_50 = arith.constant 0.000000e+00 : f32
    %55 = vector.broadcast %cst_50 : f32 to vector<128x128xf32>
    %56 = arith.maximumf %54, %55 : vector<128x128xf32>
    %57 = arith.truncf %56 : vector<128x128xf32> to vector<128x128xbf16>
    %c0_51 = arith.constant 0 : index
    %c0_52 = arith.constant 0 : index
    %58 = vector.load %arg9[%c0_51, %c0_52] : memref<128x128xbf16, #tpu.memory_space<vmem>>, vector<128x128xbf16>
    tpu.vector_store %arg9[%c0_51, %c0_52], %57 {strides = array<i32>} : memref<128x128xbf16, #tpu.memory_space<vmem>>, vector<128x128xbf16>,
    %c3_i32 = arith.constant 3 : i32
    %c0_53 = arith.constant 0 : index
    %c0_54 = arith.constant 0 : index
    %59 = vector.load %arg9[%c0_53, %c0_54] : memref<128x128xbf16, #tpu.memory_space<vmem>>, vector<128x128xbf16>
    %60 = arith.index_cast %c3_i32 : i32 to index
    %c0_55 = arith.constant 0 : index
    %c0_56 = arith.constant 0 : index
    %61 = vector.load %arg4[%60, %c0_55, %c0_56] : memref<6x128x128xbf16, #tpu.memory_space<vmem>>, vector<1x128x128xbf16>
    %62 = vector.shape_cast %61 : vector<1x128x128xbf16> to vector<128x128xbf16>
    %cst_57 = arith.constant dense<0.000000e+00> : vector<128x128xf32>
    %63 = tpu.matmul %59, %62, %cst_57 {dimension_numbers = #tpu.dot_dimension_numbers<[1], [0], [0], [1], [0, 0, 1, 1], [], []>} : vector<128x128xbf16>, vector<128x128xbf16>, vector<128x128xf32> -> vector<128x128xf32>
    %64 = arith.truncf %63 : vector<128x128xf32> to vector<128x128xbf16>
    %c0_58 = arith.constant 0 : index
    %c0_59 = arith.constant 0 : index
    %65 = vector.load %arg10[%c0_58, %c0_59] : memref<128x128xbf16, #tpu.memory_space<vmem>>, vector<128x128xbf16>
    tpu.vector_store %arg10[%c0_58, %c0_59], %64 {strides = array<i32>} : memref<128x128xbf16, #tpu.memory_space<vmem>>, vector<128x128xbf16>,
    %c0_60 = arith.constant 0 : index
    %c0_61 = arith.constant 0 : index
    %66 = vector.load %arg2[%c0_60, %c0_61] : memref<128x128xbf16, #tpu.memory_space<vmem>>, vector<128x128xbf16>
    %c0_62 = arith.constant 0 : index
    %c0_63 = arith.constant 0 : index
    %67 = vector.load %arg10[%c0_62, %c0_63] : memref<128x128xbf16, #tpu.memory_space<vmem>>, vector<128x128xbf16>
    %cst_64 = arith.constant dense<0.000000e+00> : vector<128x128xf32>
    %68 = tpu.matmul %66, %67, %cst_64 {dimension_numbers = #tpu.dot_dimension_numbers<[1], [0], [0], [1], [0, 0, 1, 1], [], []>} : vector<128x128xbf16>, vector<128x128xbf16>, vector<128x128xf32> -> vector<128x128xf32>
    %69 = arith.index_cast %c3_i32 : i32 to index
    %c0_65 = arith.constant 0 : index
    %c0_66 = arith.constant 0 : index
    %70 = vector.load %arg5[%69, %c0_65, %c0_66] : memref<6x1x128xf32, #tpu.memory_space<vmem>>, vector<1x1x128xf32>
    %71 = vector.shape_cast %70 : vector<1x1x128xf32> to vector<1x128xf32>
    %72 = vector.broadcast %71 : vector<1x128xf32> to vector<128x128xf32>
    %73 = arith.addf %68, %72 : vector<128x128xf32>
    %cst_67 = arith.constant 0.000000e+00 : f32
    %74 = vector.broadcast %cst_67 : f32 to vector<128x128xf32>
    %75 = arith.maximumf %73, %74 : vector<128x128xf32>
    %76 = arith.truncf %75 : vector<128x128xf32> to vector<128x128xbf16>
    %c0_68 = arith.constant 0 : index
    %c0_69 = arith.constant 0 : index
    %77 = vector.load %arg9[%c0_68, %c0_69] : memref<128x128xbf16, #tpu.memory_space<vmem>>, vector<128x128xbf16>
    tpu.vector_store %arg9[%c0_68, %c0_69], %76 {strides = array<i32>} : memref<128x128xbf16, #tpu.memory_space<vmem>>, vector<128x128xbf16>,
    %c4_i32 = arith.constant 4 : i32
    %c0_70 = arith.constant 0 : index
    %c0_71 = arith.constant 0 : index
    %78 = vector.load %arg9[%c0_70, %c0_71] : memref<128x128xbf16, #tpu.memory_space<vmem>>, vector<128x128xbf16>
    %79 = arith.index_cast %c4_i32 : i32 to index
    %c0_72 = arith.constant 0 : index
    %c0_73 = arith.constant 0 : index
    %80 = vector.load %arg4[%79, %c0_72, %c0_73] : memref<6x128x128xbf16, #tpu.memory_space<vmem>>, vector<1x128x128xbf16>
    %81 = vector.shape_cast %80 : vector<1x128x128xbf16> to vector<128x128xbf16>
    %cst_74 = arith.constant dense<0.000000e+00> : vector<128x128xf32>
    %82 = tpu.matmul %78, %81, %cst_74 {dimension_numbers = #tpu.dot_dimension_numbers<[1], [0], [0], [1], [0, 0, 1, 1], [], []>} : vector<128x128xbf16>, vector<128x128xbf16>, vector<128x128xf32> -> vector<128x128xf32>
    %83 = arith.truncf %82 : vector<128x128xf32> to vector<128x128xbf16>
    %c0_75 = arith.constant 0 : index
    %c0_76 = arith.constant 0 : index
    %84 = vector.load %arg10[%c0_75, %c0_76] : memref<128x128xbf16, #tpu.memory_space<vmem>>, vector<128x128xbf16>
    tpu.vector_store %arg10[%c0_75, %c0_76], %83 {strides = array<i32>} : memref<128x128xbf16, #tpu.memory_space<vmem>>, vector<128x128xbf16>,
    %c0_77 = arith.constant 0 : index
    %c0_78 = arith.constant 0 : index
    %85 = vector.load %arg2[%c0_77, %c0_78] : memref<128x128xbf16, #tpu.memory_space<vmem>>, vector<128x128xbf16>
    %c0_79 = arith.constant 0 : index
    %c0_80 = arith.constant 0 : index
    %86 = vector.load %arg10[%c0_79, %c0_80] : memref<128x128xbf16, #tpu.memory_space<vmem>>, vector<128x128xbf16>
    %cst_81 = arith.constant dense<0.000000e+00> : vector<128x128xf32>
    %87 = tpu.matmul %85, %86, %cst_81 {dimension_numbers = #tpu.dot_dimension_numbers<[1], [0], [0], [1], [0, 0, 1, 1], [], []>} : vector<128x128xbf16>, vector<128x128xbf16>, vector<128x128xf32> -> vector<128x128xf32>
    %88 = arith.index_cast %c4_i32 : i32 to index
    %c0_82 = arith.constant 0 : index
    %c0_83 = arith.constant 0 : index
    %89 = vector.load %arg5[%88, %c0_82, %c0_83] : memref<6x1x128xf32, #tpu.memory_space<vmem>>, vector<1x1x128xf32>
    %90 = vector.shape_cast %89 : vector<1x1x128xf32> to vector<1x128xf32>
    %91 = vector.broadcast %90 : vector<1x128xf32> to vector<128x128xf32>
    %92 = arith.addf %87, %91 : vector<128x128xf32>
    %cst_84 = arith.constant 0.000000e+00 : f32
    %93 = vector.broadcast %cst_84 : f32 to vector<128x128xf32>
    %94 = arith.maximumf %92, %93 : vector<128x128xf32>
    %95 = arith.truncf %94 : vector<128x128xf32> to vector<128x128xbf16>
    %c0_85 = arith.constant 0 : index
    %c0_86 = arith.constant 0 : index
    %96 = vector.load %arg9[%c0_85, %c0_86] : memref<128x128xbf16, #tpu.memory_space<vmem>>, vector<128x128xbf16>
    tpu.vector_store %arg9[%c0_85, %c0_86], %95 {strides = array<i32>} : memref<128x128xbf16, #tpu.memory_space<vmem>>, vector<128x128xbf16>,
    %c5_i32 = arith.constant 5 : i32
    %c0_87 = arith.constant 0 : index
    %c0_88 = arith.constant 0 : index
    %97 = vector.load %arg9[%c0_87, %c0_88] : memref<128x128xbf16, #tpu.memory_space<vmem>>, vector<128x128xbf16>
    %c5 = arith.constant 5 : index
    %c0_89 = arith.constant 0 : index
    %c0_90 = arith.constant 0 : index
    %98 = vector.load %arg4[%c5, %c0_89, %c0_90] : memref<6x128x128xbf16, #tpu.memory_space<vmem>>, vector<1x128x128xbf16>
    %99 = vector.shape_cast %98 : vector<1x128x128xbf16> to vector<128x128xbf16>
    %cst_91 = arith.constant dense<0.000000e+00> : vector<128x128xf32>
    %100 = tpu.matmul %97, %99, %cst_91 {dimension_numbers = #tpu.dot_dimension_numbers<[1], [0], [0], [1], [0, 0, 1, 1], [], []>} : vector<128x128xbf16>, vector<128x128xbf16>, vector<128x128xf32> -> vector<128x128xf32>
    %101 = arith.truncf %100 : vector<128x128xf32> to vector<128x128xbf16>
    %c0_92 = arith.constant 0 : index
    %c0_93 = arith.constant 0 : index
    %102 = vector.load %arg10[%c0_92, %c0_93] : memref<128x128xbf16, #tpu.memory_space<vmem>>, vector<128x128xbf16>
    tpu.vector_store %arg10[%c0_92, %c0_93], %101 {strides = array<i32>} : memref<128x128xbf16, #tpu.memory_space<vmem>>, vector<128x128xbf16>,
    %c0_94 = arith.constant 0 : index
    %c0_95 = arith.constant 0 : index
    %103 = vector.load %arg2[%c0_94, %c0_95] : memref<128x128xbf16, #tpu.memory_space<vmem>>, vector<128x128xbf16>
    %c0_96 = arith.constant 0 : index
    %c0_97 = arith.constant 0 : index
    %104 = vector.load %arg10[%c0_96, %c0_97] : memref<128x128xbf16, #tpu.memory_space<vmem>>, vector<128x128xbf16>
    %cst_98 = arith.constant dense<0.000000e+00> : vector<128x128xf32>
    %105 = tpu.matmul %103, %104, %cst_98 {dimension_numbers = #tpu.dot_dimension_numbers<[1], [0], [0], [1], [0, 0, 1, 1], [], []>} : vector<128x128xbf16>, vector<128x128xbf16>, vector<128x128xf32> -> vector<128x128xf32>
    %c5_99 = arith.constant 5 : index
    %c0_100 = arith.constant 0 : index
    %c0_101 = arith.constant 0 : index
    %106 = vector.load %arg5[%c5_99, %c0_100, %c0_101] : memref<6x1x128xf32, #tpu.memory_space<vmem>>, vector<1x1x128xf32>
    %107 = vector.shape_cast %106 : vector<1x1x128xf32> to vector<1x128xf32>
    %108 = vector.broadcast %107 : vector<1x128xf32> to vector<128x128xf32>
    %109 = arith.addf %105, %108 : vector<128x128xf32>
    %c0_102 = arith.constant 0 : index
    %110 = memref.load %arg1[%c0_102] : memref<1xi32, #tpu.memory_space<smem>>
    %111 = tpu.iota {dimensions = array<i32: 0>} : vector<128x1xi32>
    %112 = vector.broadcast %110 : i32 to vector<128x1xi32>
    %113 = arith.cmpi slt, %111, %112 : vector<128x1xi32>
    %cst_103 = arith.constant 0.000000e+00 : f32
    %114 = vector.shape_cast %113 : vector<128x1xi1> to vector<128x1xi1>
    %115 = vector.broadcast %114 : vector<128x1xi1> to vector<128x128xi1>
    %116 = vector.broadcast %cst_103 : f32 to vector<128x128xf32>
    %117 = arith.select %115, %109, %116 : vector<128x128xi1>, vector<128x128xf32>
    %cst_104 = arith.constant dense<0.000000e+00> : vector<128xf32>
    %118 = vector.multi_reduction <add>, %117, %cst_104 [0] : vector<128x128xf32> to vector<128xf32>
    %119 = vector.shape_cast %118 : vector<128xf32> to vector<1x128xf32>
    %120 = arith.sitofp %110 : i32 to f32
    %121 = vector.broadcast %120 : f32 to vector<1x128xf32>
    %122 = arith.divf %119, %121 : vector<1x128xf32>
    %123 = arith.truncf %122 : vector<1x128xf32> to vector<1x128xbf16>
    %c0_105 = arith.constant 0 : index
    %c0_106 = arith.constant 0 : index
    %124 = vector.load %arg6[%c0_105, %c0_106] : memref<128x128xbf16, #tpu.memory_space<vmem>>, vector<128x128xbf16>
    %cst_107 = arith.constant dense<0.000000e+00> : vector<1x128xf32>
    %125 = tpu.matmul %123, %124, %cst_107 {dimension_numbers = #tpu.dot_dimension_numbers<[1], [0], [0], [1], [0, 0, 1, 1], [], []>} : vector<1x128xbf16>, vector<128x128xbf16>, vector<1x128xf32> -> vector<1x128xf32>
    %c0_108 = arith.constant 0 : index
    %c0_109 = arith.constant 0 : index
    %126 = vector.load %arg7[%c0_108, %c0_109] : memref<1x128xf32, #tpu.memory_space<vmem>>, vector<1x128xf32>
    %127 = arith.addf %125, %126 : vector<1x128xf32>
    %c0_110 = arith.constant 0 : index
    %c0_111 = arith.constant 0 : index
    %128 = vector.load %arg8[%c0_110, %c0_111] : memref<1x128xf32, #tpu.memory_space<vmem>>, vector<1x128xf32>
    tpu.vector_store %arg8[%c0_110, %c0_111], %127 {strides = array<i32>} : memref<1x128xf32, #tpu.memory_space<vmem>>, vector<1x128xf32>,
    return
  }
  func.func @transform_0(%arg0: i32, %arg1: memref<1xi32, #tpu.memory_space<smem>>) -> (i32, i32) {
    %c0_i32 = arith.constant 0 : i32
    %c0_i32_0 = arith.constant 0 : i32
    %c0_i32_1 = arith.constant 0 : i32
    return %c0_i32, %c0_i32_0 : i32, i32
  }
  func.func @transform_1(%arg0: i32, %arg1: memref<1xi32, #tpu.memory_space<smem>>) -> (i32, i32) {
    %c0_i32 = arith.constant 0 : i32
    %c0_i32_0 = arith.constant 0 : i32
    %c0_i32_1 = arith.constant 0 : i32
    return %c0_i32, %c0_i32_0 : i32, i32
  }
  func.func @transform_2(%arg0: i32, %arg1: memref<1xi32, #tpu.memory_space<smem>>) -> (i32, i32, i32) {
    %c0_i32 = arith.constant 0 : i32
    %c0_i32_0 = arith.constant 0 : i32
    %c0_i32_1 = arith.constant 0 : i32
    %c0_i32_2 = arith.constant 0 : i32
    return %c0_i32, %c0_i32_0, %c0_i32_1 : i32, i32, i32
  }
  func.func @transform_3(%arg0: i32, %arg1: memref<1xi32, #tpu.memory_space<smem>>) -> (i32, i32, i32) {
    %c0_i32 = arith.constant 0 : i32
    %c0_i32_0 = arith.constant 0 : i32
    %c0_i32_1 = arith.constant 0 : i32
    %c0_i32_2 = arith.constant 0 : i32
    return %c0_i32, %c0_i32_0, %c0_i32_1 : i32, i32, i32
  }
  func.func @transform_4(%arg0: i32, %arg1: memref<1xi32, #tpu.memory_space<smem>>) -> (i32, i32) {
    %c0_i32 = arith.constant 0 : i32
    %c0_i32_0 = arith.constant 0 : i32
    %c0_i32_1 = arith.constant 0 : i32
    return %c0_i32, %c0_i32_0 : i32, i32
  }
  func.func @transform_5(%arg0: i32, %arg1: memref<1xi32, #tpu.memory_space<smem>>) -> (i32, i32) {
    %c0_i32 = arith.constant 0 : i32
    %c0_i32_0 = arith.constant 0 : i32
    %c0_i32_1 = arith.constant 0 : i32
    return %c0_i32, %c0_i32_0 : i32, i32
  }
  func.func @transform_6(%arg0: i32, %arg1: memref<1xi32, #tpu.memory_space<smem>>) -> (i32, i32) {
    %c0_i32 = arith.constant 0 : i32
    %c0_i32_0 = arith.constant 0 : i32
    %c0_i32_1 = arith.constant 0 : i32
    return %c0_i32, %c0_i32_0 : i32, i32
  }
}

</mosaic_0001>

<llo_original>
// kernel: tpu_custom_call.1
$region0: #{tpu_custom_call.1}
  #allocation0 [shape = 'u32[]', space=smem, size = 0x4, offset = 0x4, fixed_abs, tag = 'smem constant byte address 0x4 - core index']
  #allocation1 [shape = 'u32[144,128]{1,0:T(1,128)}', space=vmem, size = 0x12000, scoped, tag = 'internal scratch']
  #allocation2 [shape = 'bf16[128,128]{1,0:T(8,128)(2,1)}', space=vmem, size = 0x8000, scoped, tag = 'scratch operand']
  #allocation3 [shape = 'bf16[128,128]{1,0:T(8,128)(2,1)}', space=vmem, size = 0x8000, scoped, tag = 'scratch operand']
  #allocation4 [shape = 's32[1]{0}', space=sflag, size = 0x4, scoped, tag = 'scoped memory for tpu_custom_call.1']
  #allocation5 [shape = 's32[1]{0:T(128)S(6)}', space=smem, size = 0x200, scoped, tag = 'prefetched SMEM operand 0']
  %s0 = inlined_call_operand.<no memory space> [shape: s32[1], index: 0, kind: input, shape index: {}]
  %s1 = inlined_call_operand.hbm [shape: bf16[128,128], index: 1, kind: input, shape index: {}]
  %s2 = inlined_call_operand.hbm [shape: bf16[128,128], index: 2, kind: input, shape index: {}]
  %s3 = inlined_call_operand.hbm [shape: bf16[6,128,128], index: 3, kind: input, shape index: {}]
  %s4 = inlined_call_operand.vmem [shape: f32[6,1,128], index: 4, kind: input, shape index: {}]
  %s5 = inlined_call_operand.hbm [shape: bf16[128,128], index: 5, kind: input, shape index: {}]
  %s6 = inlined_call_operand.vmem [shape: f32[1,128], index: 6, kind: input, shape index: {}]
  %s7 = inlined_call_operand.hbm [shape: f32[1,128], index: 7, kind: output, shape index: {}]
  %s8 = sld [smem:[#allocation0]]
  $region50: #{tpu_custom_call.1} parent=0
    _
  %s10 = ssub.s32 1, %s8
  %s11 = scalar_select 0, %s10, %s8
  %12 = sst [smem:[#allocation5]] %s0
  $region1: #{tpu_custom_call.1} parent=0
    #allocation6 [shape = 'u8[32768]{0}', space=vmem, size = 0x8000, scoped, tag = 'input window, operand 1, single buffered']
    #allocation7 [shape = 's32[1]{0}', space=sflag, size = 0x4, scoped, tag = 'scoped memory for tpu_custom_call.1']
    #allocation8 [shape = 's32[1]{0}', space=sflag, size = 0x4, scoped, tag = 'scoped memory for tpu_custom_call.1']
    #allocation9 [shape = 'u8[32768]{0}', space=vmem, size = 0x8000, scoped, tag = 'input window, operand 2, single buffered']
    #allocation10 [shape = 's32[1]{0}', space=sflag, size = 0x4, scoped, tag = 'scoped memory for tpu_custom_call.1']
    #allocation11 [shape = 'u8[196608]{0}', space=vmem, size = 0x30000, scoped, tag = 'input window, operand 3, single buffered']
    #allocation12 [shape = 'u8[32768]{0}', space=vmem, size = 0x8000, scoped, tag = 'input window, operand 5, single buffered']
    #allocation13 [shape = 's32[1]{0}', space=sflag, size = 0x4, scoped, tag = 'scoped memory for tpu_custom_call.1']
    #allocation14 [shape = 'u8[512]{0}', space=vmem, size = 0x400, scoped, tag = 'output window, operand 0, single buffered']
    %13 = vsyncpa [#allocation7], 0
    %14 = vsyncpa [#allocation10], 0
    %15 = vsyncpa [#allocation13], 0
    %16 = vsyncpa [#allocation8], 0
    // Predicated region
    $region2: #{tpu_custom_call.1} parent=1 // pred_check
      _
    $region3: #{tpu_custom_call.1} parent=1 // pred_check_branch
      %18 = sbr.rel (0) target = $region5
    $region4: #{tpu_custom_call.1} parent=1 // pred_region
      %s20 = ssub.s32 1024, 1024
      %21 = vsyncadd [#allocation7], %s20
      %s22 = sshll.u32 [#allocation6], 4
      %s23 = int_to_ptr.vmem [resolvable:$true] %s22
      %28 = dma.hbm_to_vmem [thread:$0]  %s1, 1024, %s23, [#allocation7], 64, 64, 4
    $region5: #{tpu_custom_call.1} parent=1 // pred_fallthru
      _
    // Predicated region
    $region6: #{tpu_custom_call.1} parent=1 // pred_check
      _
    $region7: #{tpu_custom_call.1} parent=1 // pred_check_branch
      %30 = sbr.rel (0) target = $region9
    $region8: #{tpu_custom_call.1} parent=1 // pred_region
      %s32 = ssub.s32 1024, 1024
      %33 = vsyncadd [#allocation10], %s32
      %s34 = sshll.u32 [#allocation9], 4
      %s35 = int_to_ptr.vmem [resolvable:$true] %s34
      %40 = dma.hbm_to_vmem [thread:$0]  %s2, 1024, %s35, [#allocation10], 64, 64, 4
    $region9: #{tpu_custom_call.1} parent=1 // pred_fallthru
      _
    // Predicated region
    $region10: #{tpu_custom_call.1} parent=1 // pred_check
      _
    $region11: #{tpu_custom_call.1} parent=1 // pred_check_branch
      %42 = sbr.rel (0) target = $region13
    $region12: #{tpu_custom_call.1} parent=1 // pred_region
      %s44 = ssub.s32 6144, 6144
      %45 = vsyncadd [#allocation10], %s44
      %s46 = sshll.u32 [#allocation11], 4
      %s47 = int_to_ptr.vmem [resolvable:$true] %s46
      %52 = dma.hbm_to_vmem [thread:$0]  %s3, 6144, %s47, [#allocation10], 64, 64, 4
    $region13: #{tpu_custom_call.1} parent=1 // pred_fallthru
      _
    // Predicated region
    $region14: #{tpu_custom_call.1} parent=1 // pred_check
      _
    $region15: #{tpu_custom_call.1} parent=1 // pred_check_branch
      %54 = sbr.rel (0) target = $region17
    $region16: #{tpu_custom_call.1} parent=1 // pred_region
      _
    $region17: #{tpu_custom_call.1} parent=1 // pred_fallthru
      _
    // Predicated region
    $region18: #{tpu_custom_call.1} parent=1 // pred_check
      _
    $region19: #{tpu_custom_call.1} parent=1 // pred_check_branch
      %56 = sbr.rel (0) target = $region21
    $region20: #{tpu_custom_call.1} parent=1 // pred_region
      %s58 = ssub.s32 1024, 1024
      %59 = vsyncadd [#allocation13], %s58
      %s60 = sshll.u32 [#allocation12], 4
      %s61 = int_to_ptr.vmem [resolvable:$true] %s60
      %66 = dma.hbm_to_vmem [thread:$0]  %s5, 1024, %s61, [#allocation13], 64, 64, 4
    $region21: #{tpu_custom_call.1} parent=1 // pred_fallthru
      _
    // Predicated region
    $region22: #{tpu_custom_call.1} parent=1 // pred_check
      _
    $region23: #{tpu_custom_call.1} parent=1 // pred_check_branch
      %68 = sbr.rel (0) target = $region25
    $region24: #{tpu_custom_call.1} parent=1 // pred_region
      _
    $region25: #{tpu_custom_call.1} parent=1 // pred_fallthru
      _
    // Predicated region
    $region26: #{tpu_custom_call.1} parent=1 // pred_check
      _
    $region27: #{tpu_custom_call.1} parent=1 // pred_check_branch
      %70 = sbr.rel (0) target = $region29
    $region28: #{tpu_custom_call.1} parent=1 // pred_region
      %71 = dma.done [#allocation7], 1024
    $region29: #{tpu_custom_call.1} parent=1 // pred_fallthru
      _
    // Predicated region
    $region30: #{tpu_custom_call.1} parent=1 // pred_check
      _
    $region31: #{tpu_custom_call.1} parent=1 // pred_check_branch
      %73 = sbr.rel (0) target = $region33
    $region32: #{tpu_custom_call.1} parent=1 // pred_region
      %74 = dma.done [#allocation10], 1024
    $region33: #{tpu_custom_call.1} parent=1 // pred_fallthru
      _
    // Predicated region
    $region34: #{tpu_custom_call.1} parent=1 // pred_check
      _
    $region35: #{tpu_custom_call.1} parent=1 // pred_check_branch
      %76 = sbr.rel (0) target = $region37
    $region36: #{tpu_custom_call.1} parent=1 // pred_region
      %77 = dma.done [#allocation10], 6144
    $region37: #{tpu_custom_call.1} parent=1 // pred_fallthru
      _
    // Predicated region
    $region38: #{tpu_custom_call.1} parent=1 // pred_check
      _
    $region39: #{tpu_custom_call.1} parent=1 // pred_check_branch
      %79 = sbr.rel (0) target = $region41
    $region40: #{tpu_custom_call.1} parent=1 // pred_region
      %80 = dma.done [#allocation13], 1024
    $region41: #{tpu_custom_call.1} parent=1 // pred_fallthru
      _
    %v82 = vld [vmem:[#allocation9] sm:$0xf]
    %v83 = vld [vmem:[#allocation9 + $0x4] sm:$0xf]
    %v84 = vld [vmem:[#allocation9 + $0x8] sm:$0xf]
    %v85 = vld [vmem:[#allocation9 + $0xc] sm:$0xf]
    %v86 = vld [vmem:[#allocation9 + $0x10] sm:$0xf]
    %v87 = vld [vmem:[#allocation9 + $0x14] sm:$0xf]
    %v88 = vld [vmem:[#allocation9 + $0x18] sm:$0xf]
    %v89 = vld [vmem:[#allocation9 + $0x1c] sm:$0xf]
    %v90 = vld [vmem:[#allocation9 + $0x20] sm:$0xf]
    %v91 = vld [vmem:[#allocation9 + $0x24] sm:$0xf]
    %v92 = vld [vmem:[#allocation9 + $0x28] sm:$0xf]
    %v93 = vld [vmem:[#allocation9 + $0x2c] sm:$0xf]
    %v94 = vld [vmem:[#allocation9 + $0x30] sm:$0xf]
    %v95 = vld [vmem:[#allocation9 + $0x34] sm:$0xf]
    %v96 = vld [vmem:[#allocation9 + $0x38] sm:$0xf]
    %v97 = vld [vmem:[#allocation9 + $0x3c] sm:$0xf]
    %98 = vst [vmem:[#allocation2] sm:$0xf] %v82
    %99 = vst [vmem:[#allocation2 + $0x4] sm:$0xf] %v83
    %100 = vst [vmem:[#allocation2 + $0x8] sm:$0xf] %v84
    %101 = vst [vmem:[#allocation2 + $0xc] sm:$0xf] %v85
    %102 = vst [vmem:[#allocation2 + $0x10] sm:$0xf] %v86
    %103 = vst [vmem:[#allocation2 + $0x14] sm:$0xf] %v87
    %104 = vst [vmem:[#allocation2 + $0x18] sm:$0xf] %v88
    %105 = vst [vmem:[#allocation2 + $0x1c] sm:$0xf] %v89
    %106 = vst [vmem:[#allocation2 + $0x20] sm:$0xf] %v90
    %107 = vst [vmem:[#allocation2 + $0x24] sm:$0xf] %v91
    %108 = vst [vmem:[#allocation2 + $0x28] sm:$0xf] %v92
    %109 = vst [vmem:[#allocation2 + $0x2c] sm:$0xf] %v93
    %110 = vst [vmem:[#allocation2 + $0x30] sm:$0xf] %v94
    %111 = vst [vmem:[#allocation2 + $0x34] sm:$0xf] %v95
    %112 = vst [vmem:[#allocation2 + $0x38] sm:$0xf] %v96
    %113 = vst [vmem:[#allocation2 + $0x3c] sm:$0xf] %v97
    %v114 = vld [vmem:[#allocation2] sm:$0xf]
    %v115 = vld [vmem:[#allocation2 + $0x4] sm:$0xf]
    %v116 = vld [vmem:[#allocation2 + $0x8] sm:$0xf]
    %v117 = vld [vmem:[#allocation2 + $0xc] sm:$0xf]
    %v118 = vld [vmem:[#allocation2 + $0x10] sm:$0xf]
    %v119 = vld [vmem:[#allocation2 + $0x14] sm:$0xf]
    %v120 = vld [vmem:[#allocation2 + $0x18] sm:$0xf]
    %v121 = vld [vmem:[#allocation2 + $0x1c] sm:$0xf]
    %v122 = vld [vmem:[#allocation2 + $0x20] sm:$0xf]
    %v123 = vld [vmem:[#allocation2 + $0x24] sm:$0xf]
    %v124 = vld [vmem:[#allocation2 + $0x28] sm:$0xf]
    %v125 = vld [vmem:[#allocation2 + $0x2c] sm:$0xf]
    %v126 = vld [vmem:[#allocation2 + $0x30] sm:$0xf]
    %v127 = vld [vmem:[#allocation2 + $0x34] sm:$0xf]
    %v128 = vld [vmem:[#allocation2 + $0x38] sm:$0xf]
    %v129 = vld [vmem:[#allocation2 + $0x3c] sm:$0xf]
    %v130 = vld [vmem:[#allocation11] sm:$0xf]
    %v131 = vld [vmem:[#allocation11 + $0x4] sm:$0xf]
    %v132 = vld [vmem:[#allocation11 + $0x8] sm:$0xf]
    %v133 = vld [vmem:[#allocation11 + $0xc] sm:$0xf]
    %v134 = vld [vmem:[#allocation11 + $0x10] sm:$0xf]
    %v135 = vld [vmem:[#allocation11 + $0x14] sm:$0xf]
    %v136 = vld [vmem:[#allocation11 + $0x18] sm:$0xf]
    %v137 = vld [vmem:[#allocation11 + $0x1c] sm:$0xf]
    %v138 = vld [vmem:[#allocation11 + $0x20] sm:$0xf]
    %v139 = vld [vmem:[#allocation11 + $0x24] sm:$0xf]
    %v140 = vld [vmem:[#allocation11 + $0x28] sm:$0xf]
    %v141 = vld [vmem:[#allocation11 + $0x2c] sm:$0xf]
    %v142 = vld [vmem:[#allocation11 + $0x30] sm:$0xf]
    %v143 = vld [vmem:[#allocation11 + $0x34] sm:$0xf]
    %v144 = vld [vmem:[#allocation11 + $0x38] sm:$0xf]
    %v145 = vld [vmem:[#allocation11 + $0x3c] sm:$0xf]
    %v162 = vunpack.c.l.b16 %v114
    %v163 = vunpack.c.l.b16 %v115
    %v164 = vunpack.c.l.b16 %v116
    %v165 = vunpack.c.l.b16 %v117
    %v166 = vunpack.c.l.b16 %v118
    %v167 = vunpack.c.l.b16 %v119
    %v168 = vunpack.c.l.b16 %v120
    %v169 = vunpack.c.l.b16 %v121
    %v170 = vunpack.c.l.b16 %v122
    %v171 = vunpack.c.l.b16 %v123
    %v172 = vunpack.c.l.b16 %v124
    %v173 = vunpack.c.l.b16 %v125
    %v174 = vunpack.c.l.b16 %v126
    %v175 = vunpack.c.l.b16 %v127
    %v176 = vunpack.c.l.b16 %v128
    %v177 = vunpack.c.l.b16 %v129
    %v178 = vpack.c.b16 %v163, %v162
    %v179 = vpack.c.b16 %v165, %v164
    %v180 = vpack.c.b16 %v167, %v166
    %v181 = vpack.c.b16 %v169, %v168
    %v182 = vpack.c.b16 %v171, %v170
    %v183 = vpack.c.b16 %v173, %v172
    %v184 = vpack.c.b16 %v175, %v174
    %v185 = vpack.c.b16 %v177, %v176
    %v210 = vunpack.c.l.b16 %v130
    %v211 = vunpack.c.l.b16 %v131
    %v212 = vunpack.c.l.b16 %v132
    %v213 = vunpack.c.l.b16 %v133
    %v214 = vunpack.c.l.b16 %v134
    %v215 = vunpack.c.l.b16 %v135
    %v216 = vunpack.c.l.b16 %v136
    %v217 = vunpack.c.l.b16 %v137
    %v218 = vunpack.c.l.b16 %v138
    %v219 = vunpack.c.l.b16 %v139
    %v220 = vunpack.c.l.b16 %v140
    %v221 = vunpack.c.l.b16 %v141
    %v222 = vunpack.c.l.b16 %v142
    %v223 = vunpack.c.l.b16 %v143
    %v224 = vunpack.c.l.b16 %v144
    %v225 = vunpack.c.l.b16 %v145
    %v226 = vpack.c.b16 %v211, %v210
    %v227 = vpack.c.b16 %v213, %v212
    %v228 = vpack.c.b16 %v215, %v214
    %v229 = vpack.c.b16 %v217, %v216
    %v230 = vpack.c.b16 %v219, %v218
    %v231 = vpack.c.b16 %v221, %v220
    %v232 = vpack.c.b16 %v223, %v222
    %v233 = vpack.c.b16 %v225, %v224
    %242 = vmatprep.subr.bf16.mxu0 0
    %243 = vmatpush1.bf16.msra.mxu0 %v233
    %244 = vmatprep.subr.bf16.mxu0 0
    %245 = vmatpush1.bf16.msra.mxu0 %v232
    %246 = vmatprep.subr.bf16.mxu0 0
    %247 = vmatpush1.bf16.msra.mxu0 %v231
    %248 = vmatprep.subr.bf16.mxu0 0
    %249 = vmatpush1.bf16.msra.mxu0 %v230
    %250 = vmatprep.subr.bf16.mxu0 0
    %251 = vmatpush1.bf16.msra.mxu0 %v229
    %252 = vmatprep.subr.bf16.mxu0 0
    %253 = vmatpush1.bf16.msra.mxu0 %v228
    %254 = vmatprep.subr.bf16.mxu0 0
    %255 = vmatpush1.bf16.msra.mxu0 %v227
    %256 = vmatprep.subr.bf16.mxu0 0
    %257 = vmatpush1.bf16.msra.mxu0 %v226
    %258 = vmatprep.subr.bf16.mxu0 0
    %259 = vmatpush2.bf16.msra.mxu0 0
    %260 = vmatprep.subr.bf16.mxu0 0
    %261 = vmatpush2.bf16.msra.mxu0 0
    %262 = vmatprep.subr.bf16.mxu0 0
    %263 = vmatpush2.bf16.msra.mxu0 0
    %264 = vmatprep.subr.bf16.mxu0 0
    %265 = vmatpush2.bf16.msra.mxu0 0
    %266 = vmatprep.subr.bf16.mxu0 0
    %267 = vmatpush2.bf16.msra.mxu0 0
    %268 = vmatprep.subr.bf16.mxu0 0
    %269 = vmatpush2.bf16.msra.mxu0 0
    %270 = vmatprep.subr.bf16.mxu0 0
    %271 = vmatpush2.bf16.msra.mxu0 0
    %272 = vmatprep.subr.bf16.mxu0 0
    %273 = vmatpush2.bf16.msra.mxu0 0
    %274 = vmatprep.mubr.bf16.mxu0 0
    %275 = vmatmul.mubr.bf16.gmra.mxu0 %v178
    %v276 = vpop.f32.mrf.mxu0
    %v277 = vadd.f32 0.0, %v276
    %v278 = vpop.f32.mrf.mxu0
    %v279 = vpop.f32.mrf.mxu0
    %v280 = vadd.f32 0.0, %v279
    %v281 = vpop.f32.mrf.mxu0
    %282 = vmatprep.mubr.bf16.mxu0 0
    %283 = vmatmul.mubr.bf16.gmra.mxu0 %v179
    %v284 = vpop.f32.mrf.mxu0
    %v285 = vadd.f32 0.0, %v284
    %v286 = vpop.f32.mrf.mxu0
    %v287 = vpop.f32.mrf.mxu0
    %v288 = vadd.f32 0.0, %v287
    %v289 = vpop.f32.mrf.mxu0
    %290 = vmatprep.mubr.bf16.mxu0 0
    %291 = vmatmul.mubr.bf16.gmra.mxu0 %v180
    %v292 = vpop.f32.mrf.mxu0
    %v293 = vadd.f32 0.0, %v292
    %v294 = vpop.f32.mrf.mxu0
    %v295 = vpop.f32.mrf.mxu0
    %v296 = vadd.f32 0.0, %v295
    %v297 = vpop.f32.mrf.mxu0
    %298 = vmatprep.mubr.bf16.mxu0 0
    %299 = vmatmul.mubr.bf16.gmra.mxu0 %v181
    %v300 = vpop.f32.mrf.mxu0
    %v301 = vadd.f32 0.0, %v300
    %v302 = vpop.f32.mrf.mxu0
    %v303 = vpop.f32.mrf.mxu0
    %v304 = vadd.f32 0.0, %v303
    %v305 = vpop.f32.mrf.mxu0
    %306 = vmatprep.mubr.bf16.mxu0 0
    %307 = vmatmul.mubr.bf16.gmra.mxu0 %v182
    %v308 = vpop.f32.mrf.mxu0
    %v309 = vadd.f32 0.0, %v308
    %v310 = vpop.f32.mrf.mxu0
    %v311 = vpop.f32.mrf.mxu0
    %v312 = vadd.f32 0.0, %v311
    %v313 = vpop.f32.mrf.mxu0
    %314 = vmatprep.mubr.bf16.mxu0 0
    %315 = vmatmul.mubr.bf16.gmra.mxu0 %v183
    %v316 = vpop.f32.mrf.mxu0
    %v317 = vadd.f32 0.0, %v316
    %v318 = vpop.f32.mrf.mxu0
    %v319 = vpop.f32.mrf.mxu0
    %v320 = vadd.f32 0.0, %v319
    %v321 = vpop.f32.mrf.mxu0
    %322 = vmatprep.mubr.bf16.mxu0 0
    %323 = vmatmul.mubr.bf16.gmra.mxu0 %v184
    %v324 = vpop.f32.mrf.mxu0
    %v325 = vadd.f32 0.0, %v324
    %v326 = vpop.f32.mrf.mxu0
    %v327 = vpop.f32.mrf.mxu0
    %v328 = vadd.f32 0.0, %v327
    %v329 = vpop.f32.mrf.mxu0
    %330 = vmatprep.mubr.bf16.mxu0 0
    %331 = vmatmul.mubr.bf16.gmra.mxu0 %v185
    %v332 = vpop.f32.mrf.mxu0
    %v333 = vadd.f32 0.0, %v332
    %v334 = vpop.f32.mrf.mxu0
    %v335 = vpop.f32.mrf.mxu0
    %v336 = vadd.f32 0.0, %v335
    %v337 = vpop.f32.mrf.mxu0
    %338 = vdwg.mxu0
    %v339 = vpack.c.bf16 %v280, %v277
    %v340 = vpack.c.bf16 %v288, %v285
    %v341 = vpack.c.bf16 %v296, %v293
    %v342 = vpack.c.bf16 %v304, %v301
    %v343 = vpack.c.bf16 %v312, %v309
    %v344 = vpack.c.bf16 %v320, %v317
    %v345 = vpack.c.bf16 %v328, %v325
    %v346 = vpack.c.bf16 %v336, %v333
    %v355 = vunpack.c.l.b16 %v339
    %v356 = vunpack.c.h.b16 %v339
    %v357 = vunpack.c.l.b16 %v340
    %v358 = vunpack.c.h.b16 %v340
    %v359 = vunpack.c.l.b16 %v341
    %v360 = vunpack.c.h.b16 %v341
    %v361 = vunpack.c.l.b16 %v342
    %v362 = vunpack.c.h.b16 %v342
    %v363 = vunpack.c.l.b16 %v343
    %v364 = vunpack.c.h.b16 %v343
    %v365 = vunpack.c.l.b16 %v344
    %v366 = vunpack.c.h.b16 %v344
    %v367 = vunpack.c.l.b16 %v345
    %v368 = vunpack.c.h.b16 %v345
    %v369 = vunpack.c.l.b16 %v346
    %v370 = vunpack.c.h.b16 %v346
    %v371 = vpack.c.b16 %v355, %v355
    %v372 = vpack.c.b16 %v356, %v356
    %v373 = vpack.c.b16 %v357, %v357
    %v374 = vpack.c.b16 %v358, %v358
    %v375 = vpack.c.b16 %v359, %v359
    %v376 = vpack.c.b16 %v360, %v360
    %v377 = vpack.c.b16 %v361, %v361
    %v378 = vpack.c.b16 %v362, %v362
    %v379 = vpack.c.b16 %v363, %v363
    %v380 = vpack.c.b16 %v364, %v364
    %v381 = vpack.c.b16 %v365, %v365
    %v382 = vpack.c.b16 %v366, %v366
    %v383 = vpack.c.b16 %v367, %v367
    %v384 = vpack.c.b16 %v368, %v368
    %v385 = vpack.c.b16 %v369, %v369
    %v386 = vpack.c.b16 %v370, %v370
    %403 = vst [vmem:[#allocation3] sm:$0xf] %v371
    %404 = vst [vmem:[#allocation3 + $0x4] sm:$0xf] %v372
    %405 = vst [vmem:[#allocation3 + $0x8] sm:$0xf] %v373
    %406 = vst [vmem:[#allocation3 + $0xc] sm:$0xf] %v374
    %407 = vst [vmem:[#allocation3 + $0x10] sm:$0xf] %v375
    %408 = vst [vmem:[#allocation3 + $0x14] sm:$0xf] %v376
    %409 = vst [vmem:[#allocation3 + $0x18] sm:$0xf] %v377
    %410 = vst [vmem:[#allocation3 + $0x1c] sm:$0xf] %v378
    %411 = vst [vmem:[#allocation3 + $0x20] sm:$0xf] %v379
    %412 = vst [vmem:[#allocation3 + $0x24] sm:$0xf] %v380
    %413 = vst [vmem:[#allocation3 + $0x28] sm:$0xf] %v381
    %414 = vst [vmem:[#allocation3 + $0x2c] sm:$0xf] %v382
    %415 = vst [vmem:[#allocation3 + $0x30] sm:$0xf] %v383
    %416 = vst [vmem:[#allocation3 + $0x34] sm:$0xf] %v384
    %417 = vst [vmem:[#allocation3 + $0x38] sm:$0xf] %v385
    %418 = vst [vmem:[#allocation3 + $0x3c] sm:$0xf] %v386
    %v419 = vld [vmem:[#allocation6] sm:$0xf]
    %v420 = vld [vmem:[#allocation6 + $0x4] sm:$0xf]
    %v421 = vld [vmem:[#allocation6 + $0x8] sm:$0xf]
    %v422 = vld [vmem:[#allocation6 + $0xc] sm:$0xf]
    %v423 = vld [vmem:[#allocation6 + $0x10] sm:$0xf]
    %v424 = vld [vmem:[#allocation6 + $0x14] sm:$0xf]
    %v425 = vld [vmem:[#allocation6 + $0x18] sm:$0xf]
    %v426 = vld [vmem:[#allocation6 + $0x1c] sm:$0xf]
    %v427 = vld [vmem:[#allocation6 + $0x20] sm:$0xf]
    %v428 = vld [vmem:[#allocation6 + $0x24] sm:$0xf]
    %v429 = vld [vmem:[#allocation6 + $0x28] sm:$0xf]
    %v430 = vld [vmem:[#allocation6 + $0x2c] sm:$0xf]
    %v431 = vld [vmem:[#allocation6 + $0x30] sm:$0xf]
    %v432 = vld [vmem:[#allocation6 + $0x34] sm:$0xf]
    %v433 = vld [vmem:[#allocation6 + $0x38] sm:$0xf]
    %v434 = vld [vmem:[#allocation6 + $0x3c] sm:$0xf]
    %v435 = vld [vmem:[#allocation3] sm:$0xf]
    %v436 = vld [vmem:[#allocation3 + $0x4] sm:$0xf]
    %v437 = vld [vmem:[#allocation3 + $0x8] sm:$0xf]
    %v438 = vld [vmem:[#allocation3 + $0xc] sm:$0xf]
    %v439 = vld [vmem:[#allocation3 + $0x10] sm:$0xf]
    %v440 = vld [vmem:[#allocation3 + $0x14] sm:$0xf]
    %v441 = vld [vmem:[#allocation3 + $0x18] sm:$0xf]
    %v442 = vld [vmem:[#allocation3 + $0x1c] sm:$0xf]
    %v443 = vld [vmem:[#allocation3 + $0x20] sm:$0xf]
    %v444 = vld [vmem:[#allocation3 + $0x24] sm:$0xf]
    %v445 = vld [vmem:[#allocation3 + $0x28] sm:$0xf]
    %v446 = vld [vmem:[#allocation3 + $0x2c] sm:$0xf]
    %v447 = vld [vmem:[#allocation3 + $0x30] sm:$0xf]
    %v448 = vld [vmem:[#allocation3 + $0x34] sm:$0xf]
    %v449 = vld [vmem:[#allocation3 + $0x38] sm:$0xf]
    %v450 = vld [vmem:[#allocation3 + $0x3c] sm:$0xf]
    %v451 = vld [vmem:[%s4] sm:$0x1]
    %v453 = vlaneseq
    %v454 = vshrl.u32 %v453, 7
    %v455 = vsub.s32 0, %v454
    %v456 = vrot.slane %v451, %v455
    %v474 = vunpack.c.l.b16 %v419
    %v475 = vunpack.c.l.b16 %v420
    %v476 = vunpack.c.l.b16 %v421
    %v477 = vunpack.c.l.b16 %v422
    %v478 = vunpack.c.l.b16 %v423
    %v479 = vunpack.c.l.b16 %v424
    %v480 = vunpack.c.l.b16 %v425
    %v481 = vunpack.c.l.b16 %v426
    %v482 = vunpack.c.l.b16 %v427
    %v483 = vunpack.c.l.b16 %v428
    %v484 = vunpack.c.l.b16 %v429
    %v485 = vunpack.c.l.b16 %v430
    %v486 = vunpack.c.l.b16 %v431
    %v487 = vunpack.c.l.b16 %v432
    %v488 = vunpack.c.l.b16 %v433
    %v489 = vunpack.c.l.b16 %v434
    %v490 = vpack.c.b16 %v475, %v474
    %v491 = vpack.c.b16 %v477, %v476
    %v492 = vpack.c.b16 %v479, %v478
    %v493 = vpack.c.b16 %v481, %v480
    %v494 = vpack.c.b16 %v483, %v482
    %v495 = vpack.c.b16 %v485, %v484
    %v496 = vpack.c.b16 %v487, %v486
    %v497 = vpack.c.b16 %v489, %v488
    %v522 = vunpack.c.l.b16 %v435
    %v523 = vunpack.c.l.b16 %v436
    %v524 = vunpack.c.l.b16 %v437
    %v525 = vunpack.c.l.b16 %v438
    %v526 = vunpack.c.l.b16 %v439
    %v527 = vunpack.c.l.b16 %v440
    %v528 = vunpack.c.l.b16 %v441
    %v529 = vunpack.c.l.b16 %v442
    %v530 = vunpack.c.l.b16 %v443
    %v531 = vunpack.c.l.b16 %v444
    %v532 = vunpack.c.l.b16 %v445
    %v533 = vunpack.c.l.b16 %v446
    %v534 = vunpack.c.l.b16 %v447
    %v535 = vunpack.c.l.b16 %v448
    %v536 = vunpack.c.l.b16 %v449
    %v537 = vunpack.c.l.b16 %v450
    %v538 = vpack.c.b16 %v523, %v522
    %v539 = vpack.c.b16 %v525, %v524
    %v540 = vpack.c.b16 %v527, %v526
    %v541 = vpack.c.b16 %v529, %v528
    %v542 = vpack.c.b16 %v531, %v530
    %v543 = vpack.c.b16 %v533, %v532
    %v544 = vpack.c.b16 %v535, %v534
    %v545 = vpack.c.b16 %v537, %v536
    %554 = vmatprep.subr.bf16.mxu0 0
    %555 = vmatpush1.bf16.msra.mxu0 %v545
    %556 = vmatprep.subr.bf16.mxu0 0
    %557 = vmatpush1.bf16.msra.mxu0 %v544
    %558 = vmatprep.subr.bf16.mxu0 0
    %559 = vmatpush1.bf16.msra.mxu0 %v543
    %560 = vmatprep.subr.bf16.mxu0 0
    %561 = vmatpush1.bf16.msra.mxu0 %v542
    %562 = vmatprep.subr.bf16.mxu0 0
    %563 = vmatpush1.bf16.msra.mxu0 %v541
    %564 = vmatprep.subr.bf16.mxu0 0
    %565 = vmatpush1.bf16.msra.mxu0 %v540
    %566 = vmatprep.subr.bf16.mxu0 0
    %567 = vmatpush1.bf16.msra.mxu0 %v539
    %568 = vmatprep.subr.bf16.mxu0 0
    %569 = vmatpush1.bf16.msra.mxu0 %v538
    %570 = vmatprep.subr.bf16.mxu0 0
    %571 = vmatpush2.bf16.msra.mxu0 0
    %572 = vmatprep.subr.bf16.mxu0 0
    %573 = vmatpush2.bf16.msra.mxu0 0
    %574 = vmatprep.subr.bf16.mxu0 0
    %575 = vmatpush2.bf16.msra.mxu0 0
    %576 = vmatprep.subr.bf16.mxu0 0
    %577 = vmatpush2.bf16.msra.mxu0 0
    %578 = vmatprep.subr.bf16.mxu0 0
    %579 = vmatpush2.bf16.msra.mxu0 0
    %580 = vmatprep.subr.bf16.mxu0 0
    %581 = vmatpush2.bf16.msra.mxu0 0
    %582 = vmatprep.subr.bf16.mxu0 0
    %583 = vmatpush2.bf16.msra.mxu0 0
    %584 = vmatprep.subr.bf16.mxu0 0
    %585 = vmatpush2.bf16.msra.mxu0 0
    %586 = vmatprep.mubr.bf16.mxu0 0
    %587 = vmatmul.mubr.bf16.gmra.mxu0 %v490
    %v588 = vpop.f32.mrf.mxu0
    %v589 = vadd.f32 %v456, %v588
    %v590 = vpop.f32.mrf.mxu0
    %v591 = vpop.f32.mrf.mxu0
    %v592 = vadd.f32 %v456, %v591
    %v593 = vpop.f32.mrf.mxu0
    %594 = vmatprep.mubr.bf16.mxu0 0
    %595 = vmatmul.mubr.bf16.gmra.mxu0 %v491
    %v596 = vpop.f32.mrf.mxu0
    %v597 = vadd.f32 %v456, %v596
    %v598 = vpop.f32.mrf.mxu0
    %v599 = vpop.f32.mrf.mxu0
    %v600 = vadd.f32 %v456, %v599
    %v601 = vpop.f32.mrf.mxu0
    %602 = vmatprep.mubr.bf16.mxu0 0
    %603 = vmatmul.mubr.bf16.gmra.mxu0 %v492
    %v604 = vpop.f32.mrf.mxu0
    %v605 = vadd.f32 %v456, %v604
    %v606 = vpop.f32.mrf.mxu0
    %v607 = vpop.f32.mrf.mxu0
    %v608 = vadd.f32 %v456, %v607
    %v609 = vpop.f32.mrf.mxu0
    %610 = vmatprep.mubr.bf16.mxu0 0
    %611 = vmatmul.mubr.bf16.gmra.mxu0 %v493
    %v612 = vpop.f32.mrf.mxu0
    %v613 = vadd.f32 %v456, %v612
    %v614 = vpop.f32.mrf.mxu0
    %v615 = vpop.f32.mrf.mxu0
    %v616 = vadd.f32 %v456, %v615
    %v617 = vpop.f32.mrf.mxu0
    %618 = vmatprep.mubr.bf16.mxu0 0
    %619 = vmatmul.mubr.bf16.gmra.mxu0 %v494
    %v620 = vpop.f32.mrf.mxu0
    %v621 = vadd.f32 %v456, %v620
    %v622 = vpop.f32.mrf.mxu0
    %v623 = vpop.f32.mrf.mxu0
    %v624 = vadd.f32 %v456, %v623
    %v625 = vpop.f32.mrf.mxu0
    %626 = vmatprep.mubr.bf16.mxu0 0
    %627 = vmatmul.mubr.bf16.gmra.mxu0 %v495
    %v628 = vpop.f32.mrf.mxu0
    %v629 = vadd.f32 %v456, %v628
    %v630 = vpop.f32.mrf.mxu0
    %v631 = vpop.f32.mrf.mxu0
    %v632 = vadd.f32 %v456, %v631
    %v633 = vpop.f32.mrf.mxu0
    %634 = vmatprep.mubr.bf16.mxu0 0
    %635 = vmatmul.mubr.bf16.gmra.mxu0 %v496
    %v636 = vpop.f32.mrf.mxu0
    %v637 = vadd.f32 %v456, %v636
    %v638 = vpop.f32.mrf.mxu0
    %v639 = vpop.f32.mrf.mxu0
    %v640 = vadd.f32 %v456, %v639
    %v641 = vpop.f32.mrf.mxu0
    %642 = vmatprep.mubr.bf16.mxu0 0
    %643 = vmatmul.mubr.bf16.gmra.mxu0 %v497
    %v644 = vpop.f32.mrf.mxu0
    %v645 = vadd.f32 %v456, %v644
    %v646 = vpop.f32.mrf.mxu0
    %v647 = vpop.f32.mrf.mxu0
    %v648 = vadd.f32 %v456, %v647
    %v649 = vpop.f32.mrf.mxu0
    %650 = vdwg.mxu0
    %v651 = vmax.f32 %v589, 0.0
    %v652 = vmax.f32 %v592, 0.0
    %v653 = vmax.f32 %v597, 0.0
    %v654 = vmax.f32 %v600, 0.0
    %v655 = vmax.f32 %v605, 0.0
    %v656 = vmax.f32 %v608, 0.0
    %v657 = vmax.f32 %v613, 0.0
    %v658 = vmax.f32 %v616, 0.0
    %v659 = vmax.f32 %v621, 0.0
    %v660 = vmax.f32 %v624, 0.0
    %v661 = vmax.f32 %v629, 0.0
    %v662 = vmax.f32 %v632, 0.0
    %v663 = vmax.f32 %v637, 0.0
    %v664 = vmax.f32 %v640, 0.0
    %v665 = vmax.f32 %v645, 0.0
    %v666 = vmax.f32 %v648, 0.0
    %v667 = vpack.c.bf16 %v652, %v651
    %v668 = vpack.c.bf16 %v654, %v653
    %v669 = vpack.c.bf16 %v656, %v655
    %v670 = vpack.c.bf16 %v658, %v657
    %v671 = vpack.c.bf16 %v660, %v659
    %v672 = vpack.c.bf16 %v662, %v661
    %v673 = vpack.c.bf16 %v664, %v663
    %v674 = vpack.c.bf16 %v666, %v665
    %v683 = vunpack.c.l.b16 %v667
    %v684 = vunpack.c.h.b16 %v667
    %v685 = vunpack.c.l.b16 %v668
    %v686 = vunpack.c.h.b16 %v668
    %v687 = vunpack.c.l.b16 %v669
    %v688 = vunpack.c.h.b16 %v669
    %v689 = vunpack.c.l.b16 %v670
    %v690 = vunpack.c.h.b16 %v670
    %v691 = vunpack.c.l.b16 %v671
    %v692 = vunpack.c.h.b16 %v671
    %v693 = vunpack.c.l.b16 %v672
    %v694 = vunpack.c.h.b16 %v672
    %v695 = vunpack.c.l.b16 %v673
    %v696 = vunpack.c.h.b16 %v673
    %v697 = vunpack.c.l.b16 %v674
    %v698 = vunpack.c.h.b16 %v674
    %v699 = vpack.c.b16 %v683, %v683
    %v700 = vpack.c.b16 %v684, %v684
    %v701 = vpack.c.b16 %v685, %v685
    %v702 = vpack.c.b16 %v686, %v686
    %v703 = vpack.c.b16 %v687, %v687
    %v704 = vpack.c.b16 %v688, %v688
    %v705 = vpack.c.b16 %v689, %v689
    %v706 = vpack.c.b16 %v690, %v690
    %v707 = vpack.c.b16 %v691, %v691
    %v708 = vpack.c.b16 %v692, %v692
    %v709 = vpack.c.b16 %v693, %v693
    %v710 = vpack.c.b16 %v694, %v694
    %v711 = vpack.c.b16 %v695, %v695
    %v712 = vpack.c.b16 %v696, %v696
    %v713 = vpack.c.b16 %v697, %v697
    %v714 = vpack.c.b16 %v698, %v698
    %731 = vst [vmem:[#allocation2] sm:$0xf] %v699
    %732 = vst [vmem:[#allocation2 + $0x4] sm:$0xf] %v700
    %733 = vst [vmem:[#allocation2 + $0x8] sm:$0xf] %v701
    %734 = vst [vmem:[#allocation2 + $0xc] sm:$0xf] %v702
    %735 = vst [vmem:[#allocation2 + $0x10] sm:$0xf] %v703
    %736 = vst [vmem:[#allocation2 + $0x14] sm:$0xf] %v704
    %737 = vst [vmem:[#allocation2 + $0x18] sm:$0xf] %v705
    %738 = vst [vmem:[#allocation2 + $0x1c] sm:$0xf] %v706
    %739 = vst [vmem:[#allocation2 + $0x20] sm:$0xf] %v707
    %740 = vst [vmem:[#allocation2 + $0x24] sm:$0xf] %v708
    %741 = vst [vmem:[#allocation2 + $0x28] sm:$0xf] %v709
    %742 = vst [vmem:[#allocation2 + $0x2c] sm:$0xf] %v710
    %743 = vst [vmem:[#allocation2 + $0x30] sm:$0xf] %v711
    %744 = vst [vmem:[#allocation2 + $0x34] sm:$0xf] %v712
    %745 = vst [vmem:[#allocation2 + $0x38] sm:$0xf] %v713
    %746 = vst [vmem:[#allocation2 + $0x3c] sm:$0xf] %v714
    %v747 = vld [vmem:[#allocation2] sm:$0xf]
    %v748 = vld [vmem:[#allocation2 + $0x4] sm:$0xf]
    %v749 = vld [vmem:[#allocation2 + $0x8] sm:$0xf]
    %v750 = vld [vmem:[#allocation2 + $0xc] sm:$0xf]
    %v751 = vld [vmem:[#allocation2 + $0x10] sm:$0xf]
    %v752 = vld [vmem:[#allocation2 + $0x14] sm:$0xf]
    %v753 = vld [vmem:[#allocation2 + $0x18] sm:$0xf]
    %v754 = vld [vmem:[#allocation2 + $0x1c] sm:$0xf]
    %v755 = vld [vmem:[#allocation2 + $0x20] sm:$0xf]
    %v756 = vld [vmem:[#allocation2 + $0x24] sm:$0xf]
    %v757 = vld [vmem:[#allocation2 + $0x28] sm:$0xf]
    %v758 = vld [vmem:[#allocation2 + $0x2c] sm:$0xf]
    %v759 = vld [vmem:[#allocation2 + $0x30] sm:$0xf]
    %v760 = vld [vmem:[#allocation2 + $0x34] sm:$0xf]
    %v761 = vld [vmem:[#allocation2 + $0x38] sm:$0xf]
    %v762 = vld [vmem:[#allocation2 + $0x3c] sm:$0xf]
    %s763 = scalar_lea.vmem [#allocation11], 64
    %v764 = vld [vmem:[%s763] sm:$0xf]
    %v765 = vld [vmem:[%s763 + $0x4] sm:$0xf]
    %v766 = vld [vmem:[%s763 + $0x8] sm:$0xf]
    %v767 = vld [vmem:[%s763 + $0xc] sm:$0xf]
    %v768 = vld [vmem:[%s763 + $0x10] sm:$0xf]
    %v769 = vld [vmem:[%s763 + $0x14] sm:$0xf]
    %v770 = vld [vmem:[%s763 + $0x18] sm:$0xf]
    %v771 = vld [vmem:[%s763 + $0x1c] sm:$0xf]
    %v772 = vld [vmem:[%s763 + $0x20] sm:$0xf]
    %v773 = vld [vmem:[%s763 + $0x24] sm:$0xf]
    %v774 = vld [vmem:[%s763 + $0x28] sm:$0xf]
    %v775 = vld [vmem:[%s763 + $0x2c] sm:$0xf]
    %v776 = vld [vmem:[%s763 + $0x30] sm:$0xf]
    %v777 = vld [vmem:[%s763 + $0x34] sm:$0xf]
    %v778 = vld [vmem:[%s763 + $0x38] sm:$0xf]
    %v779 = vld [vmem:[%s763 + $0x3c] sm:$0xf]
    %v796 = vunpack.c.l.b16 %v747
    %v797 = vunpack.c.l.b16 %v748
    %v798 = vunpack.c.l.b16 %v749
    %v799 = vunpack.c.l.b16 %v750
    %v800 = vunpack.c.l.b16 %v751
    %v801 = vunpack.c.l.b16 %v752
    %v802 = vunpack.c.l.b16 %v753
    %v803 = vunpack.c.l.b16 %v754
    %v804 = vunpack.c.l.b16 %v755
    %v805 = vunpack.c.l.b16 %v756
    %v806 = vunpack.c.l.b16 %v757
    %v807 = vunpack.c.l.b16 %v758
    %v808 = vunpack.c.l.b16 %v759
    %v809 = vunpack.c.l.b16 %v760
    %v810 = vunpack.c.l.b16 %v761
    %v811 = vunpack.c.l.b16 %v762
    %v812 = vpack.c.b16 %v797, %v796
    %v813 = vpack.c.b16 %v799, %v798
    %v814 = vpack.c.b16 %v801, %v800
    %v815 = vpack.c.b16 %v803, %v802
    %v816 = vpack.c.b16 %v805, %v804
    %v817 = vpack.c.b16 %v807, %v806
    %v818 = vpack.c.b16 %v809, %v808
    %v819 = vpack.c.b16 %v811, %v810
    %v844 = vunpack.c.l.b16 %v764
    %v845 = vunpack.c.l.b16 %v765
    %v846 = vunpack.c.l.b16 %v766
    %v847 = vunpack.c.l.b16 %v767
    %v848 = vunpack.c.l.b16 %v768
    %v849 = vunpack.c.l.b16 %v769
    %v850 = vunpack.c.l.b16 %v770
    %v851 = vunpack.c.l.b16 %v771
    %v852 = vunpack.c.l.b16 %v772
    %v853 = vunpack.c.l.b16 %v773
    %v854 = vunpack.c.l.b16 %v774
    %v855 = vunpack.c.l.b16 %v775
    %v856 = vunpack.c.l.b16 %v776
    %v857 = vunpack.c.l.b16 %v777
    %v858 = vunpack.c.l.b16 %v778
    %v859 = vunpack.c.l.b16 %v779
    %v860 = vpack.c.b16 %v845, %v844
    %v861 = vpack.c.b16 %v847, %v846
    %v862 = vpack.c.b16 %v849, %v848
    %v863 = vpack.c.b16 %v851, %v850
    %v864 = vpack.c.b16 %v853, %v852
    %v865 = vpack.c.b16 %v855, %v854
    %v866 = vpack.c.b16 %v857, %v856
    %v867 = vpack.c.b16 %v859, %v858
    %876 = vmatprep.subr.bf16.mxu0 0
    %877 = vmatpush1.bf16.msra.mxu0 %v867
    %878 = vmatprep.subr.bf16.mxu0 0
    %879 = vmatpush1.bf16.msra.mxu0 %v866
    %880 = vmatprep.subr.bf16.mxu0 0
    %881 = vmatpush1.bf16.msra.mxu0 %v865
    %882 = vmatprep.subr.bf16.mxu0 0
    %883 = vmatpush1.bf16.msra.mxu0 %v864
    %884 = vmatprep.subr.bf16.mxu0 0
    %885 = vmatpush1.bf16.msra.mxu0 %v863
    %886 = vmatprep.subr.bf16.mxu0 0
    %887 = vmatpush1.bf16.msra.mxu0 %v862
    %888 = vmatprep.subr.bf16.mxu0 0
    %889 = vmatpush1.bf16.msra.mxu0 %v861
    %890 = vmatprep.subr.bf16.mxu0 0
    %891 = vmatpush1.bf16.msra.mxu0 %v860
    %892 = vmatprep.subr.bf16.mxu0 0
    %893 = vmatpush2.bf16.msra.mxu0 0
    %894 = vmatprep.subr.bf16.mxu0 0
    %895 = vmatpush2.bf16.msra.mxu0 0
    %896 = vmatprep.subr.bf16.mxu0 0
    %897 = vmatpush2.bf16.msra.mxu0 0
    %898 = vmatprep.subr.bf16.mxu0 0
    %899 = vmatpush2.bf16.msra.mxu0 0
    %900 = vmatprep.subr.bf16.mxu0 0
    %901 = vmatpush2.bf16.msra.mxu0 0
    %902 = vmatprep.subr.bf16.mxu0 0
    %903 = vmatpush2.bf16.msra.mxu0 0
    %904 = vmatprep.subr.bf16.mxu0 0
    %905 = vmatpush2.bf16.msra.mxu0 0
    %906 = vmatprep.subr.bf16.mxu0 0
    %907 = vmatpush2.bf16.msra.mxu0 0
    %908 = vmatprep.mubr.bf16.mxu0 0
    %909 = vmatmul.mubr.bf16.gmra.mxu0 %v812
    %v910 = vpop.f32.mrf.mxu0
    %v911 = vadd.f32 0.0, %v910
    %v912 = vpop.f32.mrf.mxu0
    %v913 = vpop.f32.mrf.mxu0
    %v914 = vadd.f32 0.0, %v913
    %v915 = vpop.f32.mrf.mxu0
    %916 = vmatprep.mubr.bf16.mxu0 0
    %917 = vmatmul.mubr.bf16.gmra.mxu0 %v813
    %v918 = vpop.f32.mrf.mxu0
    %v919 = vadd.f32 0.0, %v918
    %v920 = vpop.f32.mrf.mxu0
    %v921 = vpop.f32.mrf.mxu0
    %v922 = vadd.f32 0.0, %v921
    %v923 = vpop.f32.mrf.mxu0
    %924 = vmatprep.mubr.bf16.mxu0 0
    %925 = vmatmul.mubr.bf16.gmra.mxu0 %v814
    %v926 = vpop.f32.mrf.mxu0
    %v927 = vadd.f32 0.0, %v926
    %v928 = vpop.f32.mrf.mxu0
    %v929 = vpop.f32.mrf.mxu0
    %v930 = vadd.f32 0.0, %v929
    %v931 = vpop.f32.mrf.mxu0
    %932 = vmatprep.mubr.bf16.mxu0 0
    %933 = vmatmul.mubr.bf16.gmra.mxu0 %v815
    %v934 = vpop.f32.mrf.mxu0
    %v935 = vadd.f32 0.0, %v934
    %v936 = vpop.f32.mrf.mxu0
    %v937 = vpop.f32.mrf.mxu0
    %v938 = vadd.f32 0.0, %v937
    %v939 = vpop.f32.mrf.mxu0
    %940 = vmatprep.mubr.bf16.mxu0 0
    %941 = vmatmul.mubr.bf16.gmra.mxu0 %v816
    %v942 = vpop.f32.mrf.mxu0
    %v943 = vadd.f32 0.0, %v942
    %v944 = vpop.f32.mrf.mxu0
    %v945 = vpop.f32.mrf.mxu0
    %v946 = vadd.f32 0.0, %v945
    %v947 = vpop.f32.mrf.mxu0
    %948 = vmatprep.mubr.bf16.mxu0 0
    %949 = vmatmul.mubr.bf16.gmra.mxu0 %v817
    %v950 = vpop.f32.mrf.mxu0
    %v951 = vadd.f32 0.0, %v950
    %v952 = vpop.f32.mrf.mxu0
    %v953 = vpop.f32.mrf.mxu0
    %v954 = vadd.f32 0.0, %v953
    %v955 = vpop.f32.mrf.mxu0
    %956 = vmatprep.mubr.bf16.mxu0 0
    %957 = vmatmul.mubr.bf16.gmra.mxu0 %v818
    %v958 = vpop.f32.mrf.mxu0
    %v959 = vadd.f32 0.0, %v958
    %v960 = vpop.f32.mrf.mxu0
    %v961 = vpop.f32.mrf.mxu0
    %v962 = vadd.f32 0.0, %v961
    %v963 = vpop.f32.mrf.mxu0
    %964 = vmatprep.mubr.bf16.mxu0 0
    %965 = vmatmul.mubr.bf16.gmra.mxu0 %v819
    %v966 = vpop.f32.mrf.mxu0
    %v967 = vadd.f32 0.0, %v966
    %v968 = vpop.f32.mrf.mxu0
    %v969 = vpop.f32.mrf.mxu0
    %v970 = vadd.f32 0.0, %v969
    %v971 = vpop.f32.mrf.mxu0
    %972 = vdwg.mxu0
    %v973 = vpack.c.bf16 %v914, %v911
    %v974 = vpack.c.bf16 %v922, %v919
    %v975 = vpack.c.bf16 %v930, %v927
    %v976 = vpack.c.bf16 %v938, %v935
    %v977 = vpack.c.bf16 %v946, %v943
    %v978 = vpack.c.bf16 %v954, %v951
    %v979 = vpack.c.bf16 %v962, %v959
    %v980 = vpack.c.bf16 %v970, %v967
    %v989 = vunpack.c.l.b16 %v973
    %v990 = vunpack.c.h.b16 %v973
    %v991 = vunpack.c.l.b16 %v974
    %v992 = vunpack.c.h.b16 %v974
    %v993 = vunpack.c.l.b16 %v975
    %v994 = vunpack.c.h.b16 %v975
    %v995 = vunpack.c.l.b16 %v976
    %v996 = vunpack.c.h.b16 %v976
    %v997 = vunpack.c.l.b16 %v977
    %v998 = vunpack.c.h.b16 %v977
    %v999 = vunpack.c.l.b16 %v978
    %v1000 = vunpack.c.h.b16 %v978
    %v1001 = vunpack.c.l.b16 %v979
    %v1002 = vunpack.c.h.b16 %v979
    %v1003 = vunpack.c.l.b16 %v980
    %v1004 = vunpack.c.h.b16 %v980
    %v1005 = vpack.c.b16 %v989, %v989
    %v1006 = vpack.c.b16 %v990, %v990
    %v1007 = vpack.c.b16 %v991, %v991
    %v1008 = vpack.c.b16 %v992, %v992
    %v1009 = vpack.c.b16 %v993, %v993
    %v1010 = vpack.c.b16 %v994, %v994
    %v1011 = vpack.c.b16 %v995, %v995
    %v1012 = vpack.c.b16 %v996, %v996
    %v1013 = vpack.c.b16 %v997, %v997
    %v1014 = vpack.c.b16 %v998, %v998
    %v1015 = vpack.c.b16 %v999, %v999
    %v1016 = vpack.c.b16 %v1000, %v1000
    %v1017 = vpack.c.b16 %v1001, %v1001
    %v1018 = vpack.c.b16 %v1002, %v1002
    %v1019 = vpack.c.b16 %v1003, %v1003
    %v1020 = vpack.c.b16 %v1004, %v1004
    %1037 = vst [vmem:[#allocation3] sm:$0xf] %v1005
    %1038 = vst [vmem:[#allocation3 + $0x4] sm:$0xf] %v1006
    %1039 = vst [vmem:[#allocation3 + $0x8] sm:$0xf] %v1007
    %1040 = vst [vmem:[#allocation3 + $0xc] sm:$0xf] %v1008
    %1041 = vst [vmem:[#allocation3 + $0x10] sm:$0xf] %v1009
    %1042 = vst [vmem:[#allocation3 + $0x14] sm:$0xf] %v1010
    %1043 = vst [vmem:[#allocation3 + $0x18] sm:$0xf] %v1011
    %1044 = vst [vmem:[#allocation3 + $0x1c] sm:$0xf] %v1012
    %1045 = vst [vmem:[#allocation3 + $0x20] sm:$0xf] %v1013
    %1046 = vst [vmem:[#allocation3 + $0x24] sm:$0xf] %v1014
    %1047 = vst [vmem:[#allocation3 + $0x28] sm:$0xf] %v1015
    %1048 = vst [vmem:[#allocation3 + $0x2c] sm:$0xf] %v1016
    %1049 = vst [vmem:[#allocation3 + $0x30] sm:$0xf] %v1017
    %1050 = vst [vmem:[#allocation3 + $0x34] sm:$0xf] %v1018
    %1051 = vst [vmem:[#allocation3 + $0x38] sm:$0xf] %v1019
    %1052 = vst [vmem:[#allocation3 + $0x3c] sm:$0xf] %v1020
    %v1053 = vld [vmem:[#allocation6] sm:$0xf]
    %v1054 = vld [vmem:[#allocation6 + $0x4] sm:$0xf]
    %v1055 = vld [vmem:[#allocation6 + $0x8] sm:$0xf]
    %v1056 = vld [vmem:[#allocation6 + $0xc] sm:$0xf]
    %v1057 = vld [vmem:[#allocation6 + $0x10] sm:$0xf]
    %v1058 = vld [vmem:[#allocation6 + $0x14] sm:$0xf]
    %v1059 = vld [vmem:[#allocation6 + $0x18] sm:$0xf]
    %v1060 = vld [vmem:[#allocation6 + $0x1c] sm:$0xf]
    %v1061 = vld [vmem:[#allocation6 + $0x20] sm:$0xf]
    %v1062 = vld [vmem:[#allocation6 + $0x24] sm:$0xf]
    %v1063 = vld [vmem:[#allocation6 + $0x28] sm:$0xf]
    %v1064 = vld [vmem:[#allocation6 + $0x2c] sm:$0xf]
    %v1065 = vld [vmem:[#allocation6 + $0x30] sm:$0xf]
    %v1066 = vld [vmem:[#allocation6 + $0x34] sm:$0xf]
    %v1067 = vld [vmem:[#allocation6 + $0x38] sm:$0xf]
    %v1068 = vld [vmem:[#allocation6 + $0x3c] sm:$0xf]
    %v1069 = vld [vmem:[#allocation3] sm:$0xf]
    %v1070 = vld [vmem:[#allocation3 + $0x4] sm:$0xf]
    %v1071 = vld [vmem:[#allocation3 + $0x8] sm:$0xf]
    %v1072 = vld [vmem:[#allocation3 + $0xc] sm:$0xf]
    %v1073 = vld [vmem:[#allocation3 + $0x10] sm:$0xf]
    %v1074 = vld [vmem:[#allocation3 + $0x14] sm:$0xf]
    %v1075 = vld [vmem:[#allocation3 + $0x18] sm:$0xf]
    %v1076 = vld [vmem:[#allocation3 + $0x1c] sm:$0xf]
    %v1077 = vld [vmem:[#allocation3 + $0x20] sm:$0xf]
    %v1078 = vld [vmem:[#allocation3 + $0x24] sm:$0xf]
    %v1079 = vld [vmem:[#allocation3 + $0x28] sm:$0xf]
    %v1080 = vld [vmem:[#allocation3 + $0x2c] sm:$0xf]
    %v1081 = vld [vmem:[#allocation3 + $0x30] sm:$0xf]
    %v1082 = vld [vmem:[#allocation3 + $0x34] sm:$0xf]
    %v1083 = vld [vmem:[#allocation3 + $0x38] sm:$0xf]
    %v1084 = vld [vmem:[#allocation3 + $0x3c] sm:$0xf]
    %s1085 = scalar_lea.vmem %s4, 1
    %v1086 = vld [vmem:[%s1085] sm:$0x1]
    %v1088 = vlaneseq
    %v1089 = vshrl.u32 %v1088, 7
    %v1090 = vsub.s32 0, %v1089
    %v1091 = vrot.slane %v1086, %v1090
    %v1109 = vunpack.c.l.b16 %v1053
    %v1110 = vunpack.c.l.b16 %v1054
    %v1111 = vunpack.c.l.b16 %v1055
    %v1112 = vunpack.c.l.b16 %v1056
    %v1113 = vunpack.c.l.b16 %v1057
    %v1114 = vunpack.c.l.b16 %v1058
    %v1115 = vunpack.c.l.b16 %v1059
    %v1116 = vunpack.c.l.b16 %v1060
    %v1117 = vunpack.c.l.b16 %v1061
    %v1118 = vunpack.c.l.b16 %v1062
    %v1119 = vunpack.c.l.b16 %v1063
    %v1120 = vunpack.c.l.b16 %v1064
    %v1121 = vunpack.c.l.b16 %v1065
    %v1122 = vunpack.c.l.b16 %v1066
    %v1123 = vunpack.c.l.b16 %v1067
    %v1124 = vunpack.c.l.b16 %v1068
    %v1125 = vpack.c.b16 %v1110, %v1109
    %v1126 = vpack.c.b16 %v1112, %v1111
    %v1127 = vpack.c.b16 %v1114, %v1113
    %v1128 = vpack.c.b16 %v1116, %v1115
    %v1129 = vpack.c.b16 %v1118, %v1117
    %v1130 = vpack.c.b16 %v1120, %v1119
    %v1131 = vpack.c.b16 %v1122, %v1121
    %v1132 = vpack.c.b16 %v1124, %v1123
    %v1157 = vunpack.c.l.b16 %v1069
    %v1158 = vunpack.c.l.b16 %v1070
    %v1159 = vunpack.c.l.b16 %v1071
    %v1160 = vunpack.c.l.b16 %v1072
    %v1161 = vunpack.c.l.b16 %v1073
    %v1162 = vunpack.c.l.b16 %v1074
    %v1163 = vunpack.c.l.b16 %v1075
    %v1164 = vunpack.c.l.b16 %v1076
    %v1165 = vunpack.c.l.b16 %v1077
    %v1166 = vunpack.c.l.b16 %v1078
    %v1167 = vunpack.c.l.b16 %v1079
    %v1168 = vunpack.c.l.b16 %v1080
    %v1169 = vunpack.c.l.b16 %v1081
    %v1170 = vunpack.c.l.b16 %v1082
    %v1171 = vunpack.c.l.b16 %v1083
    %v1172 = vunpack.c.l.b16 %v1084
    %v1173 = vpack.c.b16 %v1158, %v1157
    %v1174 = vpack.c.b16 %v1160, %v1159
    %v1175 = vpack.c.b16 %v1162, %v1161
    %v1176 = vpack.c.b16 %v1164, %v1163
    %v1177 = vpack.c.b16 %v1166, %v1165
    %v1178 = vpack.c.b16 %v1168, %v1167
    %v1179 = vpack.c.b16 %v1170, %v1169
    %v1180 = vpack.c.b16 %v1172, %v1171
    %1189 = vmatprep.subr.bf16.mxu0 0
    %1190 = vmatpush1.bf16.msra.mxu0 %v1180
    %1191 = vmatprep.subr.bf16.mxu0 0
    %1192 = vmatpush1.bf16.msra.mxu0 %v1179
    %1193 = vmatprep.subr.bf16.mxu0 0
    %1194 = vmatpush1.bf16.msra.mxu0 %v1178
    %1195 = vmatprep.subr.bf16.mxu0 0
    %1196 = vmatpush1.bf16.msra.mxu0 %v1177
    %1197 = vmatprep.subr.bf16.mxu0 0
    %1198 = vmatpush1.bf16.msra.mxu0 %v1176
    %1199 = vmatprep.subr.bf16.mxu0 0
    %1200 = vmatpush1.bf16.msra.mxu0 %v1175
    %1201 = vmatprep.subr.bf16.mxu0 0
    %1202 = vmatpush1.bf16.msra.mxu0 %v1174
    %1203 = vmatprep.subr.bf16.mxu0 0
    %1204 = vmatpush1.bf16.msra.mxu0 %v1173
    %1205 = vmatprep.subr.bf16.mxu0 0
    %1206 = vmatpush2.bf16.msra.mxu0 0
    %1207 = vmatprep.subr.bf16.mxu0 0
    %1208 = vmatpush2.bf16.msra.mxu0 0
    %1209 = vmatprep.subr.bf16.mxu0 0
    %1210 = vmatpush2.bf16.msra.mxu0 0
    %1211 = vmatprep.subr.bf16.mxu0 0
    %1212 = vmatpush2.bf16.msra.mxu0 0
    %1213 = vmatprep.subr.bf16.mxu0 0
    %1214 = vmatpush2.bf16.msra.mxu0 0
    %1215 = vmatprep.subr.bf16.mxu0 0
    %1216 = vmatpush2.bf16.msra.mxu0 0
    %1217 = vmatprep.subr.bf16.mxu0 0
    %1218 = vmatpush2.bf16.msra.mxu0 0
    %1219 = vmatprep.subr.bf16.mxu0 0
    %1220 = vmatpush2.bf16.msra.mxu0 0
    %1221 = vmatprep.mubr.bf16.mxu0 0
    %1222 = vmatmul.mubr.bf16.gmra.mxu0 %v1125
    %v1223 = vpop.f32.mrf.mxu0
    %v1224 = vadd.f32 %v1091, %v1223
    %v1225 = vpop.f32.mrf.mxu0
    %v1226 = vpop.f32.mrf.mxu0
    %v1227 = vadd.f32 %v1091, %v1226
    %v1228 = vpop.f32.mrf.mxu0
    %1229 = vmatprep.mubr.bf16.mxu0 0
    %1230 = vmatmul.mubr.bf16.gmra.mxu0 %v1126
    %v1231 = vpop.f32.mrf.mxu0
    %v1232 = vadd.f32 %v1091, %v1231
    %v1233 = vpop.f32.mrf.mxu0
    %v1234 = vpop.f32.mrf.mxu0
    %v1235 = vadd.f32 %v1091, %v1234
    %v1236 = vpop.f32.mrf.mxu0
    %1237 = vmatprep.mubr.bf16.mxu0 0
    %1238 = vmatmul.mubr.bf16.gmra.mxu0 %v1127
    %v1239 = vpop.f32.mrf.mxu0
    %v1240 = vadd.f32 %v1091, %v1239
    %v1241 = vpop.f32.mrf.mxu0
    %v1242 = vpop.f32.mrf.mxu0
    %v1243 = vadd.f32 %v1091, %v1242
    %v1244 = vpop.f32.mrf.mxu0
    %1245 = vmatprep.mubr.bf16.mxu0 0
    %1246 = vmatmul.mubr.bf16.gmra.mxu0 %v1128
    %v1247 = vpop.f32.mrf.mxu0
    %v1248 = vadd.f32 %v1091, %v1247
    %v1249 = vpop.f32.mrf.mxu0
    %v1250 = vpop.f32.mrf.mxu0
    %v1251 = vadd.f32 %v1091, %v1250
    %v1252 = vpop.f32.mrf.mxu0
    %1253 = vmatprep.mubr.bf16.mxu0 0
    %1254 = vmatmul.mubr.bf16.gmra.mxu0 %v1129
    %v1255 = vpop.f32.mrf.mxu0
    %v1256 = vadd.f32 %v1091, %v1255
    %v1257 = vpop.f32.mrf.mxu0
    %v1258 = vpop.f32.mrf.mxu0
    %v1259 = vadd.f32 %v1091, %v1258
    %v1260 = vpop.f32.mrf.mxu0
    %1261 = vmatprep.mubr.bf16.mxu0 0
    %1262 = vmatmul.mubr.bf16.gmra.mxu0 %v1130
    %v1263 = vpop.f32.mrf.mxu0
    %v1264 = vadd.f32 %v1091, %v1263
    %v1265 = vpop.f32.mrf.mxu0
    %v1266 = vpop.f32.mrf.mxu0
    %v1267 = vadd.f32 %v1091, %v1266
    %v1268 = vpop.f32.mrf.mxu0
    %1269 = vmatprep.mubr.bf16.mxu0 0
    %1270 = vmatmul.mubr.bf16.gmra.mxu0 %v1131
    %v1271 = vpop.f32.mrf.mxu0
    %v1272 = vadd.f32 %v1091, %v1271
    %v1273 = vpop.f32.mrf.mxu0
    %v1274 = vpop.f32.mrf.mxu0
    %v1275 = vadd.f32 %v1091, %v1274
    %v1276 = vpop.f32.mrf.mxu0
    %1277 = vmatprep.mubr.bf16.mxu0 0
    %1278 = vmatmul.mubr.bf16.gmra.mxu0 %v1132
    %v1279 = vpop.f32.mrf.mxu0
    %v1280 = vadd.f32 %v1091, %v1279
    %v1281 = vpop.f32.mrf.mxu0
    %v1282 = vpop.f32.mrf.mxu0
    %v1283 = vadd.f32 %v1091, %v1282
    %v1284 = vpop.f32.mrf.mxu0
    %1285 = vdwg.mxu0
    %v1286 = vmax.f32 %v1224, 0.0
    %v1287 = vmax.f32 %v1227, 0.0
    %v1288 = vmax.f32 %v1232, 0.0
    %v1289 = vmax.f32 %v1235, 0.0
    %v1290 = vmax.f32 %v1240, 0.0
    %v1291 = vmax.f32 %v1243, 0.0
    %v1292 = vmax.f32 %v1248, 0.0
    %v1293 = vmax.f32 %v1251, 0.0
    %v1294 = vmax.f32 %v1256, 0.0
    %v1295 = vmax.f32 %v1259, 0.0
    %v1296 = vmax.f32 %v1264, 0.0
    %v1297 = vmax.f32 %v1267, 0.0
    %v1298 = vmax.f32 %v1272, 0.0
    %v1299 = vmax.f32 %v1275, 0.0
    %v1300 = vmax.f32 %v1280, 0.0
    %v1301 = vmax.f32 %v1283, 0.0
    %v1302 = vpack.c.bf16 %v1287, %v1286
    %v1303 = vpack.c.bf16 %v1289, %v1288
    %v1304 = vpack.c.bf16 %v1291, %v1290
    %v1305 = vpack.c.bf16 %v1293, %v1292
    %v1306 = vpack.c.bf16 %v1295, %v1294
    %v1307 = vpack.c.bf16 %v1297, %v1296
    %v1308 = vpack.c.bf16 %v1299, %v1298
    %v1309 = vpack.c.bf16 %v1301, %v1300
    %v1318 = vunpack.c.l.b16 %v1302
    %v1319 = vunpack.c.h.b16 %v1302
    %v1320 = vunpack.c.l.b16 %v1303
    %v1321 = vunpack.c.h.b16 %v1303
    %v1322 = vunpack.c.l.b16 %v1304
    %v1323 = vunpack.c.h.b16 %v1304
    %v1324 = vunpack.c.l.b16 %v1305
    %v1325 = vunpack.c.h.b16 %v1305
    %v1326 = vunpack.c.l.b16 %v1306
    %v1327 = vunpack.c.h.b16 %v1306
    %v1328 = vunpack.c.l.b16 %v1307
    %v1329 = vunpack.c.h.b16 %v1307
    %v1330 = vunpack.c.l.b16 %v1308
    %v1331 = vunpack.c.h.b16 %v1308
    %v1332 = vunpack.c.l.b16 %v1309
    %v1333 = vunpack.c.h.b16 %v1309
    %v1334 = vpack.c.b16 %v1318, %v1318
    %v1335 = vpack.c.b16 %v1319, %v1319
    %v1336 = vpack.c.b16 %v1320, %v1320
    %v1337 = vpack.c.b16 %v1321, %v1321
    %v1338 = vpack.c.b16 %v1322, %v1322
    %v1339 = vpack.c.b16 %v1323, %v1323
    %v1340 = vpack.c.b16 %v1324, %v1324
    %v1341 = vpack.c.b16 %v1325, %v1325
    %v1342 = vpack.c.b16 %v1326, %v1326
    %v1343 = vpack.c.b16 %v1327, %v1327
    %v1344 = vpack.c.b16 %v1328, %v1328
    %v1345 = vpack.c.b16 %v1329, %v1329
    %v1346 = vpack.c.b16 %v1330, %v1330
    %v1347 = vpack.c.b16 %v1331, %v1331
    %v1348 = vpack.c.b16 %v1332, %v1332
    %v1349 = vpack.c.b16 %v1333, %v1333
    %1366 = vst [vmem:[#allocation2] sm:$0xf] %v1334
    %1367 = vst [vmem:[#allocation2 + $0x4] sm:$0xf] %v1335
    %1368 = vst [vmem:[#allocation2 + $0x8] sm:$0xf] %v1336
    %1369 = vst [vmem:[#allocation2 + $0xc] sm:$0xf] %v1337
    %1370 = vst [vmem:[#allocation2 + $0x10] sm:$0xf] %v1338
    %1371 = vst [vmem:[#allocation2 + $0x14] sm:$0xf] %v1339
    %1372 = vst [vmem:[#allocation2 + $0x18] sm:$0xf] %v1340
    %1373 = vst [vmem:[#allocation2 + $0x1c] sm:$0xf] %v1341
    %1374 = vst [vmem:[#allocation2 + $0x20] sm:$0xf] %v1342
    %1375 = vst [vmem:[#allocation2 + $0x24] sm:$0xf] %v1343
    %1376 = vst [vmem:[#allocation2 + $0x28] sm:$0xf] %v1344
    %1377 = vst [vmem:[#allocation2 + $0x2c] sm:$0xf] %v1345
    %1378 = vst [vmem:[#allocation2 + $0x30] sm:$0xf] %v1346
    %1379 = vst [vmem:[#allocation2 + $0x34] sm:$0xf] %v1347
    %1380 = vst [vmem:[#allocation2 + $0x38] sm:$0xf] %v1348
    %1381 = vst [vmem:[#allocation2 + $0x3c] sm:$0xf] %v1349
    %v1382 = vld [vmem:[#allocation2] sm:$0xf]
    %v1383 = vld [vmem:[#allocation2 + $0x4] sm:$0xf]
    %v1384 = vld [vmem:[#allocation2 + $0x8] sm:$0xf]
    %v1385 = vld [vmem:[#allocation2 + $0xc] sm:$0xf]
    %v1386 = vld [vmem:[#allocation2 + $0x10] sm:$0xf]
    %v1387 = vld [vmem:[#allocation2 + $0x14] sm:$0xf]
    %v1388 = vld [vmem:[#allocation2 + $0x18] sm:$0xf]
    %v1389 = vld [vmem:[#allocation2 + $0x1c] sm:$0xf]
    %v1390 = vld [vmem:[#allocation2 + $0x20] sm:$0xf]
    %v1391 = vld [vmem:[#allocation2 + $0x24] sm:$0xf]
    %v1392 = vld [vmem:[#allocation2 + $0x28] sm:$0xf]
    %v1393 = vld [vmem:[#allocation2 + $0x2c] sm:$0xf]
    %v1394 = vld [vmem:[#allocation2 + $0x30] sm:$0xf]
    %v1395 = vld [vmem:[#allocation2 + $0x34] sm:$0xf]
    %v1396 = vld [vmem:[#allocation2 + $0x38] sm:$0xf]
    %v1397 = vld [vmem:[#allocation2 + $0x3c] sm:$0xf]
    %s1398 = scalar_lea.vmem [#allocation11], 128
    %v1399 = vld [vmem:[%s1398] sm:$0xf]
    %v1400 = vld [vmem:[%s1398 + $0x4] sm:$0xf]
    %v1401 = vld [vmem:[%s1398 + $0x8] sm:$0xf]
    %v1402 = vld [vmem:[%s1398 + $0xc] sm:$0xf]
    %v1403 = vld [vmem:[%s1398 + $0x10] sm:$0xf]
    %v1404 = vld [vmem:[%s1398 + $0x14] sm:$0xf]
    %v1405 = vld [vmem:[%s1398 + $0x18] sm:$0xf]
    %v1406 = vld [vmem:[%s1398 + $0x1c] sm:$0xf]
    %v1407 = vld [vmem:[%s1398 + $0x20] sm:$0xf]
    %v1408 = vld [vmem:[%s1398 + $0x24] sm:$0xf]
    %v1409 = vld [vmem:[%s1398 + $0x28] sm:$0xf]
    %v1410 = vld [vmem:[%s1398 + $0x2c] sm:$0xf]
    %v1411 = vld [vmem:[%s1398 + $0x30] sm:$0xf]
    %v1412 = vld [vmem:[%s1398 + $0x34] sm:$0xf]
    %v1413 = vld [vmem:[%s1398 + $0x38] sm:$0xf]
    %v1414 = vld [vmem:[%s1398 + $0x3c] sm:$0xf]
    %v1431 = vunpack.c.l.b16 %v1382
    %v1432 = vunpack.c.l.b16 %v1383
    %v1433 = vunpack.c.l.b16 %v1384
    %v1434 = vunpack.c.l.b16 %v1385
    %v1435 = vunpack.c.l.b16 %v1386
    %v1436 = vunpack.c.l.b16 %v1387
    %v1437 = vunpack.c.l.b16 %v1388
    %v1438 = vunpack.c.l.b16 %v1389
    %v1439 = vunpack.c.l.b16 %v1390
    %v1440 = vunpack.c.l.b16 %v1391
    %v1441 = vunpack.c.l.b16 %v1392
    %v1442 = vunpack.c.l.b16 %v1393
    %v1443 = vunpack.c.l.b16 %v1394
    %v1444 = vunpack.c.l.b16 %v1395
    %v1445 = vunpack.c.l.b16 %v1396
    %v1446 = vunpack.c.l.b16 %v1397
    %v1447 = vpack.c.b16 %v1432, %v1431
    %v1448 = vpack.c.b16 %v1434, %v1433
    %v1449 = vpack.c.b16 %v1436, %v1435
    %v1450 = vpack.c.b16 %v1438, %v1437
    %v1451 = vpack.c.b16 %v1440, %v1439
    %v1452 = vpack.c.b16 %v1442, %v1441
    %v1453 = vpack.c.b16 %v1444, %v1443
    %v1454 = vpack.c.b16 %v1446, %v1445
    %v1479 = vunpack.c.l.b16 %v1399
    %v1480 = vunpack.c.l.b16 %v1400
    %v1481 = vunpack.c.l.b16 %v1401
    %v1482 = vunpack.c.l.b16 %v1402
    %v1483 = vunpack.c.l.b16 %v1403
    %v1484 = vunpack.c.l.b16 %v1404
    %v1485 = vunpack.c.l.b16 %v1405
    %v1486 = vunpack.c.l.b16 %v1406
    %v1487 = vunpack.c.l.b16 %v1407
    %v1488 = vunpack.c.l.b16 %v1408
    %v1489 = vunpack.c.l.b16 %v1409
    %v1490 = vunpack.c.l.b16 %v1410
    %v1491 = vunpack.c.l.b16 %v1411
    %v1492 = vunpack.c.l.b16 %v1412
    %v1493 = vunpack.c.l.b16 %v1413
    %v1494 = vunpack.c.l.b16 %v1414
    %v1495 = vpack.c.b16 %v1480, %v1479
    %v1496 = vpack.c.b16 %v1482, %v1481
    %v1497 = vpack.c.b16 %v1484, %v1483
    %v1498 = vpack.c.b16 %v1486, %v1485
    %v1499 = vpack.c.b16 %v1488, %v1487
    %v1500 = vpack.c.b16 %v1490, %v1489
    %v1501 = vpack.c.b16 %v1492, %v1491
    %v1502 = vpack.c.b16 %v1494, %v1493
    %1511 = vmatprep.subr.bf16.mxu0 0
    %1512 = vmatpush1.bf16.msra.mxu0 %v1502
    %1513 = vmatprep.subr.bf16.mxu0 0
    %1514 = vmatpush1.bf16.msra.mxu0 %v1501
    %1515 = vmatprep.subr.bf16.mxu0 0
    %1516 = vmatpush1.bf16.msra.mxu0 %v1500
    %1517 = vmatprep.subr.bf16.mxu0 0
    %1518 = vmatpush1.bf16.msra.mxu0 %v1499
    %1519 = vmatprep.subr.bf16.mxu0 0
    %1520 = vmatpush1.bf16.msra.mxu0 %v1498
    %1521 = vmatprep.subr.bf16.mxu0 0
    %1522 = vmatpush1.bf16.msra.mxu0 %v1497
    %1523 = vmatprep.subr.bf16.mxu0 0
    %1524 = vmatpush1.bf16.msra.mxu0 %v1496
    %1525 = vmatprep.subr.bf16.mxu0 0
    %1526 = vmatpush1.bf16.msra.mxu0 %v1495
    %1527 = vmatprep.subr.bf16.mxu0 0
    %1528 = vmatpush2.bf16.msra.mxu0 0
    %1529 = vmatprep.subr.bf16.mxu0 0
    %1530 = vmatpush2.bf16.msra.mxu0 0
    %1531 = vmatprep.subr.bf16.mxu0 0
    %1532 = vmatpush2.bf16.msra.mxu0 0
    %1533 = vmatprep.subr.bf16.mxu0 0
    %1534 = vmatpush2.bf16.msra.mxu0 0
    %1535 = vmatprep.subr.bf16.mxu0 0
    %1536 = vmatpush2.bf16.msra.mxu0 0
    %1537 = vmatprep.subr.bf16.mxu0 0
    %1538 = vmatpush2.bf16.msra.mxu0 0
    %1539 = vmatprep.subr.bf16.mxu0 0
    %1540 = vmatpush2.bf16.msra.mxu0 0
    %1541 = vmatprep.subr.bf16.mxu0 0
    %1542 = vmatpush2.bf16.msra.mxu0 0
    %1543 = vmatprep.mubr.bf16.mxu0 0
    %1544 = vmatmul.mubr.bf16.gmra.mxu0 %v1447
    %v1545 = vpop.f32.mrf.mxu0
    %v1546 = vadd.f32 0.0, %v1545
    %v1547 = vpop.f32.mrf.mxu0
    %v1548 = vpop.f32.mrf.mxu0
    %v1549 = vadd.f32 0.0, %v1548
    %v1550 = vpop.f32.mrf.mxu0
    %1551 = vmatprep.mubr.bf16.mxu0 0
    %1552 = vmatmul.mubr.bf16.gmra.mxu0 %v1448
    %v1553 = vpop.f32.mrf.mxu0
    %v1554 = vadd.f32 0.0, %v1553
    %v1555 = vpop.f32.mrf.mxu0
    %v1556 = vpop.f32.mrf.mxu0
    %v1557 = vadd.f32 0.0, %v1556
    %v1558 = vpop.f32.mrf.mxu0
    %1559 = vmatprep.mubr.bf16.mxu0 0
    %1560 = vmatmul.mubr.bf16.gmra.mxu0 %v1449
    %v1561 = vpop.f32.mrf.mxu0
    %v1562 = vadd.f32 0.0, %v1561
    %v1563 = vpop.f32.mrf.mxu0
    %v1564 = vpop.f32.mrf.mxu0
    %v1565 = vadd.f32 0.0, %v1564
    %v1566 = vpop.f32.mrf.mxu0
    %1567 = vmatprep.mubr.bf16.mxu0 0
    %1568 = vmatmul.mubr.bf16.gmra.mxu0 %v1450
    %v1569 = vpop.f32.mrf.mxu0
    %v1570 = vadd.f32 0.0, %v1569
    %v1571 = vpop.f32.mrf.mxu0
    %v1572 = vpop.f32.mrf.mxu0
    %v1573 = vadd.f32 0.0, %v1572
    %v1574 = vpop.f32.mrf.mxu0
    %1575 = vmatprep.mubr.bf16.mxu0 0
    %1576 = vmatmul.mubr.bf16.gmra.mxu0 %v1451
    %v1577 = vpop.f32.mrf.mxu0
    %v1578 = vadd.f32 0.0, %v1577
    %v1579 = vpop.f32.mrf.mxu0
    %v1580 = vpop.f32.mrf.mxu0
    %v1581 = vadd.f32 0.0, %v1580
    %v1582 = vpop.f32.mrf.mxu0
    %1583 = vmatprep.mubr.bf16.mxu0 0
    %1584 = vmatmul.mubr.bf16.gmra.mxu0 %v1452
    %v1585 = vpop.f32.mrf.mxu0
    %v1586 = vadd.f32 0.0, %v1585
    %v1587 = vpop.f32.mrf.mxu0
    %v1588 = vpop.f32.mrf.mxu0
    %v1589 = vadd.f32 0.0, %v1588
    %v1590 = vpop.f32.mrf.mxu0
    %1591 = vmatprep.mubr.bf16.mxu0 0
    %1592 = vmatmul.mubr.bf16.gmra.mxu0 %v1453
    %v1593 = vpop.f32.mrf.mxu0
    %v1594 = vadd.f32 0.0, %v1593
    %v1595 = vpop.f32.mrf.mxu0
    %v1596 = vpop.f32.mrf.mxu0
    %v1597 = vadd.f32 0.0, %v1596
    %v1598 = vpop.f32.mrf.mxu0
    %1599 = vmatprep.mubr.bf16.mxu0 0
    %1600 = vmatmul.mubr.bf16.gmra.mxu0 %v1454
    %v1601 = vpop.f32.mrf.mxu0
    %v1602 = vadd.f32 0.0, %v1601
    %v1603 = vpop.f32.mrf.mxu0
    %v1604 = vpop.f32.mrf.mxu0
    %v1605 = vadd.f32 0.0, %v1604
    %v1606 = vpop.f32.mrf.mxu0
    %1607 = vdwg.mxu0
    %v1608 = vpack.c.bf16 %v1549, %v1546
    %v1609 = vpack.c.bf16 %v1557, %v1554
    %v1610 = vpack.c.bf16 %v1565, %v1562
    %v1611 = vpack.c.bf16 %v1573, %v1570
    %v1612 = vpack.c.bf16 %v1581, %v1578
    %v1613 = vpack.c.bf16 %v1589, %v1586
    %v1614 = vpack.c.bf16 %v1597, %v1594
    %v1615 = vpack.c.bf16 %v1605, %v1602
    %v1624 = vunpack.c.l.b16 %v1608
    %v1625 = vunpack.c.h.b16 %v1608
    %v1626 = vunpack.c.l.b16 %v1609
    %v1627 = vunpack.c.h.b16 %v1609
    %v1628 = vunpack.c.l.b16 %v1610
    %v1629 = vunpack.c.h.b16 %v1610
    %v1630 = vunpack.c.l.b16 %v1611
    %v1631 = vunpack.c.h.b16 %v1611
    %v1632 = vunpack.c.l.b16 %v1612
    %v1633 = vunpack.c.h.b16 %v1612
    %v1634 = vunpack.c.l.b16 %v1613
    %v1635 = vunpack.c.h.b16 %v1613
    %v1636 = vunpack.c.l.b16 %v1614
    %v1637 = vunpack.c.h.b16 %v1614
    %v1638 = vunpack.c.l.b16 %v1615
    %v1639 = vunpack.c.h.b16 %v1615
    %v1640 = vpack.c.b16 %v1624, %v1624
    %v1641 = vpack.c.b16 %v1625, %v1625
    %v1642 = vpack.c.b16 %v1626, %v1626
    %v1643 = vpack.c.b16 %v1627, %v1627
    %v1644 = vpack.c.b16 %v1628, %v1628
    %v1645 = vpack.c.b16 %v1629, %v1629
    %v1646 = vpack.c.b16 %v1630, %v1630
    %v1647 = vpack.c.b16 %v1631, %v1631
    %v1648 = vpack.c.b16 %v1632, %v1632
    %v1649 = vpack.c.b16 %v1633, %v1633
    %v1650 = vpack.c.b16 %v1634, %v1634
    %v1651 = vpack.c.b16 %v1635, %v1635
    %v1652 = vpack.c.b16 %v1636, %v1636
    %v1653 = vpack.c.b16 %v1637, %v1637
    %v1654 = vpack.c.b16 %v1638, %v1638
    %v1655 = vpack.c.b16 %v1639, %v1639
    %1672 = vst [vmem:[#allocation3] sm:$0xf] %v1640
    %1673 = vst [vmem:[#allocation3 + $0x4] sm:$0xf] %v1641
    %1674 = vst [vmem:[#allocation3 + $0x8] sm:$0xf] %v1642
    %1675 = vst [vmem:[#allocation3 + $0xc] sm:$0xf] %v1643
    %1676 = vst [vmem:[#allocation3 + $0x10] sm:$0xf] %v1644
    %1677 = vst [vmem:[#allocation3 + $0x14] sm:$0xf] %v1645
    %1678 = vst [vmem:[#allocation3 + $0x18] sm:$0xf] %v1646
    %1679 = vst [vmem:[#allocation3 + $0x1c] sm:$0xf] %v1647
    %1680 = vst [vmem:[#allocation3 + $0x20] sm:$0xf] %v1648
    %1681 = vst [vmem:[#allocation3 + $0x24] sm:$0xf] %v1649
    %1682 = vst [vmem:[#allocation3 + $0x28] sm:$0xf] %v1650
    %1683 = vst [vmem:[#allocation3 + $0x2c] sm:$0xf] %v1651
    %1684 = vst [vmem:[#allocation3 + $0x30] sm:$0xf] %v1652
    %1685 = vst [vmem:[#allocation3 + $0x34] sm:$0xf] %v1653
    %1686 = vst [vmem:[#allocation3 + $0x38] sm:$0xf] %v1654
    %1687 = vst [vmem:[#allocation3 + $0x3c] sm:$0xf] %v1655
    %v1688 = vld [vmem:[#allocation6] sm:$0xf]
    %v1689 = vld [vmem:[#allocation6 + $0x4] sm:$0xf]
    %v1690 = vld [vmem:[#allocation6 + $0x8] sm:$0xf]
    %v1691 = vld [vmem:[#allocation6 + $0xc] sm:$0xf]
    %v1692 = vld [vmem:[#allocation6 + $0x10] sm:$0xf]
    %v1693 = vld [vmem:[#allocation6 + $0x14] sm:$0xf]
    %v1694 = vld [vmem:[#allocation6 + $0x18] sm:$0xf]
    %v1695 = vld [vmem:[#allocation6 + $0x1c] sm:$0xf]
    %v1696 = vld [vmem:[#allocation6 + $0x20] sm:$0xf]
    %v1697 = vld [vmem:[#allocation6 + $0x24] sm:$0xf]
    %v1698 = vld [vmem:[#allocation6 + $0x28] sm:$0xf]
    %v1699 = vld [vmem:[#allocation6 + $0x2c] sm:$0xf]
    %v1700 = vld [vmem:[#allocation6 + $0x30] sm:$0xf]
    %v1701 = vld [vmem:[#allocation6 + $0x34] sm:$0xf]
    %v1702 = vld [vmem:[#allocation6 + $0x38] sm:$0xf]
    %v1703 = vld [vmem:[#allocation6 + $0x3c] sm:$0xf]
    %v1704 = vld [vmem:[#allocation3] sm:$0xf]
    %v1705 = vld [vmem:[#allocation3 + $0x4] sm:$0xf]
    %v1706 = vld [vmem:[#allocation3 + $0x8] sm:$0xf]
    %v1707 = vld [vmem:[#allocation3 + $0xc] sm:$0xf]
    %v1708 = vld [vmem:[#allocation3 + $0x10] sm:$0xf]
    %v1709 = vld [vmem:[#allocation3 + $0x14] sm:$0xf]
    %v1710 = vld [vmem:[#allocation3 + $0x18] sm:$0xf]
    %v1711 = vld [vmem:[#allocation3 + $0x1c] sm:$0xf]
    %v1712 = vld [vmem:[#allocation3 + $0x20] sm:$0xf]
    %v1713 = vld [vmem:[#allocation3 + $0x24] sm:$0xf]
    %v1714 = vld [vmem:[#allocation3 + $0x28] sm:$0xf]
    %v1715 = vld [vmem:[#allocation3 + $0x2c] sm:$0xf]
    %v1716 = vld [vmem:[#allocation3 + $0x30] sm:$0xf]
    %v1717 = vld [vmem:[#allocation3 + $0x34] sm:$0xf]
    %v1718 = vld [vmem:[#allocation3 + $0x38] sm:$0xf]
    %v1719 = vld [vmem:[#allocation3 + $0x3c] sm:$0xf]
    %s1720 = scalar_lea.vmem %s4, 2
    %v1721 = vld [vmem:[%s1720] sm:$0x1]
    %v1723 = vlaneseq
    %v1724 = vshrl.u32 %v1723, 7
    %v1725 = vsub.s32 0, %v1724
    %v1726 = vrot.slane %v1721, %v1725
    %v1744 = vunpack.c.l.b16 %v1688
    %v1745 = vunpack.c.l.b16 %v1689
    %v1746 = vunpack.c.l.b16 %v1690
    %v1747 = vunpack.c.l.b16 %v1691
    %v1748 = vunpack.c.l.b16 %v1692
    %v1749 = vunpack.c.l.b16 %v1693
    %v1750 = vunpack.c.l.b16 %v1694
    %v1751 = vunpack.c.l.b16 %v1695
    %v1752 = vunpack.c.l.b16 %v1696
    %v1753 = vunpack.c.l.b16 %v1697
    %v1754 = vunpack.c.l.b16 %v1698
    %v1755 = vunpack.c.l.b16 %v1699
    %v1756 = vunpack.c.l.b16 %v1700
    %v1757 = vunpack.c.l.b16 %v1701
    %v1758 = vunpack.c.l.b16 %v1702
    %v1759 = vunpack.c.l.b16 %v1703
    %v1760 = vpack.c.b16 %v1745, %v1744
    %v1761 = vpack.c.b16 %v1747, %v1746
    %v1762 = vpack.c.b16 %v1749, %v1748
    %v1763 = vpack.c.b16 %v1751, %v1750
    %v1764 = vpack.c.b16 %v1753, %v1752
    %v1765 = vpack.c.b16 %v1755, %v1754
    %v1766 = vpack.c.b16 %v1757, %v1756
    %v1767 = vpack.c.b16 %v1759, %v1758
    %v1792 = vunpack.c.l.b16 %v1704
    %v1793 = vunpack.c.l.b16 %v1705
    %v1794 = vunpack.c.l.b16 %v1706
    %v1795 = vunpack.c.l.b16 %v1707
    %v1796 = vunpack.c.l.b16 %v1708
    %v1797 = vunpack.c.l.b16 %v1709
    %v1798 = vunpack.c.l.b16 %v1710
    %v1799 = vunpack.c.l.b16 %v1711
    %v1800 = vunpack.c.l.b16 %v1712
    %v1801 = vunpack.c.l.b16 %v1713
    %v1802 = vunpack.c.l.b16 %v1714
    %v1803 = vunpack.c.l.b16 %v1715
    %v1804 = vunpack.c.l.b16 %v1716
    %v1805 = vunpack.c.l.b16 %v1717
    %v1806 = vunpack.c.l.b16 %v1718
    %v1807 = vunpack.c.l.b16 %v1719
    %v1808 = vpack.c.b16 %v1793, %v1792
    %v1809 = vpack.c.b16 %v1795, %v1794
    %v1810 = vpack.c.b16 %v1797, %v1796
    %v1811 = vpack.c.b16 %v1799, %v1798
    %v1812 = vpack.c.b16 %v1801, %v1800
    %v1813 = vpack.c.b16 %v1803, %v1802
    %v1814 = vpack.c.b16 %v1805, %v1804
    %v1815 = vpack.c.b16 %v1807, %v1806
    %1824 = vmatprep.subr.bf16.mxu0 0
    %1825 = vmatpush1.bf16.msra.mxu0 %v1815
    %1826 = vmatprep.subr.bf16.mxu0 0
    %1827 = vmatpush1.bf16.msra.mxu0 %v1814
    %1828 = vmatprep.subr.bf16.mxu0 0
    %1829 = vmatpush1.bf16.msra.mxu0 %v1813
    %1830 = vmatprep.subr.bf16.mxu0 0
    %1831 = vmatpush1.bf16.msra.mxu0 %v1812
    %1832 = vmatprep.subr.bf16.mxu0 0
    %1833 = vmatpush1.bf16.msra.mxu0 %v1811
    %1834 = vmatprep.subr.bf16.mxu0 0
    %1835 = vmatpush1.bf16.msra.mxu0 %v1810
    %1836 = vmatprep.subr.bf16.mxu0 0
    %1837 = vmatpush1.bf16.msra.mxu0 %v1809
    %1838 = vmatprep.subr.bf16.mxu0 0
    %1839 = vmatpush1.bf16.msra.mxu0 %v1808
    %1840 = vmatprep.subr.bf16.mxu0 0
    %1841 = vmatpush2.bf16.msra.mxu0 0
    %1842 = vmatprep.subr.bf16.mxu0 0
    %1843 = vmatpush2.bf16.msra.mxu0 0
    %1844 = vmatprep.subr.bf16.mxu0 0
    %1845 = vmatpush2.bf16.msra.mxu0 0
    %1846 = vmatprep.subr.bf16.mxu0 0
    %1847 = vmatpush2.bf16.msra.mxu0 0
    %1848 = vmatprep.subr.bf16.mxu0 0
    %1849 = vmatpush2.bf16.msra.mxu0 0
    %1850 = vmatprep.subr.bf16.mxu0 0
    %1851 = vmatpush2.bf16.msra.mxu0 0
    %1852 = vmatprep.subr.bf16.mxu0 0
    %1853 = vmatpush2.bf16.msra.mxu0 0
    %1854 = vmatprep.subr.bf16.mxu0 0
    %1855 = vmatpush2.bf16.msra.mxu0 0
    %1856 = vmatprep.mubr.bf16.mxu0 0
    %1857 = vmatmul.mubr.bf16.gmra.mxu0 %v1760
    %v1858 = vpop.f32.mrf.mxu0
    %v1859 = vadd.f32 %v1726, %v1858
    %v1860 = vpop.f32.mrf.mxu0
    %v1861 = vpop.f32.mrf.mxu0
    %v1862 = vadd.f32 %v1726, %v1861
    %v1863 = vpop.f32.mrf.mxu0
    %1864 = vmatprep.mubr.bf16.mxu0 0
    %1865 = vmatmul.mubr.bf16.gmra.mxu0 %v1761
    %v1866 = vpop.f32.mrf.mxu0
    %v1867 = vadd.f32 %v1726, %v1866
    %v1868 = vpop.f32.mrf.mxu0
    %v1869 = vpop.f32.mrf.mxu0
    %v1870 = vadd.f32 %v1726, %v1869
    %v1871 = vpop.f32.mrf.mxu0
    %1872 = vmatprep.mubr.bf16.mxu0 0
    %1873 = vmatmul.mubr.bf16.gmra.mxu0 %v1762
    %v1874 = vpop.f32.mrf.mxu0
    %v1875 = vadd.f32 %v1726, %v1874
    %v1876 = vpop.f32.mrf.mxu0
    %v1877 = vpop.f32.mrf.mxu0
    %v1878 = vadd.f32 %v1726, %v1877
    %v1879 = vpop.f32.mrf.mxu0
    %1880 = vmatprep.mubr.bf16.mxu0 0
    %1881 = vmatmul.mubr.bf16.gmra.mxu0 %v1763
    %v1882 = vpop.f32.mrf.mxu0
    %v1883 = vadd.f32 %v1726, %v1882
    %v1884 = vpop.f32.mrf.mxu0
    %v1885 = vpop.f32.mrf.mxu0
    %v1886 = vadd.f32 %v1726, %v1885
    %v1887 = vpop.f32.mrf.mxu0
    %1888 = vmatprep.mubr.bf16.mxu0 0
    %1889 = vmatmul.mubr.bf16.gmra.mxu0 %v1764
    %v1890 = vpop.f32.mrf.mxu0
    %v1891 = vadd.f32 %v1726, %v1890
    %v1892 = vpop.f32.mrf.mxu0
    %v1893 = vpop.f32.mrf.mxu0
    %v1894 = vadd.f32 %v1726, %v1893
    %v1895 = vpop.f32.mrf.mxu0
    %1896 = vmatprep.mubr.bf16.mxu0 0
    %1897 = vmatmul.mubr.bf16.gmra.mxu0 %v1765
    %v1898 = vpop.f32.mrf.mxu0
    %v1899 = vadd.f32 %v1726, %v1898
    %v1900 = vpop.f32.mrf.mxu0
    %v1901 = vpop.f32.mrf.mxu0
    %v1902 = vadd.f32 %v1726, %v1901
    %v1903 = vpop.f32.mrf.mxu0
    %1904 = vmatprep.mubr.bf16.mxu0 0
    %1905 = vmatmul.mubr.bf16.gmra.mxu0 %v1766
    %v1906 = vpop.f32.mrf.mxu0
    %v1907 = vadd.f32 %v1726, %v1906
    %v1908 = vpop.f32.mrf.mxu0
    %v1909 = vpop.f32.mrf.mxu0
    %v1910 = vadd.f32 %v1726, %v1909
    %v1911 = vpop.f32.mrf.mxu0
    %1912 = vmatprep.mubr.bf16.mxu0 0
    %1913 = vmatmul.mubr.bf16.gmra.mxu0 %v1767
    %v1914 = vpop.f32.mrf.mxu0
    %v1915 = vadd.f32 %v1726, %v1914
    %v1916 = vpop.f32.mrf.mxu0
    %v1917 = vpop.f32.mrf.mxu0
    %v1918 = vadd.f32 %v1726, %v1917
    %v1919 = vpop.f32.mrf.mxu0
    %1920 = vdwg.mxu0
    %v1921 = vmax.f32 %v1859, 0.0
    %v1922 = vmax.f32 %v1862, 0.0
    %v1923 = vmax.f32 %v1867, 0.0
    %v1924 = vmax.f32 %v1870, 0.0
    %v1925 = vmax.f32 %v1875, 0.0
    %v1926 = vmax.f32 %v1878, 0.0
    %v1927 = vmax.f32 %v1883, 0.0
    %v1928 = vmax.f32 %v1886, 0.0
    %v1929 = vmax.f32 %v1891, 0.0
    %v1930 = vmax.f32 %v1894, 0.0
    %v1931 = vmax.f32 %v1899, 0.0
    %v1932 = vmax.f32 %v1902, 0.0
    %v1933 = vmax.f32 %v1907, 0.0
    %v1934 = vmax.f32 %v1910, 0.0
    %v1935 = vmax.f32 %v1915, 0.0
    %v1936 = vmax.f32 %v1918, 0.0
    %v1937 = vpack.c.bf16 %v1922, %v1921
    %v1938 = vpack.c.bf16 %v1924, %v1923
    %v1939 = vpack.c.bf16 %v1926, %v1925
    %v1940 = vpack.c.bf16 %v1928, %v1927
    %v1941 = vpack.c.bf16 %v1930, %v1929
    %v1942 = vpack.c.bf16 %v1932, %v1931
    %v1943 = vpack.c.bf16 %v1934, %v1933
    %v1944 = vpack.c.bf16 %v1936, %v1935
    %v1953 = vunpack.c.l.b16 %v1937
    %v1954 = vunpack.c.h.b16 %v1937
    %v1955 = vunpack.c.l.b16 %v1938
    %v1956 = vunpack.c.h.b16 %v1938
    %v1957 = vunpack.c.l.b16 %v1939
    %v1958 = vunpack.c.h.b16 %v1939
    %v1959 = vunpack.c.l.b16 %v1940
    %v1960 = vunpack.c.h.b16 %v1940
    %v1961 = vunpack.c.l.b16 %v1941
    %v1962 = vunpack.c.h.b16 %v1941
    %v1963 = vunpack.c.l.b16 %v1942
    %v1964 = vunpack.c.h.b16 %v1942
    %v1965 = vunpack.c.l.b16 %v1943
    %v1966 = vunpack.c.h.b16 %v1943
    %v1967 = vunpack.c.l.b16 %v1944
    %v1968 = vunpack.c.h.b16 %v1944
    %v1969 = vpack.c.b16 %v1953, %v1953
    %v1970 = vpack.c.b16 %v1954, %v1954
    %v1971 = vpack.c.b16 %v1955, %v1955
    %v1972 = vpack.c.b16 %v1956, %v1956
    %v1973 = vpack.c.b16 %v1957, %v1957
    %v1974 = vpack.c.b16 %v1958, %v1958
    %v1975 = vpack.c.b16 %v1959, %v1959
    %v1976 = vpack.c.b16 %v1960, %v1960
    %v1977 = vpack.c.b16 %v1961, %v1961
    %v1978 = vpack.c.b16 %v1962, %v1962
    %v1979 = vpack.c.b16 %v1963, %v1963
    %v1980 = vpack.c.b16 %v1964, %v1964
    %v1981 = vpack.c.b16 %v1965, %v1965
    %v1982 = vpack.c.b16 %v1966, %v1966
    %v1983 = vpack.c.b16 %v1967, %v1967
    %v1984 = vpack.c.b16 %v1968, %v1968
    %2001 = vst [vmem:[#allocation2] sm:$0xf] %v1969
    %2002 = vst [vmem:[#allocation2 + $0x4] sm:$0xf] %v1970
    %2003 = vst [vmem:[#allocation2 + $0x8] sm:$0xf] %v1971
    %2004 = vst [vmem:[#allocation2 + $0xc] sm:$0xf] %v1972
    %2005 = vst [vmem:[#allocation2 + $0x10] sm:$0xf] %v1973
    %2006 = vst [vmem:[#allocation2 + $0x14] sm:$0xf] %v1974
    %2007 = vst [vmem:[#allocation2 + $0x18] sm:$0xf] %v1975
    %2008 = vst [vmem:[#allocation2 + $0x1c] sm:$0xf] %v1976
    %2009 = vst [vmem:[#allocation2 + $0x20] sm:$0xf] %v1977
    %2010 = vst [vmem:[#allocation2 + $0x24] sm:$0xf] %v1978
    %2011 = vst [vmem:[#allocation2 + $0x28] sm:$0xf] %v1979
    %2012 = vst [vmem:[#allocation2 + $0x2c] sm:$0xf] %v1980
    %2013 = vst [vmem:[#allocation2 + $0x30] sm:$0xf] %v1981
    %2014 = vst [vmem:[#allocation2 + $0x34] sm:$0xf] %v1982
    %2015 = vst [vmem:[#allocation2 + $0x38] sm:$0xf] %v1983
    %2016 = vst [vmem:[#allocation2 + $0x3c] sm:$0xf] %v1984
    %v2017 = vld [vmem:[#allocation2] sm:$0xf]
    %v2018 = vld [vmem:[#allocation2 + $0x4] sm:$0xf]
    %v2019 = vld [vmem:[#allocation2 + $0x8] sm:$0xf]
    %v2020 = vld [vmem:[#allocation2 + $0xc] sm:$0xf]
    %v2021 = vld [vmem:[#allocation2 + $0x10] sm:$0xf]
    %v2022 = vld [vmem:[#allocation2 + $0x14] sm:$0xf]
    %v2023 = vld [vmem:[#allocation2 + $0x18] sm:$0xf]
    %v2024 = vld [vmem:[#allocation2 + $0x1c] sm:$0xf]
    %v2025 = vld [vmem:[#allocation2 + $0x20] sm:$0xf]
    %v2026 = vld [vmem:[#allocation2 + $0x24] sm:$0xf]
    %v2027 = vld [vmem:[#allocation2 + $0x28] sm:$0xf]
    %v2028 = vld [vmem:[#allocation2 + $0x2c] sm:$0xf]
    %v2029 = vld [vmem:[#allocation2 + $0x30] sm:$0xf]
    %v2030 = vld [vmem:[#allocation2 + $0x34] sm:$0xf]
    %v2031 = vld [vmem:[#allocation2 + $0x38] sm:$0xf]
    %v2032 = vld [vmem:[#allocation2 + $0x3c] sm:$0xf]
    %s2033 = scalar_lea.vmem [#allocation11], 192
    %v2034 = vld [vmem:[%s2033] sm:$0xf]
    %v2035 = vld [vmem:[%s2033 + $0x4] sm:$0xf]
    %v2036 = vld [vmem:[%s2033 + $0x8] sm:$0xf]
    %v2037 = vld [vmem:[%s2033 + $0xc] sm:$0xf]
    %v2038 = vld [vmem:[%s2033 + $0x10] sm:$0xf]
    %v2039 = vld [vmem:[%s2033 + $0x14] sm:$0xf]
    %v2040 = vld [vmem:[%s2033 + $0x18] sm:$0xf]
    %v2041 = vld [vmem:[%s2033 + $0x1c] sm:$0xf]
    %v2042 = vld [vmem:[%s2033 + $0x20] sm:$0xf]
    %v2043 = vld [vmem:[%s2033 + $0x24] sm:$0xf]
    %v2044 = vld [vmem:[%s2033 + $0x28] sm:$0xf]
    %v2045 = vld [vmem:[%s2033 + $0x2c] sm:$0xf]
    %v2046 = vld [vmem:[%s2033 + $0x30] sm:$0xf]
    %v2047 = vld [vmem:[%s2033 + $0x34] sm:$0xf]
    %v2048 = vld [vmem:[%s2033 + $0x38] sm:$0xf]
    %v2049 = vld [vmem:[%s2033 + $0x3c] sm:$0xf]
    %v2066 = vunpack.c.l.b16 %v2017
    %v2067 = vunpack.c.l.b16 %v2018
    %v2068 = vunpack.c.l.b16 %v2019
    %v2069 = vunpack.c.l.b16 %v2020
    %v2070 = vunpack.c.l.b16 %v2021
    %v2071 = vunpack.c.l.b16 %v2022
    %v2072 = vunpack.c.l.b16 %v2023
    %v2073 = vunpack.c.l.b16 %v2024
    %v2074 = vunpack.c.l.b16 %v2025
    %v2075 = vunpack.c.l.b16 %v2026
    %v2076 = vunpack.c.l.b16 %v2027
    %v2077 = vunpack.c.l.b16 %v2028
    %v2078 = vunpack.c.l.b16 %v2029
    %v2079 = vunpack.c.l.b16 %v2030
    %v2080 = vunpack.c.l.b16 %v2031
    %v2081 = vunpack.c.l.b16 %v2032
    %v2082 = vpack.c.b16 %v2067, %v2066
    %v2083 = vpack.c.b16 %v2069, %v2068
    %v2084 = vpack.c.b16 %v2071, %v2070
    %v2085 = vpack.c.b16 %v2073, %v2072
    %v2086 = vpack.c.b16 %v2075, %v2074
    %v2087 = vpack.c.b16 %v2077, %v2076
    %v2088 = vpack.c.b16 %v2079, %v2078
    %v2089 = vpack.c.b16 %v2081, %v2080
    %v2114 = vunpack.c.l.b16 %v2034
    %v2115 = vunpack.c.l.b16 %v2035
    %v2116 = vunpack.c.l.b16 %v2036
    %v2117 = vunpack.c.l.b16 %v2037
    %v2118 = vunpack.c.l.b16 %v2038
    %v2119 = vunpack.c.l.b16 %v2039
    %v2120 = vunpack.c.l.b16 %v2040
    %v2121 = vunpack.c.l.b16 %v2041
    %v2122 = vunpack.c.l.b16 %v2042
    %v2123 = vunpack.c.l.b16 %v2043
    %v2124 = vunpack.c.l.b16 %v2044
    %v2125 = vunpack.c.l.b16 %v2045
    %v2126 = vunpack.c.l.b16 %v2046
    %v2127 = vunpack.c.l.b16 %v2047
    %v2128 = vunpack.c.l.b16 %v2048
    %v2129 = vunpack.c.l.b16 %v2049
    %v2130 = vpack.c.b16 %v2115, %v2114
    %v2131 = vpack.c.b16 %v2117, %v2116
    %v2132 = vpack.c.b16 %v2119, %v2118
    %v2133 = vpack.c.b16 %v2121, %v2120
    %v2134 = vpack.c.b16 %v2123, %v2122
    %v2135 = vpack.c.b16 %v2125, %v2124
    %v2136 = vpack.c.b16 %v2127, %v2126
    %v2137 = vpack.c.b16 %v2129, %v2128
    %2146 = vmatprep.subr.bf16.mxu0 0
    %2147 = vmatpush1.bf16.msra.mxu0 %v2137
    %2148 = vmatprep.subr.bf16.mxu0 0
    %2149 = vmatpush1.bf16.msra.mxu0 %v2136
    %2150 = vmatprep.subr.bf16.mxu0 0
    %2151 = vmatpush1.bf16.msra.mxu0 %v2135
    %2152 = vmatprep.subr.bf16.mxu0 0
    %2153 = vmatpush1.bf16.msra.mxu0 %v2134
    %2154 = vmatprep.subr.bf16.mxu0 0
    %2155 = vmatpush1.bf16.msra.mxu0 %v2133
    %2156 = vmatprep.subr.bf16.mxu0 0
    %2157 = vmatpush1.bf16.msra.mxu0 %v2132
    %2158 = vmatprep.subr.bf16.mxu0 0
    %2159 = vmatpush1.bf16.msra.mxu0 %v2131
    %2160 = vmatprep.subr.bf16.mxu0 0
    %2161 = vmatpush1.bf16.msra.mxu0 %v2130
    %2162 = vmatprep.subr.bf16.mxu0 0
    %2163 = vmatpush2.bf16.msra.mxu0 0
    %2164 = vmatprep.subr.bf16.mxu0 0
    %2165 = vmatpush2.bf16.msra.mxu0 0
    %2166 = vmatprep.subr.bf16.mxu0 0
    %2167 = vmatpush2.bf16.msra.mxu0 0
    %2168 = vmatprep.subr.bf16.mxu0 0
    %2169 = vmatpush2.bf16.msra.mxu0 0
    %2170 = vmatprep.subr.bf16.mxu0 0
    %2171 = vmatpush2.bf16.msra.mxu0 0
    %2172 = vmatprep.subr.bf16.mxu0 0
    %2173 = vmatpush2.bf16.msra.mxu0 0
    %2174 = vmatprep.subr.bf16.mxu0 0
    %2175 = vmatpush2.bf16.msra.mxu0 0
    %2176 = vmatprep.subr.bf16.mxu0 0
    %2177 = vmatpush2.bf16.msra.mxu0 0
    %2178 = vmatprep.mubr.bf16.mxu0 0
    %2179 = vmatmul.mubr.bf16.gmra.mxu0 %v2082
    %v2180 = vpop.f32.mrf.mxu0
    %v2181 = vadd.f32 0.0, %v2180
    %v2182 = vpop.f32.mrf.mxu0
    %v2183 = vpop.f32.mrf.mxu0
    %v2184 = vadd.f32 0.0, %v2183
    %v2185 = vpop.f32.mrf.mxu0
    %2186 = vmatprep.mubr.bf16.mxu0 0
    %2187 = vmatmul.mubr.bf16.gmra.mxu0 %v2083
    %v2188 = vpop.f32.mrf.mxu0
    %v2189 = vadd.f32 0.0, %v2188
    %v2190 = vpop.f32.mrf.mxu0
    %v2191 = vpop.f32.mrf.mxu0
    %v2192 = vadd.f32 0.0, %v2191
    %v2193 = vpop.f32.mrf.mxu0
    %2194 = vmatprep.mubr.bf16.mxu0 0
    %2195 = vmatmul.mubr.bf16.gmra.mxu0 %v2084
    %v2196 = vpop.f32.mrf.mxu0
    %v2197 = vadd.f32 0.0, %v2196
    %v2198 = vpop.f32.mrf.mxu0
    %v2199 = vpop.f32.mrf.mxu0
    %v2200 = vadd.f32 0.0, %v2199
    %v2201 = vpop.f32.mrf.mxu0
    %2202 = vmatprep.mubr.bf16.mxu0 0
    %2203 = vmatmul.mubr.bf16.gmra.mxu0 %v2085
    %v2204 = vpop.f32.mrf.mxu0
    %v2205 = vadd.f32 0.0, %v2204
    %v2206 = vpop.f32.mrf.mxu0
    %v2207 = vpop.f32.mrf.mxu0
    %v2208 = vadd.f32 0.0, %v2207
    %v2209 = vpop.f32.mrf.mxu0
    %2210 = vmatprep.mubr.bf16.mxu0 0
    %2211 = vmatmul.mubr.bf16.gmra.mxu0 %v2086
    %v2212 = vpop.f32.mrf.mxu0
    %v2213 = vadd.f32 0.0, %v2212
    %v2214 = vpop.f32.mrf.mxu0
    %v2215 = vpop.f32.mrf.mxu0
    %v2216 = vadd.f32 0.0, %v2215
    %v2217 = vpop.f32.mrf.mxu0
    %2218 = vmatprep.mubr.bf16.mxu0 0
    %2219 = vmatmul.mubr.bf16.gmra.mxu0 %v2087
    %v2220 = vpop.f32.mrf.mxu0
    %v2221 = vadd.f32 0.0, %v2220
    %v2222 = vpop.f32.mrf.mxu0
    %v2223 = vpop.f32.mrf.mxu0
    %v2224 = vadd.f32 0.0, %v2223
    %v2225 = vpop.f32.mrf.mxu0
    %2226 = vmatprep.mubr.bf16.mxu0 0
    %2227 = vmatmul.mubr.bf16.gmra.mxu0 %v2088
    %v2228 = vpop.f32.mrf.mxu0
    %v2229 = vadd.f32 0.0, %v2228
    %v2230 = vpop.f32.mrf.mxu0
    %v2231 = vpop.f32.mrf.mxu0
    %v2232 = vadd.f32 0.0, %v2231
    %v2233 = vpop.f32.mrf.mxu0
    %2234 = vmatprep.mubr.bf16.mxu0 0
    %2235 = vmatmul.mubr.bf16.gmra.mxu0 %v2089
    %v2236 = vpop.f32.mrf.mxu0
    %v2237 = vadd.f32 0.0, %v2236
    %v2238 = vpop.f32.mrf.mxu0
    %v2239 = vpop.f32.mrf.mxu0
    %v2240 = vadd.f32 0.0, %v2239
    %v2241 = vpop.f32.mrf.mxu0
    %2242 = vdwg.mxu0
    %v2243 = vpack.c.bf16 %v2184, %v2181
    %v2244 = vpack.c.bf16 %v2192, %v2189
    %v2245 = vpack.c.bf16 %v2200, %v2197
    %v2246 = vpack.c.bf16 %v2208, %v2205
    %v2247 = vpack.c.bf16 %v2216, %v2213
    %v2248 = vpack.c.bf16 %v2224, %v2221
    %v2249 = vpack.c.bf16 %v2232, %v2229
    %v2250 = vpack.c.bf16 %v2240, %v2237
    %v2259 = vunpack.c.l.b16 %v2243
    %v2260 = vunpack.c.h.b16 %v2243
    %v2261 = vunpack.c.l.b16 %v2244
    %v2262 = vunpack.c.h.b16 %v2244
    %v2263 = vunpack.c.l.b16 %v2245
    %v2264 = vunpack.c.h.b16 %v2245
    %v2265 = vunpack.c.l.b16 %v2246
    %v2266 = vunpack.c.h.b16 %v2246
    %v2267 = vunpack.c.l.b16 %v2247
    %v2268 = vunpack.c.h.b16 %v2247
    %v2269 = vunpack.c.l.b16 %v2248
    %v2270 = vunpack.c.h.b16 %v2248
    %v2271 = vunpack.c.l.b16 %v2249
    %v2272 = vunpack.c.h.b16 %v2249
    %v2273 = vunpack.c.l.b16 %v2250
    %v2274 = vunpack.c.h.b16 %v2250
    %v2275 = vpack.c.b16 %v2259, %v2259
    %v2276 = vpack.c.b16 %v2260, %v2260
    %v2277 = vpack.c.b16 %v2261, %v2261
    %v2278 = vpack.c.b16 %v2262, %v2262
    %v2279 = vpack.c.b16 %v2263, %v2263
    %v2280 = vpack.c.b16 %v2264, %v2264
    %v2281 = vpack.c.b16 %v2265, %v2265
    %v2282 = vpack.c.b16 %v2266, %v2266
    %v2283 = vpack.c.b16 %v2267, %v2267
    %v2284 = vpack.c.b16 %v2268, %v2268
    %v2285 = vpack.c.b16 %v2269, %v2269
    %v2286 = vpack.c.b16 %v2270, %v2270
    %v2287 = vpack.c.b16 %v2271, %v2271
    %v2288 = vpack.c.b16 %v2272, %v2272
    %v2289 = vpack.c.b16 %v2273, %v2273
    %v2290 = vpack.c.b16 %v2274, %v2274
    %2307 = vst [vmem:[#allocation3] sm:$0xf] %v2275
    %2308 = vst [vmem:[#allocation3 + $0x4] sm:$0xf] %v2276
    %2309 = vst [vmem:[#allocation3 + $0x8] sm:$0xf] %v2277
    %2310 = vst [vmem:[#allocation3 + $0xc] sm:$0xf] %v2278
    %2311 = vst [vmem:[#allocation3 + $0x10] sm:$0xf] %v2279
    %2312 = vst [vmem:[#allocation3 + $0x14] sm:$0xf] %v2280
    %2313 = vst [vmem:[#allocation3 + $0x18] sm:$0xf] %v2281
    %2314 = vst [vmem:[#allocation3 + $0x1c] sm:$0xf] %v2282
    %2315 = vst [vmem:[#allocation3 + $0x20] sm:$0xf] %v2283
    %2316 = vst [vmem:[#allocation3 + $0x24] sm:$0xf] %v2284
    %2317 = vst [vmem:[#allocation3 + $0x28] sm:$0xf] %v2285
    %2318 = vst [vmem:[#allocation3 + $0x2c] sm:$0xf] %v2286
    %2319 = vst [vmem:[#allocation3 + $0x30] sm:$0xf] %v2287
    %2320 = vst [vmem:[#allocation3 + $0x34] sm:$0xf] %v2288
    %2321 = vst [vmem:[#allocation3 + $0x38] sm:$0xf] %v2289
    %2322 = vst [vmem:[#allocation3 + $0x3c] sm:$0xf] %v2290
    %v2323 = vld [vmem:[#allocation6] sm:$0xf]
    %v2324 = vld [vmem:[#allocation6 + $0x4] sm:$0xf]
    %v2325 = vld [vmem:[#allocation6 + $0x8] sm:$0xf]
    %v2326 = vld [vmem:[#allocation6 + $0xc] sm:$0xf]
    %v2327 = vld [vmem:[#allocation6 + $0x10] sm:$0xf]
    %v2328 = vld [vmem:[#allocation6 + $0x14] sm:$0xf]
    %v2329 = vld [vmem:[#allocation6 + $0x18] sm:$0xf]
    %v2330 = vld [vmem:[#allocation6 + $0x1c] sm:$0xf]
    %v2331 = vld [vmem:[#allocation6 + $0x20] sm:$0xf]
    %v2332 = vld [vmem:[#allocation6 + $0x24] sm:$0xf]
    %v2333 = vld [vmem:[#allocation6 + $0x28] sm:$0xf]
    %v2334 = vld [vmem:[#allocation6 + $0x2c] sm:$0xf]
    %v2335 = vld [vmem:[#allocation6 + $0x30] sm:$0xf]
    %v2336 = vld [vmem:[#allocation6 + $0x34] sm:$0xf]
    %v2337 = vld [vmem:[#allocation6 + $0x38] sm:$0xf]
    %v2338 = vld [vmem:[#allocation6 + $0x3c] sm:$0xf]
    %v2339 = vld [vmem:[#allocation3] sm:$0xf]
    %v2340 = vld [vmem:[#allocation3 + $0x4] sm:$0xf]
    %v2341 = vld [vmem:[#allocation3 + $0x8] sm:$0xf]
    %v2342 = vld [vmem:[#allocation3 + $0xc] sm:$0xf]
    %v2343 = vld [vmem:[#allocation3 + $0x10] sm:$0xf]
    %v2344 = vld [vmem:[#allocation3 + $0x14] sm:$0xf]
    %v2345 = vld [vmem:[#allocation3 + $0x18] sm:$0xf]
    %v2346 = vld [vmem:[#allocation3 + $0x1c] sm:$0xf]
    %v2347 = vld [vmem:[#allocation3 + $0x20] sm:$0xf]
    %v2348 = vld [vmem:[#allocation3 + $0x24] sm:$0xf]
    %v2349 = vld [vmem:[#allocation3 + $0x28] sm:$0xf]
    %v2350 = vld [vmem:[#allocation3 + $0x2c] sm:$0xf]
    %v2351 = vld [vmem:[#allocation3 + $0x30] sm:$0xf]
    %v2352 = vld [vmem:[#allocation3 + $0x34] sm:$0xf]
    %v2353 = vld [vmem:[#allocation3 + $0x38] sm:$0xf]
    %v2354 = vld [vmem:[#allocation3 + $0x3c] sm:$0xf]
    %s2355 = scalar_lea.vmem %s4, 3
    %v2356 = vld [vmem:[%s2355] sm:$0x1]
    %v2358 = vlaneseq
    %v2359 = vshrl.u32 %v2358, 7
    %v2360 = vsub.s32 0, %v2359
    %v2361 = vrot.slane %v2356, %v2360
    %v2379 = vunpack.c.l.b16 %v2323
    %v2380 = vunpack.c.l.b16 %v2324
    %v2381 = vunpack.c.l.b16 %v2325
    %v2382 = vunpack.c.l.b16 %v2326
    %v2383 = vunpack.c.l.b16 %v2327
    %v2384 = vunpack.c.l.b16 %v2328
    %v2385 = vunpack.c.l.b16 %v2329
    %v2386 = vunpack.c.l.b16 %v2330
    %v2387 = vunpack.c.l.b16 %v2331
    %v2388 = vunpack.c.l.b16 %v2332
    %v2389 = vunpack.c.l.b16 %v2333
    %v2390 = vunpack.c.l.b16 %v2334
    %v2391 = vunpack.c.l.b16 %v2335
    %v2392 = vunpack.c.l.b16 %v2336
    %v2393 = vunpack.c.l.b16 %v2337
    %v2394 = vunpack.c.l.b16 %v2338
    %v2395 = vpack.c.b16 %v2380, %v2379
    %v2396 = vpack.c.b16 %v2382, %v2381
    %v2397 = vpack.c.b16 %v2384, %v2383
    %v2398 = vpack.c.b16 %v2386, %v2385
    %v2399 = vpack.c.b16 %v2388, %v2387
    %v2400 = vpack.c.b16 %v2390, %v2389
    %v2401 = vpack.c.b16 %v2392, %v2391
    %v2402 = vpack.c.b16 %v2394, %v2393
    %v2427 = vunpack.c.l.b16 %v2339
    %v2428 = vunpack.c.l.b16 %v2340
    %v2429 = vunpack.c.l.b16 %v2341
    %v2430 = vunpack.c.l.b16 %v2342
    %v2431 = vunpack.c.l.b16 %v2343
    %v2432 = vunpack.c.l.b16 %v2344
    %v2433 = vunpack.c.l.b16 %v2345
    %v2434 = vunpack.c.l.b16 %v2346
    %v2435 = vunpack.c.l.b16 %v2347
    %v2436 = vunpack.c.l.b16 %v2348
    %v2437 = vunpack.c.l.b16 %v2349
    %v2438 = vunpack.c.l.b16 %v2350
    %v2439 = vunpack.c.l.b16 %v2351
    %v2440 = vunpack.c.l.b16 %v2352
    %v2441 = vunpack.c.l.b16 %v2353
    %v2442 = vunpack.c.l.b16 %v2354
    %v2443 = vpack.c.b16 %v2428, %v2427
    %v2444 = vpack.c.b16 %v2430, %v2429
    %v2445 = vpack.c.b16 %v2432, %v2431
    %v2446 = vpack.c.b16 %v2434, %v2433
    %v2447 = vpack.c.b16 %v2436, %v2435
    %v2448 = vpack.c.b16 %v2438, %v2437
    %v2449 = vpack.c.b16 %v2440, %v2439
    %v2450 = vpack.c.b16 %v2442, %v2441
    %2459 = vmatprep.subr.bf16.mxu0 0
    %2460 = vmatpush1.bf16.msra.mxu0 %v2450
    %2461 = vmatprep.subr.bf16.mxu0 0
    %2462 = vmatpush1.bf16.msra.mxu0 %v2449
    %2463 = vmatprep.subr.bf16.mxu0 0
    %2464 = vmatpush1.bf16.msra.mxu0 %v2448
    %2465 = vmatprep.subr.bf16.mxu0 0
    %2466 = vmatpush1.bf16.msra.mxu0 %v2447
    %2467 = vmatprep.subr.bf16.mxu0 0
    %2468 = vmatpush1.bf16.msra.mxu0 %v2446
    %2469 = vmatprep.subr.bf16.mxu0 0
    %2470 = vmatpush1.bf16.msra.mxu0 %v2445
    %2471 = vmatprep.subr.bf16.mxu0 0
    %2472 = vmatpush1.bf16.msra.mxu0 %v2444
    %2473 = vmatprep.subr.bf16.mxu0 0
    %2474 = vmatpush1.bf16.msra.mxu0 %v2443
    %2475 = vmatprep.subr.bf16.mxu0 0
    %2476 = vmatpush2.bf16.msra.mxu0 0
    %2477 = vmatprep.subr.bf16.mxu0 0
    %2478 = vmatpush2.bf16.msra.mxu0 0
    %2479 = vmatprep.subr.bf16.mxu0 0
    %2480 = vmatpush2.bf16.msra.mxu0 0
    %2481 = vmatprep.subr.bf16.mxu0 0
    %2482 = vmatpush2.bf16.msra.mxu0 0
    %2483 = vmatprep.subr.bf16.mxu0 0
    %2484 = vmatpush2.bf16.msra.mxu0 0
    %2485 = vmatprep.subr.bf16.mxu0 0
    %2486 = vmatpush2.bf16.msra.mxu0 0
    %2487 = vmatprep.subr.bf16.mxu0 0
    %2488 = vmatpush2.bf16.msra.mxu0 0
    %2489 = vmatprep.subr.bf16.mxu0 0
    %2490 = vmatpush2.bf16.msra.mxu0 0
    %2491 = vmatprep.mubr.bf16.mxu0 0
    %2492 = vmatmul.mubr.bf16.gmra.mxu0 %v2395
    %v2493 = vpop.f32.mrf.mxu0
    %v2494 = vadd.f32 %v2361, %v2493
    %v2495 = vpop.f32.mrf.mxu0
    %v2496 = vpop.f32.mrf.mxu0
    %v2497 = vadd.f32 %v2361, %v2496
    %v2498 = vpop.f32.mrf.mxu0
    %2499 = vmatprep.mubr.bf16.mxu0 0
    %2500 = vmatmul.mubr.bf16.gmra.mxu0 %v2396
    %v2501 = vpop.f32.mrf.mxu0
    %v2502 = vadd.f32 %v2361, %v2501
    %v2503 = vpop.f32.mrf.mxu0
    %v2504 = vpop.f32.mrf.mxu0
    %v2505 = vadd.f32 %v2361, %v2504
    %v2506 = vpop.f32.mrf.mxu0
    %2507 = vmatprep.mubr.bf16.mxu0 0
    %2508 = vmatmul.mubr.bf16.gmra.mxu0 %v2397
    %v2509 = vpop.f32.mrf.mxu0
    %v2510 = vadd.f32 %v2361, %v2509
    %v2511 = vpop.f32.mrf.mxu0
    %v2512 = vpop.f32.mrf.mxu0
    %v2513 = vadd.f32 %v2361, %v2512
    %v2514 = vpop.f32.mrf.mxu0
    %2515 = vmatprep.mubr.bf16.mxu0 0
    %2516 = vmatmul.mubr.bf16.gmra.mxu0 %v2398
    %v2517 = vpop.f32.mrf.mxu0
    %v2518 = vadd.f32 %v2361, %v2517
    %v2519 = vpop.f32.mrf.mxu0
    %v2520 = vpop.f32.mrf.mxu0
    %v2521 = vadd.f32 %v2361, %v2520
    %v2522 = vpop.f32.mrf.mxu0
    %2523 = vmatprep.mubr.bf16.mxu0 0
    %2524 = vmatmul.mubr.bf16.gmra.mxu0 %v2399
    %v2525 = vpop.f32.mrf.mxu0
    %v2526 = vadd.f32 %v2361, %v2525
    %v2527 = vpop.f32.mrf.mxu0
    %v2528 = vpop.f32.mrf.mxu0
    %v2529 = vadd.f32 %v2361, %v2528
    %v2530 = vpop.f32.mrf.mxu0
    %2531 = vmatprep.mubr.bf16.mxu0 0
    %2532 = vmatmul.mubr.bf16.gmra.mxu0 %v2400
    %v2533 = vpop.f32.mrf.mxu0
    %v2534 = vadd.f32 %v2361, %v2533
    %v2535 = vpop.f32.mrf.mxu0
    %v2536 = vpop.f32.mrf.mxu0
    %v2537 = vadd.f32 %v2361, %v2536
    %v2538 = vpop.f32.mrf.mxu0
    %2539 = vmatprep.mubr.bf16.mxu0 0
    %2540 = vmatmul.mubr.bf16.gmra.mxu0 %v2401
    %v2541 = vpop.f32.mrf.mxu0
    %v2542 = vadd.f32 %v2361, %v2541
    %v2543 = vpop.f32.mrf.mxu0
    %v2544 = vpop.f32.mrf.mxu0
    %v2545 = vadd.f32 %v2361, %v2544
    %v2546 = vpop.f32.mrf.mxu0
    %2547 = vmatprep.mubr.bf16.mxu0 0
    %2548 = vmatmul.mubr.bf16.gmra.mxu0 %v2402
    %v2549 = vpop.f32.mrf.mxu0
    %v2550 = vadd.f32 %v2361, %v2549
    %v2551 = vpop.f32.mrf.mxu0
    %v2552 = vpop.f32.mrf.mxu0
    %v2553 = vadd.f32 %v2361, %v2552
    %v2554 = vpop.f32.mrf.mxu0
    %2555 = vdwg.mxu0
    %v2556 = vmax.f32 %v2494, 0.0
    %v2557 = vmax.f32 %v2497, 0.0
    %v2558 = vmax.f32 %v2502, 0.0
    %v2559 = vmax.f32 %v2505, 0.0
    %v2560 = vmax.f32 %v2510, 0.0
    %v2561 = vmax.f32 %v2513, 0.0
    %v2562 = vmax.f32 %v2518, 0.0
    %v2563 = vmax.f32 %v2521, 0.0
    %v2564 = vmax.f32 %v2526, 0.0
    %v2565 = vmax.f32 %v2529, 0.0
    %v2566 = vmax.f32 %v2534, 0.0
    %v2567 = vmax.f32 %v2537, 0.0
    %v2568 = vmax.f32 %v2542, 0.0
    %v2569 = vmax.f32 %v2545, 0.0
    %v2570 = vmax.f32 %v2550, 0.0
    %v2571 = vmax.f32 %v2553, 0.0
    %v2572 = vpack.c.bf16 %v2557, %v2556
    %v2573 = vpack.c.bf16 %v2559, %v2558
    %v2574 = vpack.c.bf16 %v2561, %v2560
    %v2575 = vpack.c.bf16 %v2563, %v2562
    %v2576 = vpack.c.bf16 %v2565, %v2564
    %v2577 = vpack.c.bf16 %v2567, %v2566
    %v2578 = vpack.c.bf16 %v2569, %v2568
    %v2579 = vpack.c.bf16 %v2571, %v2570
    %v2588 = vunpack.c.l.b16 %v2572
    %v2589 = vunpack.c.h.b16 %v2572
    %v2590 = vunpack.c.l.b16 %v2573
    %v2591 = vunpack.c.h.b16 %v2573
    %v2592 = vunpack.c.l.b16 %v2574
    %v2593 = vunpack.c.h.b16 %v2574
    %v2594 = vunpack.c.l.b16 %v2575
    %v2595 = vunpack.c.h.b16 %v2575
    %v2596 = vunpack.c.l.b16 %v2576
    %v2597 = vunpack.c.h.b16 %v2576
    %v2598 = vunpack.c.l.b16 %v2577
    %v2599 = vunpack.c.h.b16 %v2577
    %v2600 = vunpack.c.l.b16 %v2578
    %v2601 = vunpack.c.h.b16 %v2578
    %v2602 = vunpack.c.l.b16 %v2579
    %v2603 = vunpack.c.h.b16 %v2579
    %v2604 = vpack.c.b16 %v2588, %v2588
    %v2605 = vpack.c.b16 %v2589, %v2589
    %v2606 = vpack.c.b16 %v2590, %v2590
    %v2607 = vpack.c.b16 %v2591, %v2591
    %v2608 = vpack.c.b16 %v2592, %v2592
    %v2609 = vpack.c.b16 %v2593, %v2593
    %v2610 = vpack.c.b16 %v2594, %v2594
    %v2611 = vpack.c.b16 %v2595, %v2595
    %v2612 = vpack.c.b16 %v2596, %v2596
    %v2613 = vpack.c.b16 %v2597, %v2597
    %v2614 = vpack.c.b16 %v2598, %v2598
    %v2615 = vpack.c.b16 %v2599, %v2599
    %v2616 = vpack.c.b16 %v2600, %v2600
    %v2617 = vpack.c.b16 %v2601, %v2601
    %v2618 = vpack.c.b16 %v2602, %v2602
    %v2619 = vpack.c.b16 %v2603, %v2603
    %2636 = vst [vmem:[#allocation2] sm:$0xf] %v2604
    %2637 = vst [vmem:[#allocation2 + $0x4] sm:$0xf] %v2605
    %2638 = vst [vmem:[#allocation2 + $0x8] sm:$0xf] %v2606
    %2639 = vst [vmem:[#allocation2 + $0xc] sm:$0xf] %v2607
    %2640 = vst [vmem:[#allocation2 + $0x10] sm:$0xf] %v2608
    %2641 = vst [vmem:[#allocation2 + $0x14] sm:$0xf] %v2609
    %2642 = vst [vmem:[#allocation2 + $0x18] sm:$0xf] %v2610
    %2643 = vst [vmem:[#allocation2 + $0x1c] sm:$0xf] %v2611
    %2644 = vst [vmem:[#allocation2 + $0x20] sm:$0xf] %v2612
    %2645 = vst [vmem:[#allocation2 + $0x24] sm:$0xf] %v2613
    %2646 = vst [vmem:[#allocation2 + $0x28] sm:$0xf] %v2614
    %2647 = vst [vmem:[#allocation2 + $0x2c] sm:$0xf] %v2615
    %2648 = vst [vmem:[#allocation2 + $0x30] sm:$0xf] %v2616
    %2649 = vst [vmem:[#allocation2 + $0x34] sm:$0xf] %v2617
    %2650 = vst [vmem:[#allocation2 + $0x38] sm:$0xf] %v2618
    %2651 = vst [vmem:[#allocation2 + $0x3c] sm:$0xf] %v2619
    %v2652 = vld [vmem:[#allocation2] sm:$0xf]
    %v2653 = vld [vmem:[#allocation2 + $0x4] sm:$0xf]
    %v2654 = vld [vmem:[#allocation2 + $0x8] sm:$0xf]
    %v2655 = vld [vmem:[#allocation2 + $0xc] sm:$0xf]
    %v2656 = vld [vmem:[#allocation2 + $0x10] sm:$0xf]
    %v2657 = vld [vmem:[#allocation2 + $0x14] sm:$0xf]
    %v2658 = vld [vmem:[#allocation2 + $0x18] sm:$0xf]
    %v2659 = vld [vmem:[#allocation2 + $0x1c] sm:$0xf]
    %v2660 = vld [vmem:[#allocation2 + $0x20] sm:$0xf]
    %v2661 = vld [vmem:[#allocation2 + $0x24] sm:$0xf]
    %v2662 = vld [vmem:[#allocation2 + $0x28] sm:$0xf]
    %v2663 = vld [vmem:[#allocation2 + $0x2c] sm:$0xf]
    %v2664 = vld [vmem:[#allocation2 + $0x30] sm:$0xf]
    %v2665 = vld [vmem:[#allocation2 + $0x34] sm:$0xf]
    %v2666 = vld [vmem:[#allocation2 + $0x38] sm:$0xf]
    %v2667 = vld [vmem:[#allocation2 + $0x3c] sm:$0xf]
    %s2668 = scalar_lea.vmem [#allocation11], 256
    %v2669 = vld [vmem:[%s2668] sm:$0xf]
    %v2670 = vld [vmem:[%s2668 + $0x4] sm:$0xf]
    %v2671 = vld [vmem:[%s2668 + $0x8] sm:$0xf]
    %v2672 = vld [vmem:[%s2668 + $0xc] sm:$0xf]
    %v2673 = vld [vmem:[%s2668 + $0x10] sm:$0xf]
    %v2674 = vld [vmem:[%s2668 + $0x14] sm:$0xf]
    %v2675 = vld [vmem:[%s2668 + $0x18] sm:$0xf]
    %v2676 = vld [vmem:[%s2668 + $0x1c] sm:$0xf]
    %v2677 = vld [vmem:[%s2668 + $0x20] sm:$0xf]
    %v2678 = vld [vmem:[%s2668 + $0x24] sm:$0xf]
    %v2679 = vld [vmem:[%s2668 + $0x28] sm:$0xf]
    %v2680 = vld [vmem:[%s2668 + $0x2c] sm:$0xf]
    %v2681 = vld [vmem:[%s2668 + $0x30] sm:$0xf]
    %v2682 = vld [vmem:[%s2668 + $0x34] sm:$0xf]
    %v2683 = vld [vmem:[%s2668 + $0x38] sm:$0xf]
    %v2684 = vld [vmem:[%s2668 + $0x3c] sm:$0xf]
    %v2701 = vunpack.c.l.b16 %v2652
    %v2702 = vunpack.c.l.b16 %v2653
    %v2703 = vunpack.c.l.b16 %v2654
    %v2704 = vunpack.c.l.b16 %v2655
    %v2705 = vunpack.c.l.b16 %v2656
    %v2706 = vunpack.c.l.b16 %v2657
    %v2707 = vunpack.c.l.b16 %v2658
    %v2708 = vunpack.c.l.b16 %v2659
    %v2709 = vunpack.c.l.b16 %v2660
    %v2710 = vunpack.c.l.b16 %v2661
    %v2711 = vunpack.c.l.b16 %v2662
    %v2712 = vunpack.c.l.b16 %v2663
    %v2713 = vunpack.c.l.b16 %v2664
    %v2714 = vunpack.c.l.b16 %v2665
    %v2715 = vunpack.c.l.b16 %v2666
    %v2716 = vunpack.c.l.b16 %v2667
    %v2717 = vpack.c.b16 %v2702, %v2701
    %v2718 = vpack.c.b16 %v2704, %v2703
    %v2719 = vpack.c.b16 %v2706, %v2705
    %v2720 = vpack.c.b16 %v2708, %v2707
    %v2721 = vpack.c.b16 %v2710, %v2709
    %v2722 = vpack.c.b16 %v2712, %v2711
    %v2723 = vpack.c.b16 %v2714, %v2713
    %v2724 = vpack.c.b16 %v2716, %v2715
    %v2749 = vunpack.c.l.b16 %v2669
    %v2750 = vunpack.c.l.b16 %v2670
    %v2751 = vunpack.c.l.b16 %v2671
    %v2752 = vunpack.c.l.b16 %v2672
    %v2753 = vunpack.c.l.b16 %v2673
    %v2754 = vunpack.c.l.b16 %v2674
    %v2755 = vunpack.c.l.b16 %v2675
    %v2756 = vunpack.c.l.b16 %v2676
    %v2757 = vunpack.c.l.b16 %v2677
    %v2758 = vunpack.c.l.b16 %v2678
    %v2759 = vunpack.c.l.b16 %v2679
    %v2760 = vunpack.c.l.b16 %v2680
    %v2761 = vunpack.c.l.b16 %v2681
    %v2762 = vunpack.c.l.b16 %v2682
    %v2763 = vunpack.c.l.b16 %v2683
    %v2764 = vunpack.c.l.b16 %v2684
    %v2765 = vpack.c.b16 %v2750, %v2749
    %v2766 = vpack.c.b16 %v2752, %v2751
    %v2767 = vpack.c.b16 %v2754, %v2753
    %v2768 = vpack.c.b16 %v2756, %v2755
    %v2769 = vpack.c.b16 %v2758, %v2757
    %v2770 = vpack.c.b16 %v2760, %v2759
    %v2771 = vpack.c.b16 %v2762, %v2761
    %v2772 = vpack.c.b16 %v2764, %v2763
    %2781 = vmatprep.subr.bf16.mxu0 0
    %2782 = vmatpush1.bf16.msra.mxu0 %v2772
    %2783 = vmatprep.subr.bf16.mxu0 0
    %2784 = vmatpush1.bf16.msra.mxu0 %v2771
    %2785 = vmatprep.subr.bf16.mxu0 0
    %2786 = vmatpush1.bf16.msra.mxu0 %v2770
    %2787 = vmatprep.subr.bf16.mxu0 0
    %2788 = vmatpush1.bf16.msra.mxu0 %v2769
    %2789 = vmatprep.subr.bf16.mxu0 0
    %2790 = vmatpush1.bf16.msra.mxu0 %v2768
    %2791 = vmatprep.subr.bf16.mxu0 0
    %2792 = vmatpush1.bf16.msra.mxu0 %v2767
    %2793 = vmatprep.subr.bf16.mxu0 0
    %2794 = vmatpush1.bf16.msra.mxu0 %v2766
    %2795 = vmatprep.subr.bf16.mxu0 0
    %2796 = vmatpush1.bf16.msra.mxu0 %v2765
    %2797 = vmatprep.subr.bf16.mxu0 0
    %2798 = vmatpush2.bf16.msra.mxu0 0
    %2799 = vmatprep.subr.bf16.mxu0 0
    %2800 = vmatpush2.bf16.msra.mxu0 0
    %2801 = vmatprep.subr.bf16.mxu0 0
    %2802 = vmatpush2.bf16.msra.mxu0 0
    %2803 = vmatprep.subr.bf16.mxu0 0
    %2804 = vmatpush2.bf16.msra.mxu0 0
    %2805 = vmatprep.subr.bf16.mxu0 0
    %2806 = vmatpush2.bf16.msra.mxu0 0
    %2807 = vmatprep.subr.bf16.mxu0 0
    %2808 = vmatpush2.bf16.msra.mxu0 0
    %2809 = vmatprep.subr.bf16.mxu0 0
    %2810 = vmatpush2.bf16.msra.mxu0 0
    %2811 = vmatprep.subr.bf16.mxu0 0
    %2812 = vmatpush2.bf16.msra.mxu0 0
    %2813 = vmatprep.mubr.bf16.mxu0 0
    %2814 = vmatmul.mubr.bf16.gmra.mxu0 %v2717
    %v2815 = vpop.f32.mrf.mxu0
    %v2816 = vadd.f32 0.0, %v2815
    %v2817 = vpop.f32.mrf.mxu0
    %v2818 = vpop.f32.mrf.mxu0
    %v2819 = vadd.f32 0.0, %v2818
    %v2820 = vpop.f32.mrf.mxu0
    %2821 = vmatprep.mubr.bf16.mxu0 0
    %2822 = vmatmul.mubr.bf16.gmra.mxu0 %v2718
    %v2823 = vpop.f32.mrf.mxu0
    %v2824 = vadd.f32 0.0, %v2823
    %v2825 = vpop.f32.mrf.mxu0
    %v2826 = vpop.f32.mrf.mxu0
    %v2827 = vadd.f32 0.0, %v2826
    %v2828 = vpop.f32.mrf.mxu0
    %2829 = vmatprep.mubr.bf16.mxu0 0
    %2830 = vmatmul.mubr.bf16.gmra.mxu0 %v2719
    %v2831 = vpop.f32.mrf.mxu0
    %v2832 = vadd.f32 0.0, %v2831
    %v2833 = vpop.f32.mrf.mxu0
    %v2834 = vpop.f32.mrf.mxu0
    %v2835 = vadd.f32 0.0, %v2834
    %v2836 = vpop.f32.mrf.mxu0
    %2837 = vmatprep.mubr.bf16.mxu0 0
    %2838 = vmatmul.mubr.bf16.gmra.mxu0 %v2720
    %v2839 = vpop.f32.mrf.mxu0
    %v2840 = vadd.f32 0.0, %v2839
    %v2841 = vpop.f32.mrf.mxu0
    %v2842 = vpop.f32.mrf.mxu0
    %v2843 = vadd.f32 0.0, %v2842
    %v2844 = vpop.f32.mrf.mxu0
    %2845 = vmatprep.mubr.bf16.mxu0 0
    %2846 = vmatmul.mubr.bf16.gmra.mxu0 %v2721
    %v2847 = vpop.f32.mrf.mxu0
    %v2848 = vadd.f32 0.0, %v2847
    %v2849 = vpop.f32.mrf.mxu0
    %v2850 = vpop.f32.mrf.mxu0
    %v2851 = vadd.f32 0.0, %v2850
    %v2852 = vpop.f32.mrf.mxu0
    %2853 = vmatprep.mubr.bf16.mxu0 0
    %2854 = vmatmul.mubr.bf16.gmra.mxu0 %v2722
    %v2855 = vpop.f32.mrf.mxu0
    %v2856 = vadd.f32 0.0, %v2855
    %v2857 = vpop.f32.mrf.mxu0
    %v2858 = vpop.f32.mrf.mxu0
    %v2859 = vadd.f32 0.0, %v2858
    %v2860 = vpop.f32.mrf.mxu0
    %2861 = vmatprep.mubr.bf16.mxu0 0
    %2862 = vmatmul.mubr.bf16.gmra.mxu0 %v2723
    %v2863 = vpop.f32.mrf.mxu0
    %v2864 = vadd.f32 0.0, %v2863
    %v2865 = vpop.f32.mrf.mxu0
    %v2866 = vpop.f32.mrf.mxu0
    %v2867 = vadd.f32 0.0, %v2866
    %v2868 = vpop.f32.mrf.mxu0
    %2869 = vmatprep.mubr.bf16.mxu0 0
    %2870 = vmatmul.mubr.bf16.gmra.mxu0 %v2724
    %v2871 = vpop.f32.mrf.mxu0
    %v2872 = vadd.f32 0.0, %v2871
    %v2873 = vpop.f32.mrf.mxu0
    %v2874 = vpop.f32.mrf.mxu0
    %v2875 = vadd.f32 0.0, %v2874
    %v2876 = vpop.f32.mrf.mxu0
    %2877 = vdwg.mxu0
    %v2878 = vpack.c.bf16 %v2819, %v2816
    %v2879 = vpack.c.bf16 %v2827, %v2824
    %v2880 = vpack.c.bf16 %v2835, %v2832
    %v2881 = vpack.c.bf16 %v2843, %v2840
    %v2882 = vpack.c.bf16 %v2851, %v2848
    %v2883 = vpack.c.bf16 %v2859, %v2856
    %v2884 = vpack.c.bf16 %v2867, %v2864
    %v2885 = vpack.c.bf16 %v2875, %v2872
    %v2894 = vunpack.c.l.b16 %v2878
    %v2895 = vunpack.c.h.b16 %v2878
    %v2896 = vunpack.c.l.b16 %v2879
    %v2897 = vunpack.c.h.b16 %v2879
    %v2898 = vunpack.c.l.b16 %v2880
    %v2899 = vunpack.c.h.b16 %v2880
    %v2900 = vunpack.c.l.b16 %v2881
    %v2901 = vunpack.c.h.b16 %v2881
    %v2902 = vunpack.c.l.b16 %v2882
    %v2903 = vunpack.c.h.b16 %v2882
    %v2904 = vunpack.c.l.b16 %v2883
    %v2905 = vunpack.c.h.b16 %v2883
    %v2906 = vunpack.c.l.b16 %v2884
    %v2907 = vunpack.c.h.b16 %v2884
    %v2908 = vunpack.c.l.b16 %v2885
    %v2909 = vunpack.c.h.b16 %v2885
    %v2910 = vpack.c.b16 %v2894, %v2894
    %v2911 = vpack.c.b16 %v2895, %v2895
    %v2912 = vpack.c.b16 %v2896, %v2896
    %v2913 = vpack.c.b16 %v2897, %v2897
    %v2914 = vpack.c.b16 %v2898, %v2898
    %v2915 = vpack.c.b16 %v2899, %v2899
    %v2916 = vpack.c.b16 %v2900, %v2900
    %v2917 = vpack.c.b16 %v2901, %v2901
    %v2918 = vpack.c.b16 %v2902, %v2902
    %v2919 = vpack.c.b16 %v2903, %v2903
    %v2920 = vpack.c.b16 %v2904, %v2904
    %v2921 = vpack.c.b16 %v2905, %v2905
    %v2922 = vpack.c.b16 %v2906, %v2906
    %v2923 = vpack.c.b16 %v2907, %v2907
    %v2924 = vpack.c.b16 %v2908, %v2908
    %v2925 = vpack.c.b16 %v2909, %v2909
    %2942 = vst [vmem:[#allocation3] sm:$0xf] %v2910
    %2943 = vst [vmem:[#allocation3 + $0x4] sm:$0xf] %v2911
    %2944 = vst [vmem:[#allocation3 + $0x8] sm:$0xf] %v2912
    %2945 = vst [vmem:[#allocation3 + $0xc] sm:$0xf] %v2913
    %2946 = vst [vmem:[#allocation3 + $0x10] sm:$0xf] %v2914
    %2947 = vst [vmem:[#allocation3 + $0x14] sm:$0xf] %v2915
    %2948 = vst [vmem:[#allocation3 + $0x18] sm:$0xf] %v2916
    %2949 = vst [vmem:[#allocation3 + $0x1c] sm:$0xf] %v2917
    %2950 = vst [vmem:[#allocation3 + $0x20] sm:$0xf] %v2918
    %2951 = vst [vmem:[#allocation3 + $0x24] sm:$0xf] %v2919
    %2952 = vst [vmem:[#allocation3 + $0x28] sm:$0xf] %v2920
    %2953 = vst [vmem:[#allocation3 + $0x2c] sm:$0xf] %v2921
    %2954 = vst [vmem:[#allocation3 + $0x30] sm:$0xf] %v2922
    %2955 = vst [vmem:[#allocation3 + $0x34] sm:$0xf] %v2923
    %2956 = vst [vmem:[#allocation3 + $0x38] sm:$0xf] %v2924
    %2957 = vst [vmem:[#allocation3 + $0x3c] sm:$0xf] %v2925
    %v2958 = vld [vmem:[#allocation6] sm:$0xf]
    %v2959 = vld [vmem:[#allocation6 + $0x4] sm:$0xf]
    %v2960 = vld [vmem:[#allocation6 + $0x8] sm:$0xf]
    %v2961 = vld [vmem:[#allocation6 + $0xc] sm:$0xf]
    %v2962 = vld [vmem:[#allocation6 + $0x10] sm:$0xf]
    %v2963 = vld [vmem:[#allocation6 + $0x14] sm:$0xf]
    %v2964 = vld [vmem:[#allocation6 + $0x18] sm:$0xf]
    %v2965 = vld [vmem:[#allocation6 + $0x1c] sm:$0xf]
    %v2966 = vld [vmem:[#allocation6 + $0x20] sm:$0xf]
    %v2967 = vld [vmem:[#allocation6 + $0x24] sm:$0xf]
    %v2968 = vld [vmem:[#allocation6 + $0x28] sm:$0xf]
    %v2969 = vld [vmem:[#allocation6 + $0x2c] sm:$0xf]
    %v2970 = vld [vmem:[#allocation6 + $0x30] sm:$0xf]
    %v2971 = vld [vmem:[#allocation6 + $0x34] sm:$0xf]
    %v2972 = vld [vmem:[#allocation6 + $0x38] sm:$0xf]
    %v2973 = vld [vmem:[#allocation6 + $0x3c] sm:$0xf]
    %v2974 = vld [vmem:[#allocation3] sm:$0xf]
    %v2975 = vld [vmem:[#allocation3 + $0x4] sm:$0xf]
    %v2976 = vld [vmem:[#allocation3 + $0x8] sm:$0xf]
    %v2977 = vld [vmem:[#allocation3 + $0xc] sm:$0xf]
    %v2978 = vld [vmem:[#allocation3 + $0x10] sm:$0xf]
    %v2979 = vld [vmem:[#allocation3 + $0x14] sm:$0xf]
    %v2980 = vld [vmem:[#allocation3 + $0x18] sm:$0xf]
    %v2981 = vld [vmem:[#allocation3 + $0x1c] sm:$0xf]
    %v2982 = vld [vmem:[#allocation3 + $0x20] sm:$0xf]
    %v2983 = vld [vmem:[#allocation3 + $0x24] sm:$0xf]
    %v2984 = vld [vmem:[#allocation3 + $0x28] sm:$0xf]
    %v2985 = vld [vmem:[#allocation3 + $0x2c] sm:$0xf]
    %v2986 = vld [vmem:[#allocation3 + $0x30] sm:$0xf]
    %v2987 = vld [vmem:[#allocation3 + $0x34] sm:$0xf]
    %v2988 = vld [vmem:[#allocation3 + $0x38] sm:$0xf]
    %v2989 = vld [vmem:[#allocation3 + $0x3c] sm:$0xf]
    %s2990 = scalar_lea.vmem %s4, 4
    %v2991 = vld [vmem:[%s2990] sm:$0x1]
    %v2993 = vlaneseq
    %v2994 = vshrl.u32 %v2993, 7
    %v2995 = vsub.s32 0, %v2994
    %v2996 = vrot.slane %v2991, %v2995
    %v3014 = vunpack.c.l.b16 %v2958
    %v3015 = vunpack.c.l.b16 %v2959
    %v3016 = vunpack.c.l.b16 %v2960
    %v3017 = vunpack.c.l.b16 %v2961
    %v3018 = vunpack.c.l.b16 %v2962
    %v3019 = vunpack.c.l.b16 %v2963
    %v3020 = vunpack.c.l.b16 %v2964
    %v3021 = vunpack.c.l.b16 %v2965
    %v3022 = vunpack.c.l.b16 %v2966
    %v3023 = vunpack.c.l.b16 %v2967
    %v3024 = vunpack.c.l.b16 %v2968
    %v3025 = vunpack.c.l.b16 %v2969
    %v3026 = vunpack.c.l.b16 %v2970
    %v3027 = vunpack.c.l.b16 %v2971
    %v3028 = vunpack.c.l.b16 %v2972
    %v3029 = vunpack.c.l.b16 %v2973
    %v3030 = vpack.c.b16 %v3015, %v3014
    %v3031 = vpack.c.b16 %v3017, %v3016
    %v3032 = vpack.c.b16 %v3019, %v3018
    %v3033 = vpack.c.b16 %v3021, %v3020
    %v3034 = vpack.c.b16 %v3023, %v3022
    %v3035 = vpack.c.b16 %v3025, %v3024
    %v3036 = vpack.c.b16 %v3027, %v3026
    %v3037 = vpack.c.b16 %v3029, %v3028
    %v3062 = vunpack.c.l.b16 %v2974
    %v3063 = vunpack.c.l.b16 %v2975
    %v3064 = vunpack.c.l.b16 %v2976
    %v3065 = vunpack.c.l.b16 %v2977
    %v3066 = vunpack.c.l.b16 %v2978
    %v3067 = vunpack.c.l.b16 %v2979
    %v3068 = vunpack.c.l.b16 %v2980
    %v3069 = vunpack.c.l.b16 %v2981
    %v3070 = vunpack.c.l.b16 %v2982
    %v3071 = vunpack.c.l.b16 %v2983
    %v3072 = vunpack.c.l.b16 %v2984
    %v3073 = vunpack.c.l.b16 %v2985
    %v3074 = vunpack.c.l.b16 %v2986
    %v3075 = vunpack.c.l.b16 %v2987
    %v3076 = vunpack.c.l.b16 %v2988
    %v3077 = vunpack.c.l.b16 %v2989
    %v3078 = vpack.c.b16 %v3063, %v3062
    %v3079 = vpack.c.b16 %v3065, %v3064
    %v3080 = vpack.c.b16 %v3067, %v3066
    %v3081 = vpack.c.b16 %v3069, %v3068
    %v3082 = vpack.c.b16 %v3071, %v3070
    %v3083 = vpack.c.b16 %v3073, %v3072
    %v3084 = vpack.c.b16 %v3075, %v3074
    %v3085 = vpack.c.b16 %v3077, %v3076
    %3094 = vmatprep.subr.bf16.mxu0 0
    %3095 = vmatpush1.bf16.msra.mxu0 %v3085
    %3096 = vmatprep.subr.bf16.mxu0 0
    %3097 = vmatpush1.bf16.msra.mxu0 %v3084
    %3098 = vmatprep.subr.bf16.mxu0 0
    %3099 = vmatpush1.bf16.msra.mxu0 %v3083
    %3100 = vmatprep.subr.bf16.mxu0 0
    %3101 = vmatpush1.bf16.msra.mxu0 %v3082
    %3102 = vmatprep.subr.bf16.mxu0 0
    %3103 = vmatpush1.bf16.msra.mxu0 %v3081
    %3104 = vmatprep.subr.bf16.mxu0 0
    %3105 = vmatpush1.bf16.msra.mxu0 %v3080
    %3106 = vmatprep.subr.bf16.mxu0 0
    %3107 = vmatpush1.bf16.msra.mxu0 %v3079
    %3108 = vmatprep.subr.bf16.mxu0 0
    %3109 = vmatpush1.bf16.msra.mxu0 %v3078
    %3110 = vmatprep.subr.bf16.mxu0 0
    %3111 = vmatpush2.bf16.msra.mxu0 0
    %3112 = vmatprep.subr.bf16.mxu0 0
    %3113 = vmatpush2.bf16.msra.mxu0 0
    %3114 = vmatprep.subr.bf16.mxu0 0
    %3115 = vmatpush2.bf16.msra.mxu0 0
    %3116 = vmatprep.subr.bf16.mxu0 0
    %3117 = vmatpush2.bf16.msra.mxu0 0
    %3118 = vmatprep.subr.bf16.mxu0 0
    %3119 = vmatpush2.bf16.msra.mxu0 0
    %3120 = vmatprep.subr.bf16.mxu0 0
    %3121 = vmatpush2.bf16.msra.mxu0 0
    %3122 = vmatprep.subr.bf16.mxu0 0
    %3123 = vmatpush2.bf16.msra.mxu0 0
    %3124 = vmatprep.subr.bf16.mxu0 0
    %3125 = vmatpush2.bf16.msra.mxu0 0
    %3126 = vmatprep.mubr.bf16.mxu0 0
    %3127 = vmatmul.mubr.bf16.gmra.mxu0 %v3030
    %v3128 = vpop.f32.mrf.mxu0
    %v3129 = vadd.f32 %v2996, %v3128
    %v3130 = vpop.f32.mrf.mxu0
    %v3131 = vpop.f32.mrf.mxu0
    %v3132 = vadd.f32 %v2996, %v3131
    %v3133 = vpop.f32.mrf.mxu0
    %3134 = vmatprep.mubr.bf16.mxu0 0
    %3135 = vmatmul.mubr.bf16.gmra.mxu0 %v3031
    %v3136 = vpop.f32.mrf.mxu0
    %v3137 = vadd.f32 %v2996, %v3136
    %v3138 = vpop.f32.mrf.mxu0
    %v3139 = vpop.f32.mrf.mxu0
    %v3140 = vadd.f32 %v2996, %v3139
    %v3141 = vpop.f32.mrf.mxu0
    %3142 = vmatprep.mubr.bf16.mxu0 0
    %3143 = vmatmul.mubr.bf16.gmra.mxu0 %v3032
    %v3144 = vpop.f32.mrf.mxu0
    %v3145 = vadd.f32 %v2996, %v3144
    %v3146 = vpop.f32.mrf.mxu0
    %v3147 = vpop.f32.mrf.mxu0
    %v3148 = vadd.f32 %v2996, %v3147
    %v3149 = vpop.f32.mrf.mxu0
    %3150 = vmatprep.mubr.bf16.mxu0 0
    %3151 = vmatmul.mubr.bf16.gmra.mxu0 %v3033
    %v3152 = vpop.f32.mrf.mxu0
    %v3153 = vadd.f32 %v2996, %v3152
    %v3154 = vpop.f32.mrf.mxu0
    %v3155 = vpop.f32.mrf.mxu0
    %v3156 = vadd.f32 %v2996, %v3155
    %v3157 = vpop.f32.mrf.mxu0
    %3158 = vmatprep.mubr.bf16.mxu0 0
    %3159 = vmatmul.mubr.bf16.gmra.mxu0 %v3034
    %v3160 = vpop.f32.mrf.mxu0
    %v3161 = vadd.f32 %v2996, %v3160
    %v3162 = vpop.f32.mrf.mxu0
    %v3163 = vpop.f32.mrf.mxu0
    %v3164 = vadd.f32 %v2996, %v3163
    %v3165 = vpop.f32.mrf.mxu0
    %3166 = vmatprep.mubr.bf16.mxu0 0
    %3167 = vmatmul.mubr.bf16.gmra.mxu0 %v3035
    %v3168 = vpop.f32.mrf.mxu0
    %v3169 = vadd.f32 %v2996, %v3168
    %v3170 = vpop.f32.mrf.mxu0
    %v3171 = vpop.f32.mrf.mxu0
    %v3172 = vadd.f32 %v2996, %v3171
    %v3173 = vpop.f32.mrf.mxu0
    %3174 = vmatprep.mubr.bf16.mxu0 0
    %3175 = vmatmul.mubr.bf16.gmra.mxu0 %v3036
    %v3176 = vpop.f32.mrf.mxu0
    %v3177 = vadd.f32 %v2996, %v3176
    %v3178 = vpop.f32.mrf.mxu0
    %v3179 = vpop.f32.mrf.mxu0
    %v3180 = vadd.f32 %v2996, %v3179
    %v3181 = vpop.f32.mrf.mxu0
    %3182 = vmatprep.mubr.bf16.mxu0 0
    %3183 = vmatmul.mubr.bf16.gmra.mxu0 %v3037
    %v3184 = vpop.f32.mrf.mxu0
    %v3185 = vadd.f32 %v2996, %v3184
    %v3186 = vpop.f32.mrf.mxu0
    %v3187 = vpop.f32.mrf.mxu0
    %v3188 = vadd.f32 %v2996, %v3187
    %v3189 = vpop.f32.mrf.mxu0
    %3190 = vdwg.mxu0
    %v3191 = vmax.f32 %v3129, 0.0
    %v3192 = vmax.f32 %v3132, 0.0
    %v3193 = vmax.f32 %v3137, 0.0
    %v3194 = vmax.f32 %v3140, 0.0
    %v3195 = vmax.f32 %v3145, 0.0
    %v3196 = vmax.f32 %v3148, 0.0
    %v3197 = vmax.f32 %v3153, 0.0
    %v3198 = vmax.f32 %v3156, 0.0
    %v3199 = vmax.f32 %v3161, 0.0
    %v3200 = vmax.f32 %v3164, 0.0
    %v3201 = vmax.f32 %v3169, 0.0
    %v3202 = vmax.f32 %v3172, 0.0
    %v3203 = vmax.f32 %v3177, 0.0
    %v3204 = vmax.f32 %v3180, 0.0
    %v3205 = vmax.f32 %v3185, 0.0
    %v3206 = vmax.f32 %v3188, 0.0
    %v3207 = vpack.c.bf16 %v3192, %v3191
    %v3208 = vpack.c.bf16 %v3194, %v3193
    %v3209 = vpack.c.bf16 %v3196, %v3195
    %v3210 = vpack.c.bf16 %v3198, %v3197
    %v3211 = vpack.c.bf16 %v3200, %v3199
    %v3212 = vpack.c.bf16 %v3202, %v3201
    %v3213 = vpack.c.bf16 %v3204, %v3203
    %v3214 = vpack.c.bf16 %v3206, %v3205
    %v3223 = vunpack.c.l.b16 %v3207
    %v3224 = vunpack.c.h.b16 %v3207
    %v3225 = vunpack.c.l.b16 %v3208
    %v3226 = vunpack.c.h.b16 %v3208
    %v3227 = vunpack.c.l.b16 %v3209
    %v3228 = vunpack.c.h.b16 %v3209
    %v3229 = vunpack.c.l.b16 %v3210
    %v3230 = vunpack.c.h.b16 %v3210
    %v3231 = vunpack.c.l.b16 %v3211
    %v3232 = vunpack.c.h.b16 %v3211
    %v3233 = vunpack.c.l.b16 %v3212
    %v3234 = vunpack.c.h.b16 %v3212
    %v3235 = vunpack.c.l.b16 %v3213
    %v3236 = vunpack.c.h.b16 %v3213
    %v3237 = vunpack.c.l.b16 %v3214
    %v3238 = vunpack.c.h.b16 %v3214
    %v3239 = vpack.c.b16 %v3223, %v3223
    %v3240 = vpack.c.b16 %v3224, %v3224
    %v3241 = vpack.c.b16 %v3225, %v3225
    %v3242 = vpack.c.b16 %v3226, %v3226
    %v3243 = vpack.c.b16 %v3227, %v3227
    %v3244 = vpack.c.b16 %v3228, %v3228
    %v3245 = vpack.c.b16 %v3229, %v3229
    %v3246 = vpack.c.b16 %v3230, %v3230
    %v3247 = vpack.c.b16 %v3231, %v3231
    %v3248 = vpack.c.b16 %v3232, %v3232
    %v3249 = vpack.c.b16 %v3233, %v3233
    %v3250 = vpack.c.b16 %v3234, %v3234
    %v3251 = vpack.c.b16 %v3235, %v3235
    %v3252 = vpack.c.b16 %v3236, %v3236
    %v3253 = vpack.c.b16 %v3237, %v3237
    %v3254 = vpack.c.b16 %v3238, %v3238
    %3271 = vst [vmem:[#allocation2] sm:$0xf] %v3239
    %3272 = vst [vmem:[#allocation2 + $0x4] sm:$0xf] %v3240
    %3273 = vst [vmem:[#allocation2 + $0x8] sm:$0xf] %v3241
    %3274 = vst [vmem:[#allocation2 + $0xc] sm:$0xf] %v3242
    %3275 = vst [vmem:[#allocation2 + $0x10] sm:$0xf] %v3243
    %3276 = vst [vmem:[#allocation2 + $0x14] sm:$0xf] %v3244
    %3277 = vst [vmem:[#allocation2 + $0x18] sm:$0xf] %v3245
    %3278 = vst [vmem:[#allocation2 + $0x1c] sm:$0xf] %v3246
    %3279 = vst [vmem:[#allocation2 + $0x20] sm:$0xf] %v3247
    %3280 = vst [vmem:[#allocation2 + $0x24] sm:$0xf] %v3248
    %3281 = vst [vmem:[#allocation2 + $0x28] sm:$0xf] %v3249
    %3282 = vst [vmem:[#allocation2 + $0x2c] sm:$0xf] %v3250
    %3283 = vst [vmem:[#allocation2 + $0x30] sm:$0xf] %v3251
    %3284 = vst [vmem:[#allocation2 + $0x34] sm:$0xf] %v3252
    %3285 = vst [vmem:[#allocation2 + $0x38] sm:$0xf] %v3253
    %3286 = vst [vmem:[#allocation2 + $0x3c] sm:$0xf] %v3254
    %v3287 = vld [vmem:[#allocation2] sm:$0xf]
    %v3288 = vld [vmem:[#allocation2 + $0x4] sm:$0xf]
    %v3289 = vld [vmem:[#allocation2 + $0x8] sm:$0xf]
    %v3290 = vld [vmem:[#allocation2 + $0xc] sm:$0xf]
    %v3291 = vld [vmem:[#allocation2 + $0x10] sm:$0xf]
    %v3292 = vld [vmem:[#allocation2 + $0x14] sm:$0xf]
    %v3293 = vld [vmem:[#allocation2 + $0x18] sm:$0xf]
    %v3294 = vld [vmem:[#allocation2 + $0x1c] sm:$0xf]
    %v3295 = vld [vmem:[#allocation2 + $0x20] sm:$0xf]
    %v3296 = vld [vmem:[#allocation2 + $0x24] sm:$0xf]
    %v3297 = vld [vmem:[#allocation2 + $0x28] sm:$0xf]
    %v3298 = vld [vmem:[#allocation2 + $0x2c] sm:$0xf]
    %v3299 = vld [vmem:[#allocation2 + $0x30] sm:$0xf]
    %v3300 = vld [vmem:[#allocation2 + $0x34] sm:$0xf]
    %v3301 = vld [vmem:[#allocation2 + $0x38] sm:$0xf]
    %v3302 = vld [vmem:[#allocation2 + $0x3c] sm:$0xf]
    %s3303 = scalar_lea.vmem [#allocation11], 320
    %v3304 = vld [vmem:[%s3303] sm:$0xf]
    %v3305 = vld [vmem:[%s3303 + $0x4] sm:$0xf]
    %v3306 = vld [vmem:[%s3303 + $0x8] sm:$0xf]
    %v3307 = vld [vmem:[%s3303 + $0xc] sm:$0xf]
    %v3308 = vld [vmem:[%s3303 + $0x10] sm:$0xf]
    %v3309 = vld [vmem:[%s3303 + $0x14] sm:$0xf]
    %v3310 = vld [vmem:[%s3303 + $0x18] sm:$0xf]
    %v3311 = vld [vmem:[%s3303 + $0x1c] sm:$0xf]
    %v3312 = vld [vmem:[%s3303 + $0x20] sm:$0xf]
    %v3313 = vld [vmem:[%s3303 + $0x24] sm:$0xf]
    %v3314 = vld [vmem:[%s3303 + $0x28] sm:$0xf]
    %v3315 = vld [vmem:[%s3303 + $0x2c] sm:$0xf]
    %v3316 = vld [vmem:[%s3303 + $0x30] sm:$0xf]
    %v3317 = vld [vmem:[%s3303 + $0x34] sm:$0xf]
    %v3318 = vld [vmem:[%s3303 + $0x38] sm:$0xf]
    %v3319 = vld [vmem:[%s3303 + $0x3c] sm:$0xf]
    %v3336 = vunpack.c.l.b16 %v3287
    %v3337 = vunpack.c.l.b16 %v3288
    %v3338 = vunpack.c.l.b16 %v3289
    %v3339 = vunpack.c.l.b16 %v3290
    %v3340 = vunpack.c.l.b16 %v3291
    %v3341 = vunpack.c.l.b16 %v3292
    %v3342 = vunpack.c.l.b16 %v3293
    %v3343 = vunpack.c.l.b16 %v3294
    %v3344 = vunpack.c.l.b16 %v3295
    %v3345 = vunpack.c.l.b16 %v3296
    %v3346 = vunpack.c.l.b16 %v3297
    %v3347 = vunpack.c.l.b16 %v3298
    %v3348 = vunpack.c.l.b16 %v3299
    %v3349 = vunpack.c.l.b16 %v3300
    %v3350 = vunpack.c.l.b16 %v3301
    %v3351 = vunpack.c.l.b16 %v3302
    %v3352 = vpack.c.b16 %v3337, %v3336
    %v3353 = vpack.c.b16 %v3339, %v3338
    %v3354 = vpack.c.b16 %v3341, %v3340
    %v3355 = vpack.c.b16 %v3343, %v3342
    %v3356 = vpack.c.b16 %v3345, %v3344
    %v3357 = vpack.c.b16 %v3347, %v3346
    %v3358 = vpack.c.b16 %v3349, %v3348
    %v3359 = vpack.c.b16 %v3351, %v3350
    %v3384 = vunpack.c.l.b16 %v3304
    %v3385 = vunpack.c.l.b16 %v3305
    %v3386 = vunpack.c.l.b16 %v3306
    %v3387 = vunpack.c.l.b16 %v3307
    %v3388 = vunpack.c.l.b16 %v3308
    %v3389 = vunpack.c.l.b16 %v3309
    %v3390 = vunpack.c.l.b16 %v3310
    %v3391 = vunpack.c.l.b16 %v3311
    %v3392 = vunpack.c.l.b16 %v3312
    %v3393 = vunpack.c.l.b16 %v3313
    %v3394 = vunpack.c.l.b16 %v3314
    %v3395 = vunpack.c.l.b16 %v3315
    %v3396 = vunpack.c.l.b16 %v3316
    %v3397 = vunpack.c.l.b16 %v3317
    %v3398 = vunpack.c.l.b16 %v3318
    %v3399 = vunpack.c.l.b16 %v3319
    %v3400 = vpack.c.b16 %v3385, %v3384
    %v3401 = vpack.c.b16 %v3387, %v3386
    %v3402 = vpack.c.b16 %v3389, %v3388
    %v3403 = vpack.c.b16 %v3391, %v3390
    %v3404 = vpack.c.b16 %v3393, %v3392
    %v3405 = vpack.c.b16 %v3395, %v3394
    %v3406 = vpack.c.b16 %v3397, %v3396
    %v3407 = vpack.c.b16 %v3399, %v3398
    %3416 = vmatprep.subr.bf16.mxu0 0
    %3417 = vmatpush1.bf16.msra.mxu0 %v3407
    %3418 = vmatprep.subr.bf16.mxu0 0
    %3419 = vmatpush1.bf16.msra.mxu0 %v3406
    %3420 = vmatprep.subr.bf16.mxu0 0
    %3421 = vmatpush1.bf16.msra.mxu0 %v3405
    %3422 = vmatprep.subr.bf16.mxu0 0
    %3423 = vmatpush1.bf16.msra.mxu0 %v3404
    %3424 = vmatprep.subr.bf16.mxu0 0
    %3425 = vmatpush1.bf16.msra.mxu0 %v3403
    %3426 = vmatprep.subr.bf16.mxu0 0
    %3427 = vmatpush1.bf16.msra.mxu0 %v3402
    %3428 = vmatprep.subr.bf16.mxu0 0
    %3429 = vmatpush1.bf16.msra.mxu0 %v3401
    %3430 = vmatprep.subr.bf16.mxu0 0
    %3431 = vmatpush1.bf16.msra.mxu0 %v3400
    %3432 = vmatprep.subr.bf16.mxu0 0
    %3433 = vmatpush2.bf16.msra.mxu0 0
    %3434 = vmatprep.subr.bf16.mxu0 0
    %3435 = vmatpush2.bf16.msra.mxu0 0
    %3436 = vmatprep.subr.bf16.mxu0 0
    %3437 = vmatpush2.bf16.msra.mxu0 0
    %3438 = vmatprep.subr.bf16.mxu0 0
    %3439 = vmatpush2.bf16.msra.mxu0 0
    %3440 = vmatprep.subr.bf16.mxu0 0
    %3441 = vmatpush2.bf16.msra.mxu0 0
    %3442 = vmatprep.subr.bf16.mxu0 0
    %3443 = vmatpush2.bf16.msra.mxu0 0
    %3444 = vmatprep.subr.bf16.mxu0 0
    %3445 = vmatpush2.bf16.msra.mxu0 0
    %3446 = vmatprep.subr.bf16.mxu0 0
    %3447 = vmatpush2.bf16.msra.mxu0 0
    %3448 = vmatprep.mubr.bf16.mxu0 0
    %3449 = vmatmul.mubr.bf16.gmra.mxu0 %v3352
    %v3450 = vpop.f32.mrf.mxu0
    %v3451 = vadd.f32 0.0, %v3450
    %v3452 = vpop.f32.mrf.mxu0
    %v3453 = vpop.f32.mrf.mxu0
    %v3454 = vadd.f32 0.0, %v3453
    %v3455 = vpop.f32.mrf.mxu0
    %3456 = vmatprep.mubr.bf16.mxu0 0
    %3457 = vmatmul.mubr.bf16.gmra.mxu0 %v3353
    %v3458 = vpop.f32.mrf.mxu0
    %v3459 = vadd.f32 0.0, %v3458
    %v3460 = vpop.f32.mrf.mxu0
    %v3461 = vpop.f32.mrf.mxu0
    %v3462 = vadd.f32 0.0, %v3461
    %v3463 = vpop.f32.mrf.mxu0
    %3464 = vmatprep.mubr.bf16.mxu0 0
    %3465 = vmatmul.mubr.bf16.gmra.mxu0 %v3354
    %v3466 = vpop.f32.mrf.mxu0
    %v3467 = vadd.f32 0.0, %v3466
    %v3468 = vpop.f32.mrf.mxu0
    %v3469 = vpop.f32.mrf.mxu0
    %v3470 = vadd.f32 0.0, %v3469
    %v3471 = vpop.f32.mrf.mxu0
    %3472 = vmatprep.mubr.bf16.mxu0 0
    %3473 = vmatmul.mubr.bf16.gmra.mxu0 %v3355
    %v3474 = vpop.f32.mrf.mxu0
    %v3475 = vadd.f32 0.0, %v3474
    %v3476 = vpop.f32.mrf.mxu0
    %v3477 = vpop.f32.mrf.mxu0
    %v3478 = vadd.f32 0.0, %v3477
    %v3479 = vpop.f32.mrf.mxu0
    %3480 = vmatprep.mubr.bf16.mxu0 0
    %3481 = vmatmul.mubr.bf16.gmra.mxu0 %v3356
    %v3482 = vpop.f32.mrf.mxu0
    %v3483 = vadd.f32 0.0, %v3482
    %v3484 = vpop.f32.mrf.mxu0
    %v3485 = vpop.f32.mrf.mxu0
    %v3486 = vadd.f32 0.0, %v3485
    %v3487 = vpop.f32.mrf.mxu0
    %3488 = vmatprep.mubr.bf16.mxu0 0
    %3489 = vmatmul.mubr.bf16.gmra.mxu0 %v3357
    %v3490 = vpop.f32.mrf.mxu0
    %v3491 = vadd.f32 0.0, %v3490
    %v3492 = vpop.f32.mrf.mxu0
    %v3493 = vpop.f32.mrf.mxu0
    %v3494 = vadd.f32 0.0, %v3493
    %v3495 = vpop.f32.mrf.mxu0
    %3496 = vmatprep.mubr.bf16.mxu0 0
    %3497 = vmatmul.mubr.bf16.gmra.mxu0 %v3358
    %v3498 = vpop.f32.mrf.mxu0
    %v3499 = vadd.f32 0.0, %v3498
    %v3500 = vpop.f32.mrf.mxu0
    %v3501 = vpop.f32.mrf.mxu0
    %v3502 = vadd.f32 0.0, %v3501
    %v3503 = vpop.f32.mrf.mxu0
    %3504 = vmatprep.mubr.bf16.mxu0 0
    %3505 = vmatmul.mubr.bf16.gmra.mxu0 %v3359
    %v3506 = vpop.f32.mrf.mxu0
    %v3507 = vadd.f32 0.0, %v3506
    %v3508 = vpop.f32.mrf.mxu0
    %v3509 = vpop.f32.mrf.mxu0
    %v3510 = vadd.f32 0.0, %v3509
    %v3511 = vpop.f32.mrf.mxu0
    %3512 = vdwg.mxu0
    %v3513 = vpack.c.bf16 %v3454, %v3451
    %v3514 = vpack.c.bf16 %v3462, %v3459
    %v3515 = vpack.c.bf16 %v3470, %v3467
    %v3516 = vpack.c.bf16 %v3478, %v3475
    %v3517 = vpack.c.bf16 %v3486, %v3483
    %v3518 = vpack.c.bf16 %v3494, %v3491
    %v3519 = vpack.c.bf16 %v3502, %v3499
    %v3520 = vpack.c.bf16 %v3510, %v3507
    %v3529 = vunpack.c.l.b16 %v3513
    %v3530 = vunpack.c.h.b16 %v3513
    %v3531 = vunpack.c.l.b16 %v3514
    %v3532 = vunpack.c.h.b16 %v3514
    %v3533 = vunpack.c.l.b16 %v3515
    %v3534 = vunpack.c.h.b16 %v3515
    %v3535 = vunpack.c.l.b16 %v3516
    %v3536 = vunpack.c.h.b16 %v3516
    %v3537 = vunpack.c.l.b16 %v3517
    %v3538 = vunpack.c.h.b16 %v3517
    %v3539 = vunpack.c.l.b16 %v3518
    %v3540 = vunpack.c.h.b16 %v3518
    %v3541 = vunpack.c.l.b16 %v3519
    %v3542 = vunpack.c.h.b16 %v3519
    %v3543 = vunpack.c.l.b16 %v3520
    %v3544 = vunpack.c.h.b16 %v3520
    %v3545 = vpack.c.b16 %v3529, %v3529
    %v3546 = vpack.c.b16 %v3530, %v3530
    %v3547 = vpack.c.b16 %v3531, %v3531
    %v3548 = vpack.c.b16 %v3532, %v3532
    %v3549 = vpack.c.b16 %v3533, %v3533
    %v3550 = vpack.c.b16 %v3534, %v3534
    %v3551 = vpack.c.b16 %v3535, %v3535
    %v3552 = vpack.c.b16 %v3536, %v3536
    %v3553 = vpack.c.b16 %v3537, %v3537
    %v3554 = vpack.c.b16 %v3538, %v3538
    %v3555 = vpack.c.b16 %v3539, %v3539
    %v3556 = vpack.c.b16 %v3540, %v3540
    %v3557 = vpack.c.b16 %v3541, %v3541
    %v3558 = vpack.c.b16 %v3542, %v3542
    %v3559 = vpack.c.b16 %v3543, %v3543
    %v3560 = vpack.c.b16 %v3544, %v3544
    %3577 = vst [vmem:[#allocation3] sm:$0xf] %v3545
    %3578 = vst [vmem:[#allocation3 + $0x4] sm:$0xf] %v3546
    %3579 = vst [vmem:[#allocation3 + $0x8] sm:$0xf] %v3547
    %3580 = vst [vmem:[#allocation3 + $0xc] sm:$0xf] %v3548
    %3581 = vst [vmem:[#allocation3 + $0x10] sm:$0xf] %v3549
    %3582 = vst [vmem:[#allocation3 + $0x14] sm:$0xf] %v3550
    %3583 = vst [vmem:[#allocation3 + $0x18] sm:$0xf] %v3551
    %3584 = vst [vmem:[#allocation3 + $0x1c] sm:$0xf] %v3552
    %3585 = vst [vmem:[#allocation3 + $0x20] sm:$0xf] %v3553
    %3586 = vst [vmem:[#allocation3 + $0x24] sm:$0xf] %v3554
    %3587 = vst [vmem:[#allocation3 + $0x28] sm:$0xf] %v3555
    %3588 = vst [vmem:[#allocation3 + $0x2c] sm:$0xf] %v3556
    %3589 = vst [vmem:[#allocation3 + $0x30] sm:$0xf] %v3557
    %3590 = vst [vmem:[#allocation3 + $0x34] sm:$0xf] %v3558
    %3591 = vst [vmem:[#allocation3 + $0x38] sm:$0xf] %v3559
    %3592 = vst [vmem:[#allocation3 + $0x3c] sm:$0xf] %v3560
    %v3593 = vld [vmem:[#allocation6] sm:$0xf]
    %v3594 = vld [vmem:[#allocation6 + $0x4] sm:$0xf]
    %v3595 = vld [vmem:[#allocation6 + $0x8] sm:$0xf]
    %v3596 = vld [vmem:[#allocation6 + $0xc] sm:$0xf]
    %v3597 = vld [vmem:[#allocation6 + $0x10] sm:$0xf]
    %v3598 = vld [vmem:[#allocation6 + $0x14] sm:$0xf]
    %v3599 = vld [vmem:[#allocation6 + $0x18] sm:$0xf]
    %v3600 = vld [vmem:[#allocation6 + $0x1c] sm:$0xf]
    %v3601 = vld [vmem:[#allocation6 + $0x20] sm:$0xf]
    %v3602 = vld [vmem:[#allocation6 + $0x24] sm:$0xf]
    %v3603 = vld [vmem:[#allocation6 + $0x28] sm:$0xf]
    %v3604 = vld [vmem:[#allocation6 + $0x2c] sm:$0xf]
    %v3605 = vld [vmem:[#allocation6 + $0x30] sm:$0xf]
    %v3606 = vld [vmem:[#allocation6 + $0x34] sm:$0xf]
    %v3607 = vld [vmem:[#allocation6 + $0x38] sm:$0xf]
    %v3608 = vld [vmem:[#allocation6 + $0x3c] sm:$0xf]
    %v3609 = vld [vmem:[#allocation3] sm:$0xf]
    %v3610 = vld [vmem:[#allocation3 + $0x4] sm:$0xf]
    %v3611 = vld [vmem:[#allocation3 + $0x8] sm:$0xf]
    %v3612 = vld [vmem:[#allocation3 + $0xc] sm:$0xf]
    %v3613 = vld [vmem:[#allocation3 + $0x10] sm:$0xf]
    %v3614 = vld [vmem:[#allocation3 + $0x14] sm:$0xf]
    %v3615 = vld [vmem:[#allocation3 + $0x18] sm:$0xf]
    %v3616 = vld [vmem:[#allocation3 + $0x1c] sm:$0xf]
    %v3617 = vld [vmem:[#allocation3 + $0x20] sm:$0xf]
    %v3618 = vld [vmem:[#allocation3 + $0x24] sm:$0xf]
    %v3619 = vld [vmem:[#allocation3 + $0x28] sm:$0xf]
    %v3620 = vld [vmem:[#allocation3 + $0x2c] sm:$0xf]
    %v3621 = vld [vmem:[#allocation3 + $0x30] sm:$0xf]
    %v3622 = vld [vmem:[#allocation3 + $0x34] sm:$0xf]
    %v3623 = vld [vmem:[#allocation3 + $0x38] sm:$0xf]
    %v3624 = vld [vmem:[#allocation3 + $0x3c] sm:$0xf]
    %s3625 = scalar_lea.vmem %s4, 5
    %v3626 = vld [vmem:[%s3625] sm:$0x1]
    %v3628 = vlaneseq
    %v3629 = vshrl.u32 %v3628, 7
    %v3630 = vsub.s32 0, %v3629
    %v3631 = vrot.slane %v3626, %v3630
    %v3649 = vunpack.c.l.b16 %v3593
    %v3650 = vunpack.c.l.b16 %v3594
    %v3651 = vunpack.c.l.b16 %v3595
    %v3652 = vunpack.c.l.b16 %v3596
    %v3653 = vunpack.c.l.b16 %v3597
    %v3654 = vunpack.c.l.b16 %v3598
    %v3655 = vunpack.c.l.b16 %v3599
    %v3656 = vunpack.c.l.b16 %v3600
    %v3657 = vunpack.c.l.b16 %v3601
    %v3658 = vunpack.c.l.b16 %v3602
    %v3659 = vunpack.c.l.b16 %v3603
    %v3660 = vunpack.c.l.b16 %v3604
    %v3661 = vunpack.c.l.b16 %v3605
    %v3662 = vunpack.c.l.b16 %v3606
    %v3663 = vunpack.c.l.b16 %v3607
    %v3664 = vunpack.c.l.b16 %v3608
    %v3665 = vpack.c.b16 %v3650, %v3649
    %v3666 = vpack.c.b16 %v3652, %v3651
    %v3667 = vpack.c.b16 %v3654, %v3653
    %v3668 = vpack.c.b16 %v3656, %v3655
    %v3669 = vpack.c.b16 %v3658, %v3657
    %v3670 = vpack.c.b16 %v3660, %v3659
    %v3671 = vpack.c.b16 %v3662, %v3661
    %v3672 = vpack.c.b16 %v3664, %v3663
    %v3697 = vunpack.c.l.b16 %v3609
    %v3698 = vunpack.c.l.b16 %v3610
    %v3699 = vunpack.c.l.b16 %v3611
    %v3700 = vunpack.c.l.b16 %v3612
    %v3701 = vunpack.c.l.b16 %v3613
    %v3702 = vunpack.c.l.b16 %v3614
    %v3703 = vunpack.c.l.b16 %v3615
    %v3704 = vunpack.c.l.b16 %v3616
    %v3705 = vunpack.c.l.b16 %v3617
    %v3706 = vunpack.c.l.b16 %v3618
    %v3707 = vunpack.c.l.b16 %v3619
    %v3708 = vunpack.c.l.b16 %v3620
    %v3709 = vunpack.c.l.b16 %v3621
    %v3710 = vunpack.c.l.b16 %v3622
    %v3711 = vunpack.c.l.b16 %v3623
    %v3712 = vunpack.c.l.b16 %v3624
    %v3713 = vpack.c.b16 %v3698, %v3697
    %v3714 = vpack.c.b16 %v3700, %v3699
    %v3715 = vpack.c.b16 %v3702, %v3701
    %v3716 = vpack.c.b16 %v3704, %v3703
    %v3717 = vpack.c.b16 %v3706, %v3705
    %v3718 = vpack.c.b16 %v3708, %v3707
    %v3719 = vpack.c.b16 %v3710, %v3709
    %v3720 = vpack.c.b16 %v3712, %v3711
    %3729 = vmatprep.subr.bf16.mxu0 0
    %3730 = vmatpush1.bf16.msra.mxu0 %v3720
    %3731 = vmatprep.subr.bf16.mxu0 0
    %3732 = vmatpush1.bf16.msra.mxu0 %v3719
    %3733 = vmatprep.subr.bf16.mxu0 0
    %3734 = vmatpush1.bf16.msra.mxu0 %v3718
    %3735 = vmatprep.subr.bf16.mxu0 0
    %3736 = vmatpush1.bf16.msra.mxu0 %v3717
    %3737 = vmatprep.subr.bf16.mxu0 0
    %3738 = vmatpush1.bf16.msra.mxu0 %v3716
    %3739 = vmatprep.subr.bf16.mxu0 0
    %3740 = vmatpush1.bf16.msra.mxu0 %v3715
    %3741 = vmatprep.subr.bf16.mxu0 0
    %3742 = vmatpush1.bf16.msra.mxu0 %v3714
    %3743 = vmatprep.subr.bf16.mxu0 0
    %3744 = vmatpush1.bf16.msra.mxu0 %v3713
    %3745 = vmatprep.subr.bf16.mxu0 0
    %3746 = vmatpush2.bf16.msra.mxu0 0
    %3747 = vmatprep.subr.bf16.mxu0 0
    %3748 = vmatpush2.bf16.msra.mxu0 0
    %3749 = vmatprep.subr.bf16.mxu0 0
    %3750 = vmatpush2.bf16.msra.mxu0 0
    %3751 = vmatprep.subr.bf16.mxu0 0
    %3752 = vmatpush2.bf16.msra.mxu0 0
    %3753 = vmatprep.subr.bf16.mxu0 0
    %3754 = vmatpush2.bf16.msra.mxu0 0
    %3755 = vmatprep.subr.bf16.mxu0 0
    %3756 = vmatpush2.bf16.msra.mxu0 0
    %3757 = vmatprep.subr.bf16.mxu0 0
    %3758 = vmatpush2.bf16.msra.mxu0 0
    %3759 = vmatprep.subr.bf16.mxu0 0
    %3760 = vmatpush2.bf16.msra.mxu0 0
    %3761 = vmatprep.mubr.bf16.mxu0 0
    %3762 = vmatmul.mubr.bf16.gmra.mxu0 %v3665
    %v3763 = vpop.f32.mrf.mxu0
    %v3764 = vadd.f32 %v3631, %v3763
    %v3765 = vpop.f32.mrf.mxu0
    %v3766 = vpop.f32.mrf.mxu0
    %v3767 = vadd.f32 %v3631, %v3766
    %v3768 = vpop.f32.mrf.mxu0
    %3769 = vmatprep.mubr.bf16.mxu0 0
    %3770 = vmatmul.mubr.bf16.gmra.mxu0 %v3666
    %v3771 = vpop.f32.mrf.mxu0
    %v3772 = vadd.f32 %v3631, %v3771
    %v3773 = vpop.f32.mrf.mxu0
    %v3774 = vpop.f32.mrf.mxu0
    %v3775 = vadd.f32 %v3631, %v3774
    %v3776 = vpop.f32.mrf.mxu0
    %3777 = vmatprep.mubr.bf16.mxu0 0
    %3778 = vmatmul.mubr.bf16.gmra.mxu0 %v3667
    %v3779 = vpop.f32.mrf.mxu0
    %v3780 = vadd.f32 %v3631, %v3779
    %v3781 = vpop.f32.mrf.mxu0
    %v3782 = vpop.f32.mrf.mxu0
    %v3783 = vadd.f32 %v3631, %v3782
    %v3784 = vpop.f32.mrf.mxu0
    %3785 = vmatprep.mubr.bf16.mxu0 0
    %3786 = vmatmul.mubr.bf16.gmra.mxu0 %v3668
    %v3787 = vpop.f32.mrf.mxu0
    %v3788 = vadd.f32 %v3631, %v3787
    %v3789 = vpop.f32.mrf.mxu0
    %v3790 = vpop.f32.mrf.mxu0
    %v3791 = vadd.f32 %v3631, %v3790
    %v3792 = vpop.f32.mrf.mxu0
    %3793 = vmatprep.mubr.bf16.mxu0 0
    %3794 = vmatmul.mubr.bf16.gmra.mxu0 %v3669
    %v3795 = vpop.f32.mrf.mxu0
    %v3796 = vadd.f32 %v3631, %v3795
    %v3797 = vpop.f32.mrf.mxu0
    %v3798 = vpop.f32.mrf.mxu0
    %v3799 = vadd.f32 %v3631, %v3798
    %v3800 = vpop.f32.mrf.mxu0
    %3801 = vmatprep.mubr.bf16.mxu0 0
    %3802 = vmatmul.mubr.bf16.gmra.mxu0 %v3670
    %v3803 = vpop.f32.mrf.mxu0
    %v3804 = vadd.f32 %v3631, %v3803
    %v3805 = vpop.f32.mrf.mxu0
    %v3806 = vpop.f32.mrf.mxu0
    %v3807 = vadd.f32 %v3631, %v3806
    %v3808 = vpop.f32.mrf.mxu0
    %3809 = vmatprep.mubr.bf16.mxu0 0
    %3810 = vmatmul.mubr.bf16.gmra.mxu0 %v3671
    %v3811 = vpop.f32.mrf.mxu0
    %v3812 = vadd.f32 %v3631, %v3811
    %v3813 = vpop.f32.mrf.mxu0
    %v3814 = vpop.f32.mrf.mxu0
    %v3815 = vadd.f32 %v3631, %v3814
    %v3816 = vpop.f32.mrf.mxu0
    %3817 = vmatprep.mubr.bf16.mxu0 0
    %3818 = vmatmul.mubr.bf16.gmra.mxu0 %v3672
    %v3819 = vpop.f32.mrf.mxu0
    %v3820 = vadd.f32 %v3631, %v3819
    %v3821 = vpop.f32.mrf.mxu0
    %v3822 = vpop.f32.mrf.mxu0
    %v3823 = vadd.f32 %v3631, %v3822
    %v3824 = vpop.f32.mrf.mxu0
    %3825 = vdwg.mxu0
    %s3826 = sld [smem:[#allocation5]]
    %v3827 = vlaneseq
    %v3828 = vshrl.u32 %v3827, 7
    %v3829 = vadd.s32 %v3828, 8
    %v3830 = vadd.s32 %v3828, 16
    %v3831 = vadd.s32 %v3828, 24
    %v3832 = vadd.s32 %v3828, 32
    %v3833 = vadd.s32 %v3828, 40
    %v3834 = vadd.s32 %v3828, 48
    %v3835 = vadd.s32 %v3828, 56
    %v3836 = vadd.s32 %v3828, 64
    %v3837 = vadd.s32 %v3828, 72
    %v3838 = vadd.s32 %v3828, 80
    %v3839 = vadd.s32 %v3828, 88
    %v3840 = vadd.s32 %v3828, 96
    %v3841 = vadd.s32 %v3828, 104
    %v3842 = vadd.s32 %v3828, 112
    %v3843 = vadd.s32 %v3828, 120
    %v3844 = vstv %s3826
    %vm3845 = vcmp.lt.s32.totalorder %v3828, %v3844
    %vm3846 = vcmp.lt.s32.totalorder %v3829, %v3844
    %vm3847 = vcmp.lt.s32.totalorder %v3830, %v3844
    %vm3848 = vcmp.lt.s32.totalorder %v3831, %v3844
    %vm3849 = vcmp.lt.s32.totalorder %v3832, %v3844
    %vm3850 = vcmp.lt.s32.totalorder %v3833, %v3844
    %vm3851 = vcmp.lt.s32.totalorder %v3834, %v3844
    %vm3852 = vcmp.lt.s32.totalorder %v3835, %v3844
    %vm3853 = vcmp.lt.s32.totalorder %v3836, %v3844
    %vm3854 = vcmp.lt.s32.totalorder %v3837, %v3844
    %vm3855 = vcmp.lt.s32.totalorder %v3838, %v3844
    %vm3856 = vcmp.lt.s32.totalorder %v3839, %v3844
    %vm3857 = vcmp.lt.s32.totalorder %v3840, %v3844
    %vm3858 = vcmp.lt.s32.totalorder %v3841, %v3844
    %vm3859 = vcmp.lt.s32.totalorder %v3842, %v3844
    %vm3860 = vcmp.lt.s32.totalorder %v3843, %v3844
    %v3861 = vsel %vm3845, 1, 0
    %v3862 = vsel %vm3846, 1, 0
    %v3863 = vsel %vm3847, 1, 0
    %v3864 = vsel %vm3848, 1, 0
    %v3865 = vsel %vm3849, 1, 0
    %v3866 = vsel %vm3850, 1, 0
    %v3867 = vsel %vm3851, 1, 0
    %v3868 = vsel %vm3852, 1, 0
    %v3869 = vsel %vm3853, 1, 0
    %v3870 = vsel %vm3854, 1, 0
    %v3871 = vsel %vm3855, 1, 0
    %v3872 = vsel %vm3856, 1, 0
    %v3873 = vsel %vm3857, 1, 0
    %v3874 = vsel %vm3858, 1, 0
    %v3875 = vsel %vm3859, 1, 0
    %v3876 = vsel %vm3860, 1, 0
    %vm3877 = vcmp.eq.s32.totalorder %v3861, 1
    %vm3878 = vcmp.eq.s32.totalorder %v3862, 1
    %vm3879 = vcmp.eq.s32.totalorder %v3863, 1
    %vm3880 = vcmp.eq.s32.totalorder %v3864, 1
    %vm3881 = vcmp.eq.s32.totalorder %v3865, 1
    %vm3882 = vcmp.eq.s32.totalorder %v3866, 1
    %vm3883 = vcmp.eq.s32.totalorder %v3867, 1
    %vm3884 = vcmp.eq.s32.totalorder %v3868, 1
    %vm3885 = vcmp.eq.s32.totalorder %v3869, 1
    %vm3886 = vcmp.eq.s32.totalorder %v3870, 1
    %vm3887 = vcmp.eq.s32.totalorder %v3871, 1
    %vm3888 = vcmp.eq.s32.totalorder %v3872, 1
    %vm3889 = vcmp.eq.s32.totalorder %v3873, 1
    %vm3890 = vcmp.eq.s32.totalorder %v3874, 1
    %vm3891 = vcmp.eq.s32.totalorder %v3875, 1
    %vm3892 = vcmp.eq.s32.totalorder %v3876, 1
    %v3893 = vsel %vm3877, %v3764, 0.0
    %v3894 = vsel %vm3878, %v3767, 0.0
    %v3895 = vsel %vm3879, %v3772, 0.0
    %v3896 = vsel %vm3880, %v3775, 0.0
    %v3897 = vsel %vm3881, %v3780, 0.0
    %v3898 = vsel %vm3882, %v3783, 0.0
    %v3899 = vsel %vm3883, %v3788, 0.0
    %v3900 = vsel %vm3884, %v3791, 0.0
    %v3901 = vsel %vm3885, %v3796, 0.0
    %v3902 = vsel %vm3886, %v3799, 0.0
    %v3903 = vsel %vm3887, %v3804, 0.0
    %v3904 = vsel %vm3888, %v3807, 0.0
    %v3905 = vsel %vm3889, %v3812, 0.0
    %v3906 = vsel %vm3890, %v3815, 0.0
    %v3907 = vsel %vm3891, %v3820, 0.0
    %v3908 = vsel %vm3892, %v3823, 0.0
    %v3909 = vadd.f32 %v3893, %v3894
    %v3910 = vadd.f32 %v3909, %v3895
    %v3911 = vadd.f32 %v3910, %v3896
    %v3912 = vadd.f32 %v3911, %v3897
    %v3913 = vadd.f32 %v3912, %v3898
    %v3914 = vadd.f32 %v3913, %v3899
    %v3915 = vadd.f32 %v3914, %v3900
    %v3916 = vadd.f32 %v3915, %v3901
    %v3917 = vadd.f32 %v3916, %v3902
    %v3918 = vadd.f32 %v3917, %v3903
    %v3919 = vadd.f32 %v3918, %v3904
    %v3920 = vadd.f32 %v3919, %v3905
    %v3921 = vadd.f32 %v3920, %v3906
    %v3922 = vadd.f32 %v3921, %v3907
    %v3923 = vadd.f32 %v3922, %v3908
    %v3924 = vrot.slane %v3923, 4
    %v3925 = vadd.f32 %v3923, %v3924
    %v3926 = vrot.slane %v3925, 2
    %v3927 = vadd.f32 %v3925, %v3926
    %v3928 = vrot.slane %v3927, 1
    %v3929 = vadd.f32 %v3927, %v3928
    %s3930 = scvt.s32.f32 %s3826
    %v3931 = vstv %s3930
    %v3932 = vrcp.pop %v3931
    %v3933 = vmul.f32 %v3929, %v3932
    %v3934 = vpack.c.bf16 %v3933, %v3933
    %v3935 = vld [vmem:[#allocation12] sm:$0xf]
    %v3936 = vld [vmem:[#allocation12 + $0x4] sm:$0xf]
    %v3937 = vld [vmem:[#allocation12 + $0x8] sm:$0xf]
    %v3938 = vld [vmem:[#allocation12 + $0xc] sm:$0xf]
    %v3939 = vld [vmem:[#allocation12 + $0x10] sm:$0xf]
    %v3940 = vld [vmem:[#allocation12 + $0x14] sm:$0xf]
    %v3941 = vld [vmem:[#allocation12 + $0x18] sm:$0xf]
    %v3942 = vld [vmem:[#allocation12 + $0x1c] sm:$0xf]
    %v3943 = vld [vmem:[#allocation12 + $0x20] sm:$0xf]
    %v3944 = vld [vmem:[#allocation12 + $0x24] sm:$0xf]
    %v3945 = vld [vmem:[#allocation12 + $0x28] sm:$0xf]
    %v3946 = vld [vmem:[#allocation12 + $0x2c] sm:$0xf]
    %v3947 = vld [vmem:[#allocation12 + $0x30] sm:$0xf]
    %v3948 = vld [vmem:[#allocation12 + $0x34] sm:$0xf]
    %v3949 = vld [vmem:[#allocation12 + $0x38] sm:$0xf]
    %v3950 = vld [vmem:[#allocation12 + $0x3c] sm:$0xf]
    %v3951 = vld [vmem:[%s6] sm:$0x1]
    %v3968 = vunpack.c.l.b16 %v3935
    %v3969 = vunpack.c.l.b16 %v3936
    %v3970 = vunpack.c.l.b16 %v3937
    %v3971 = vunpack.c.l.b16 %v3938
    %v3972 = vunpack.c.l.b16 %v3939
    %v3973 = vunpack.c.l.b16 %v3940
    %v3974 = vunpack.c.l.b16 %v3941
    %v3975 = vunpack.c.l.b16 %v3942
    %v3976 = vunpack.c.l.b16 %v3943
    %v3977 = vunpack.c.l.b16 %v3944
    %v3978 = vunpack.c.l.b16 %v3945
    %v3979 = vunpack.c.l.b16 %v3946
    %v3980 = vunpack.c.l.b16 %v3947
    %v3981 = vunpack.c.l.b16 %v3948
    %v3982 = vunpack.c.l.b16 %v3949
    %v3983 = vunpack.c.l.b16 %v3950
    %v3984 = vpack.c.b16 %v3969, %v3968
    %v3985 = vpack.c.b16 %v3971, %v3970
    %v3986 = vpack.c.b16 %v3973, %v3972
    %v3987 = vpack.c.b16 %v3975, %v3974
    %v3988 = vpack.c.b16 %v3977, %v3976
    %v3989 = vpack.c.b16 %v3979, %v3978
    %v3990 = vpack.c.b16 %v3981, %v3980
    %v3991 = vpack.c.b16 %v3983, %v3982
    %4000 = vmatprep.subr.bf16.mxu0 0
    %4001 = vmatpush1.bf16.msra.mxu0 %v3991
    %4002 = vmatprep.subr.bf16.mxu0 0
    %4003 = vmatpush1.bf16.msra.mxu0 %v3990
    %4004 = vmatprep.subr.bf16.mxu0 0
    %4005 = vmatpush1.bf16.msra.mxu0 %v3989
    %4006 = vmatprep.subr.bf16.mxu0 0
    %4007 = vmatpush1.bf16.msra.mxu0 %v3988
    %4008 = vmatprep.subr.bf16.mxu0 0
    %4009 = vmatpush1.bf16.msra.mxu0 %v3987
    %4010 = vmatprep.subr.bf16.mxu0 0
    %4011 = vmatpush1.bf16.msra.mxu0 %v3986
    %4012 = vmatprep.subr.bf16.mxu0 0
    %4013 = vmatpush1.bf16.msra.mxu0 %v3985
    %4014 = vmatprep.subr.bf16.mxu0 0
    %4015 = vmatpush1.bf16.msra.mxu0 %v3984
    %4016 = vmatprep.subr.bf16.mxu0 0
    %4017 = vmatpush2.bf16.msra.mxu0 0
    %4018 = vmatprep.subr.bf16.mxu0 0
    %4019 = vmatpush2.bf16.msra.mxu0 0
    %4020 = vmatprep.subr.bf16.mxu0 0
    %4021 = vmatpush2.bf16.msra.mxu0 0
    %4022 = vmatprep.subr.bf16.mxu0 0
    %4023 = vmatpush2.bf16.msra.mxu0 0
    %4024 = vmatprep.subr.bf16.mxu0 0
    %4025 = vmatpush2.bf16.msra.mxu0 0
    %4026 = vmatprep.subr.bf16.mxu0 0
    %4027 = vmatpush2.bf16.msra.mxu0 0
    %4028 = vmatprep.subr.bf16.mxu0 0
    %4029 = vmatpush2.bf16.msra.mxu0 0
    %4030 = vmatprep.subr.bf16.mxu0 0
    %4031 = vmatpush2.bf16.msra.mxu0 0
    %4032 = vmatprep.mubr.bf16.mxu0 0
    %4033 = vmatmul.mubr.bf16.gmra.mxu0 %v3934
    %v4034 = vpop.f32.mrf.mxu0
    %v4035 = vadd.f32 %v3951, %v4034
    %v4036 = vpop.f32.mrf.mxu0
    %v4037 = vpop.f32.mrf.mxu0
    %v4038 = vpop.f32.mrf.mxu0
    %4039 = vdwg.mxu0
    %4040 = vst [vmem:[#allocation14] sm:$0x1] %v4035
    // Predicated region
    $region42: #{tpu_custom_call.1} parent=1 // pred_check
      _
    $region43: #{tpu_custom_call.1} parent=1 // pred_check_branch
      %4042 = sbr.rel (0) target = $region45
    $region44: #{tpu_custom_call.1} parent=1 // pred_region
      %s4044 = ssub.s32 16, 16
      %4045 = vsyncadd [#allocation8], %s4044
      %s4047 = sshll.u32 [#allocation14], 4
      %s4048 = int_to_ptr.vmem [resolvable:$true] %s4047
      %4050 = dma.vmem_to_hbm [thread:$0]  %s4048, 16, %s7, [#allocation8]
    $region45: #{tpu_custom_call.1} parent=1 // pred_fallthru
      _
    // Predicated region
    $region46: #{tpu_custom_call.1} parent=1 // pred_check
      _
    $region47: #{tpu_custom_call.1} parent=1 // pred_check_branch
      %4052 = sbr.rel (0) target = $region49
    $region48: #{tpu_custom_call.1} parent=1 // pred_region
      %4053 = dma.done [#allocation8], 16
    $region49: #{tpu_custom_call.1} parent=1 // pred_fallthru
      _
    %4054 = vsyncpa [#allocation7], 1
    %4055 = vsyncpa [#allocation10], 1
    %4056 = vsyncpa [#allocation13], 1
    %4057 = vsyncpa [#allocation8], 1

</llo_original>
